<compile_context>
chip_gen: v7x
topology: tpu7x:2x2x1
jax: 0.10.0
libtpu: 0.0.40
codegen_flags: <defaults>
</compile_context>

<pallas_src>
import jax
import jax.numpy as jnp
from jax.experimental import pallas as pl
from jax.experimental.pallas import tpu as pltpu

_LPAD = 16  # 16-aligned sublane offset where the "real" columns start inside pad scratches


def _resblock_kernel(x_ref, w1_ref, b1_ref, w2_ref, b2_ref, w3_ref, b3_ref,
                     out_ref, xpad_ref, h1pad_ref):
    # x_ref    : (1, H, W, CP)   bf16  full image (same block for every strip of this image)
    # w1/w2    : (9*CP, CP)      bf16  im2col conv3x3 weights, rows ordered (ki, kj, cin)
    # w3       : (CP, CP)        bf16  conv1x1 weights
    # b1/b2/b3 : (1, CP)         f32
    # out_ref  : (1, TH, W, CP)  f32   one output row strip
    # xpad_ref : (H+4, L+W+1, CP)  bf16 scratch: zero-padded input (2 halo rows top/bottom)
    # h1pad_ref: (TH+2, L+W+1, CP) bf16 scratch: zero-padded conv1 output for this strip
    H, W, CP = x_ref.shape[1], x_ref.shape[2], x_ref.shape[3]
    TH = out_ref.shape[1]
    THE = TH + 2                    # strip rows + 1-row conv2 halo on each side
    L = _LPAD
    h = pl.program_id(1)

    # ---- once per image: zero the pad borders, stage the image into the padded scratch ----
    @pl.when(h == 0)
    def _():
        xpad_ref[...] = jnp.zeros_like(xpad_ref)
        h1pad_ref[...] = jnp.zeros_like(h1pad_ref)
        xpad_ref[2:H + 2, L:L + W, :] = x_ref[0]     # 16-aligned interior store

    pr0 = pl.multiple_of(h * TH, TH)   # first halo-extended row handled by this strip

    # ---- conv1 (3x3, pad=1) + ReLU over the halo-extended strip: one im2col matmul ----
    # 3 W-shifted views (hoisted out of the ki loop), each (THE+2, W, CP)
    shift1 = [xpad_ref[pl.ds(pr0, THE + 2), L - 1 + kj:L - 1 + kj + W, :]
              for kj in range(3)]
    patches1 = jnp.concatenate(
        [shift1[kj][ki:ki + THE].reshape(THE * W, CP)
         for ki in range(3) for kj in range(3)], axis=1)            # (THE*W, 9*CP)
    h1 = jnp.maximum(
        jnp.dot(patches1, w1_ref[...], preferred_element_type=jnp.float32) + b1_ref[...],
        0.0).reshape(THE, W, CP)

    # halo rows that fall outside the image are conv1's zero padding
    row_ids = pr0 + jax.lax.broadcasted_iota(jnp.int32, (THE, 1, 1), 0)
    h1 = jnp.where((row_ids >= 1) & (row_ids <= H), h1, 0.0)
    h1pad_ref[:, L:L + W, :] = h1.astype(jnp.bfloat16)              # aligned, unmasked stores

    # ---- conv2 (3x3, pad=1) + ReLU over the strip: one im2col matmul ----
    shift2 = [h1pad_ref[:, L - 1 + kj:L - 1 + kj + W, :] for kj in range(3)]
    patches2 = jnp.concatenate(
        [shift2[kj][ki:ki + TH].reshape(TH * W, CP)
         for ki in range(3) for kj in range(3)], axis=1)            # (TH*W, 9*CP)
    h2 = jnp.maximum(
        jnp.dot(patches2, w2_ref[...], preferred_element_type=jnp.float32) + b2_ref[...],
        0.0)

    # ---- conv3 (1x1) + residual (residual read from the staged image, no extra stream) ----
    h3 = jnp.dot(h2.astype(jnp.bfloat16), w3_ref[...],
                 preferred_element_type=jnp.float32) + b3_ref[...]
    res = xpad_ref[pl.ds(pr0 + 2, TH), L:L + W, :].reshape(TH * W, CP).astype(jnp.float32)
    out_ref[...] = (h3 + res).reshape(1, TH, W, CP).astype(out_ref.dtype)


def _round_up(n, m):
    return ((n + m - 1) // m) * m


def resblock_pallas(x_nchw, params, *, strip_rows=8):
    """ResBlock forward. x_nchw: (B, C, H, W) float32 -> (B, C, H, W) float32."""
    w1, b1, w2, b2, w3, b3 = params      # (3,3,C,C), (1,C), (3,3,C,C), (1,C), (C,C), (1,C)
    B, C, H, W = x_nchw.shape
    CP = _round_up(C, 128)               # lane-dense channel count
    TH = strip_rows if H % strip_rows == 0 else H
    NH = H // TH
    L = _LPAD

    # NCHW -> NHWC, bf16, channels zero-padded to CP.  One host-side relayout (the
    # transpose is needed anyway); the channel pad is a no-op when C % 128 == 0.
    x = jnp.pad(jnp.transpose(x_nchw, (0, 2, 3, 1)).astype(jnp.bfloat16),
                ((0, 0), (0, 0), (0, 0), (0, CP - C)))

    def pad_conv3(w):                    # (3,3,C,C) -> (9*CP, CP), rows = (ki, kj, cin)
        w = jnp.pad(w, ((0, 0), (0, 0), (0, CP - C), (0, CP - C)))
        return w.astype(jnp.bfloat16).reshape(9 * CP, CP)

    def pad_bias(b):                     # (1, C) -> (1, CP) f32
        return jnp.pad(b, ((0, 0), (0, CP - C))).astype(jnp.float32)

    w1c, w2c = pad_conv3(w1), pad_conv3(w2)
    w3c = jnp.pad(w3, ((0, CP - C), (0, CP - C))).astype(jnp.bfloat16)
    b1c, b2c, b3c = pad_bias(b1), pad_bias(b2), pad_bias(b3)

    def full(arr):                       # whole-array block, constant block index
        return pl.BlockSpec(arr.shape, lambda b, h: (0,) * arr.ndim)

    out = pl.pallas_call(
        _resblock_kernel,
        out_shape=jax.ShapeDtypeStruct((B, H, W, CP), jnp.float32),
        grid_spec=pltpu.PrefetchScalarGridSpec(
            num_scalar_prefetch=0,
            grid=(B, NH),
            in_specs=[
                # image block index is constant over the strip axis -> DMA'd once per image
                pl.BlockSpec((1, H, W, CP), lambda b, h: (b, 0, 0, 0)),
                full(w1c), full(b1c), full(w2c), full(b2c), full(w3c), full(b3c),
            ],
            out_specs=pl.BlockSpec((1, TH, W, CP), lambda b, h: (b, h, 0, 0)),
            scratch_shapes=[
                pltpu.VMEM((H + 4, L + W + 1, CP), jnp.bfloat16),
                pltpu.VMEM((TH + 2, L + W + 1, CP), jnp.bfloat16),
            ],
        ),
        compiler_params=pltpu.CompilerParams(
            # batch axis feeds both v7x TensorCores; the strip axis must stay in-order
            # because strips of one image share the per-image padded-input scratch.
            dimension_semantics=("parallel", "arbitrary"),
            # per-step pipelined footprint is ~2 MiB at these shapes; 32 MiB fits every
            # generation (v7x has 64 MiB physical VMEM, v5e/v6e 128 MiB).
            vmem_limit_bytes=32 * 1024 * 1024,
        ),
    )(x, w1c, b1c, w2c, b2c, w3c, b3c)

    # drop padded channels, NHWC -> NCHW
    return jnp.transpose(out[..., :C], (0, 3, 1, 2)).astype(x_nchw.dtype)


def _reference_resblock(x_nchw, params):
    """Pure-JAX f32 reference using lax.conv, matching the PyTorch module."""
    w1, b1, w2, b2, w3, b3 = params
    dn = jax.lax.conv_dimension_numbers(x_nchw.shape, (3, 3, 1, 1),
                                        ("NCHW", "HWIO", "NCHW"))

    def conv(x, w_hwio, b, pad):
        y = jax.lax.conv_general_dilated(x, w_hwio, (1, 1), pad,
                                         dimension_numbers=dn)
        return y + b.reshape(1, -1, 1, 1)

    h = jax.nn.relu(conv(x_nchw, w1, b1[0], "SAME"))
    h = jax.nn.relu(conv(h, w2, b2[0], "SAME"))
    h = conv(h, w3.reshape(1, 1, *w3.shape), b3[0], "VALID")
    return h + x_nchw


def make_params(key, chan):
    """Deterministic parameter init (shapes from nn.Conv2d in the module)."""
    ks = jax.random.split(key, 6)
    scale3 = 1.0 / (chan * 9) ** 0.5
    scale1 = 1.0 / chan ** 0.5
    # stored as (kh, kw, cin, cout) / (cin, cout) for the kernel's im2col matmuls
    w1 = jax.random.uniform(ks[0], (3, 3, chan, chan), jnp.float32, -scale3, scale3)
    b1 = jax.random.uniform(ks[1], (1, chan), jnp.float32, -scale3, scale3)
    w2 = jax.random.uniform(ks[2], (3, 3, chan, chan), jnp.float32, -scale3, scale3)
    b2 = jax.random.uniform(ks[3], (1, chan), jnp.float32, -scale3, scale3)
    w3 = jax.random.uniform(ks[4], (chan, chan), jnp.float32, -scale1, scale1)
    b3 = jax.random.uniform(ks[5], (1, chan), jnp.float32, -scale1, scale1)
    return (w1, b1, w2, b2, w3, b3)


if __name__ == "__main__":
    key = jax.random.PRNGKey(0)
    k_x, k_p = jax.random.split(key)

    B, C, H, W = 2, 8, 16, 16
    x = jax.random.normal(k_x, (B, C, H, W), jnp.float32)
    params = make_params(k_p, C)

    y = jax.block_until_ready(resblock_pallas(x, params))
    y_ref = _reference_resblock(x, params)

    assert y.shape == (B, C, H, W)
    max_err = float(jnp.max(jnp.abs(y - y_ref)))
    # bf16 matmul inputs (f32 accumulation) -> relaxed tolerance vs. the f32 reference
    assert jnp.allclose(y, y_ref, atol=5e-2, rtol=5e-2), \
        f"mismatch vs reference (max abs err {max_err})"

    print("KERNEL_OK")
</pallas_src>

<mosaic_0001>
module attributes {stable_mosaic.version = 11 : i64} {
  func.func @_resblock_kernel(%arg0: i32, %arg1: i32, %arg2: memref<1x16x16x128xbf16, #tpu.memory_space<vmem>>, %arg3: memref<1152x128xbf16, #tpu.memory_space<vmem>>, %arg4: memref<1x128xf32, #tpu.memory_space<vmem>>, %arg5: memref<1152x128xbf16, #tpu.memory_space<vmem>>, %arg6: memref<1x128xf32, #tpu.memory_space<vmem>>, %arg7: memref<128x128xbf16, #tpu.memory_space<vmem>>, %arg8: memref<1x128xf32, #tpu.memory_space<vmem>>, %arg9: memref<1x8x16x128xf32, #tpu.memory_space<vmem>>, %arg10: memref<20x33x128xbf16, #tpu.memory_space<vmem>>, %arg11: memref<10x33x128xbf16, #tpu.memory_space<vmem>>) attributes {dimension_semantics = [#tpu.dimension_semantics<parallel>, #tpu.dimension_semantics<arbitrary>], iteration_bounds = array<i64: 2, 2>, scalar_prefetch = 0 : i64, scratch_operands = 2 : i64, tpu.core_type = #tpu.core_type<tc>, window_params = [{transform_indices = @transform_0, window_bounds = array<i64: 1, 16, 16, 128>}, {pipeline_mode = #tpu.pipeline_mode<synchronous>, transform_indices = @transform_1, window_bounds = array<i64: 1152, 128>}, {pipeline_mode = #tpu.pipeline_mode<synchronous>, transform_indices = @transform_2, window_bounds = array<i64: 1, 128>}, {pipeline_mode = #tpu.pipeline_mode<synchronous>, transform_indices = @transform_3, window_bounds = array<i64: 1152, 128>}, {pipeline_mode = #tpu.pipeline_mode<synchronous>, transform_indices = @transform_4, window_bounds = array<i64: 1, 128>}, {pipeline_mode = #tpu.pipeline_mode<synchronous>, transform_indices = @transform_5, window_bounds = array<i64: 128, 128>}, {pipeline_mode = #tpu.pipeline_mode<synchronous>, transform_indices = @transform_6, window_bounds = array<i64: 1, 128>}, {transform_indices = @transform_7, window_bounds = array<i64: 1, 8, 16, 128>}]} {
    %c0_i32 = arith.constant 0 : i32
    %0 = arith.cmpi eq, %arg1, %c0_i32 : i32
    %1 = arith.extui %0 : i1 to i32
    %c0_i32_0 = arith.constant 0 : i32
    %2 = arith.cmpi ne, %1, %c0_i32_0 : i32
    scf.if %2 {
      %cst_38 = arith.constant 0.000000e+00 : bf16
      %95 = vector.broadcast %cst_38 : bf16 to vector<20x33x128xbf16>
      %c0_39 = arith.constant 0 : index
      %c0_40 = arith.constant 0 : index
      %c0_41 = arith.constant 0 : index
      %96 = vector.load %arg10[%c0_39, %c0_40, %c0_41] : memref<20x33x128xbf16, #tpu.memory_space<vmem>>, vector<20x33x128xbf16>
      tpu.vector_store %arg10[%c0_39, %c0_40, %c0_41], %95 {strides = array<i32>} : memref<20x33x128xbf16, #tpu.memory_space<vmem>>, vector<20x33x128xbf16>,
      %cst_42 = arith.constant 0.000000e+00 : bf16
      %97 = vector.broadcast %cst_42 : bf16 to vector<10x33x128xbf16>
      %c0_43 = arith.constant 0 : index
      %c0_44 = arith.constant 0 : index
      %c0_45 = arith.constant 0 : index
      %98 = vector.load %arg11[%c0_43, %c0_44, %c0_45] : memref<10x33x128xbf16, #tpu.memory_space<vmem>>, vector<10x33x128xbf16>
      tpu.vector_store %arg11[%c0_43, %c0_44, %c0_45], %97 {strides = array<i32>} : memref<10x33x128xbf16, #tpu.memory_space<vmem>>, vector<10x33x128xbf16>,
      %c0_46 = arith.constant 0 : index
      %c0_47 = arith.constant 0 : index
      %c0_48 = arith.constant 0 : index
      %c0_49 = arith.constant 0 : index
      %99 = vector.load %arg2[%c0_46, %c0_47, %c0_48, %c0_49] : memref<1x16x16x128xbf16, #tpu.memory_space<vmem>>, vector<1x16x16x128xbf16>
      %100 = vector.shape_cast %99 : vector<1x16x16x128xbf16> to vector<16x16x128xbf16>
      %c2 = arith.constant 2 : index
      %c16_50 = arith.constant 16 : index
      %c0_51 = arith.constant 0 : index
      %101 = vector.load %arg10[%c2, %c16_50, %c0_51] : memref<20x33x128xbf16, #tpu.memory_space<vmem>>, vector<16x16x128xbf16>
      tpu.vector_store %arg10[%c2, %c16_50, %c0_51], %100 {strides = array<i32>} : memref<20x33x128xbf16, #tpu.memory_space<vmem>>, vector<16x16x128xbf16>,
    } else {
    }
    %c8_i32 = arith.constant 8 : i32
    %3 = arith.muli %arg1, %c8_i32 : i32
    %4 = tpu.assume_multiple %3, 8 : i32
    %5 = arith.index_cast %4 : i32 to index
    %c15 = arith.constant 15 : index
    %c0 = arith.constant 0 : index
    %6 = vector.load %arg10[%5, %c15, %c0] : memref<20x33x128xbf16, #tpu.memory_space<vmem>>, vector<12x16x128xbf16>
    %7 = arith.index_cast %4 : i32 to index
    %c16 = arith.constant 16 : index
    %c0_1 = arith.constant 0 : index
    %8 = vector.load %arg10[%7, %c16, %c0_1] : memref<20x33x128xbf16, #tpu.memory_space<vmem>>, vector<12x16x128xbf16>
    %9 = arith.index_cast %4 : i32 to index
    %c17 = arith.constant 17 : index
    %c0_2 = arith.constant 0 : index
    %10 = vector.load %arg10[%9, %c17, %c0_2] : memref<20x33x128xbf16, #tpu.memory_space<vmem>>, vector<12x16x128xbf16>
    %11 = vector.extract_strided_slice %6 {offsets = [0, 0, 0], sizes = [10, 16, 128], strides = [1, 1, 1]} : vector<12x16x128xbf16> to vector<10x16x128xbf16>
    %12 = vector.shape_cast %11 : vector<10x16x128xbf16> to vector<160x128xbf16>
    %13 = vector.extract_strided_slice %8 {offsets = [0, 0, 0], sizes = [10, 16, 128], strides = [1, 1, 1]} : vector<12x16x128xbf16> to vector<10x16x128xbf16>
    %14 = vector.shape_cast %13 : vector<10x16x128xbf16> to vector<160x128xbf16>
    %15 = vector.extract_strided_slice %10 {offsets = [0, 0, 0], sizes = [10, 16, 128], strides = [1, 1, 1]} : vector<12x16x128xbf16> to vector<10x16x128xbf16>
    %16 = vector.shape_cast %15 : vector<10x16x128xbf16> to vector<160x128xbf16>
    %17 = vector.extract_strided_slice %6 {offsets = [1, 0, 0], sizes = [10, 16, 128], strides = [1, 1, 1]} : vector<12x16x128xbf16> to vector<10x16x128xbf16>
    %18 = vector.shape_cast %17 : vector<10x16x128xbf16> to vector<160x128xbf16>
    %19 = vector.extract_strided_slice %8 {offsets = [1, 0, 0], sizes = [10, 16, 128], strides = [1, 1, 1]} : vector<12x16x128xbf16> to vector<10x16x128xbf16>
    %20 = vector.shape_cast %19 : vector<10x16x128xbf16> to vector<160x128xbf16>
    %21 = vector.extract_strided_slice %10 {offsets = [1, 0, 0], sizes = [10, 16, 128], strides = [1, 1, 1]} : vector<12x16x128xbf16> to vector<10x16x128xbf16>
    %22 = vector.shape_cast %21 : vector<10x16x128xbf16> to vector<160x128xbf16>
    %23 = vector.extract_strided_slice %6 {offsets = [2, 0, 0], sizes = [10, 16, 128], strides = [1, 1, 1]} : vector<12x16x128xbf16> to vector<10x16x128xbf16>
    %24 = vector.shape_cast %23 : vector<10x16x128xbf16> to vector<160x128xbf16>
    %25 = vector.extract_strided_slice %8 {offsets = [2, 0, 0], sizes = [10, 16, 128], strides = [1, 1, 1]} : vector<12x16x128xbf16> to vector<10x16x128xbf16>
    %26 = vector.shape_cast %25 : vector<10x16x128xbf16> to vector<160x128xbf16>
    %27 = vector.extract_strided_slice %10 {offsets = [2, 0, 0], sizes = [10, 16, 128], strides = [1, 1, 1]} : vector<12x16x128xbf16> to vector<10x16x128xbf16>
    %28 = vector.shape_cast %27 : vector<10x16x128xbf16> to vector<160x128xbf16>
    %29 = tpu.concatenate %12, %14, %16, %18, %20, %22, %24, %26, %28 in 1 : vector<160x128xbf16>, vector<160x128xbf16>, vector<160x128xbf16>, vector<160x128xbf16>, vector<160x128xbf16>, vector<160x128xbf16>, vector<160x128xbf16>, vector<160x128xbf16>, vector<160x128xbf16> -> vector<160x1152xbf16>
    %c0_3 = arith.constant 0 : index
    %c0_4 = arith.constant 0 : index
    %30 = vector.load %arg3[%c0_3, %c0_4] : memref<1152x128xbf16, #tpu.memory_space<vmem>>, vector<1152x128xbf16>
    %cst = arith.constant dense<0.000000e+00> : vector<160x128xf32>
    %31 = tpu.matmul %29, %30, %cst {dimension_numbers = #tpu.dot_dimension_numbers<[1], [0], [0], [1], [0, 0, 1, 1], [], []>} : vector<160x1152xbf16>, vector<1152x128xbf16>, vector<160x128xf32> -> vector<160x128xf32>
    %c0_5 = arith.constant 0 : index
    %c0_6 = arith.constant 0 : index
    %32 = vector.load %arg4[%c0_5, %c0_6] : memref<1x128xf32, #tpu.memory_space<vmem>>, vector<1x128xf32>
    %33 = vector.broadcast %32 : vector<1x128xf32> to vector<160x128xf32>
    %34 = arith.addf %31, %33 : vector<160x128xf32>
    %cst_7 = arith.constant 0.000000e+00 : f32
    %35 = vector.broadcast %cst_7 : f32 to vector<160x128xf32>
    %36 = arith.maximumf %34, %35 : vector<160x128xf32>
    %37 = vector.shape_cast %36 : vector<160x128xf32> to vector<10x16x128xf32>
    %38 = tpu.iota {dimensions = array<i32: 0>} : vector<10x1x1xi32>
    %39 = vector.broadcast %4 : i32 to vector<10x1x1xi32>
    %40 = arith.addi %39, %38 : vector<10x1x1xi32>
    %c1_i32 = arith.constant 1 : i32
    %41 = vector.broadcast %c1_i32 : i32 to vector<10x1x1xi32>
    %42 = arith.cmpi sge, %40, %41 : vector<10x1x1xi32>
    %c16_i32 = arith.constant 16 : i32
    %43 = vector.broadcast %c16_i32 : i32 to vector<10x1x1xi32>
    %44 = arith.cmpi sle, %40, %43 : vector<10x1x1xi32>
    %45 = arith.andi %42, %44 : vector<10x1x1xi1>
    %cst_8 = arith.constant 0.000000e+00 : f32
    %46 = vector.shape_cast %45 : vector<10x1x1xi1> to vector<10x1x1xi1>
    %47 = vector.broadcast %46 : vector<10x1x1xi1> to vector<10x16x128xi1>
    %48 = vector.broadcast %cst_8 : f32 to vector<10x16x128xf32>
    %49 = arith.select %47, %37, %48 : vector<10x16x128xi1>, vector<10x16x128xf32>
    %50 = arith.truncf %49 : vector<10x16x128xf32> to vector<10x16x128xbf16>
    %c0_9 = arith.constant 0 : index
    %c16_10 = arith.constant 16 : index
    %c0_11 = arith.constant 0 : index
    %51 = vector.load %arg11[%c0_9, %c16_10, %c0_11] : memref<10x33x128xbf16, #tpu.memory_space<vmem>>, vector<10x16x128xbf16>
    tpu.vector_store %arg11[%c0_9, %c16_10, %c0_11], %50 {strides = array<i32>} : memref<10x33x128xbf16, #tpu.memory_space<vmem>>, vector<10x16x128xbf16>,
    %c0_12 = arith.constant 0 : index
    %c15_13 = arith.constant 15 : index
    %c0_14 = arith.constant 0 : index
    %52 = vector.load %arg11[%c0_12, %c15_13, %c0_14] : memref<10x33x128xbf16, #tpu.memory_space<vmem>>, vector<10x16x128xbf16>
    %c0_15 = arith.constant 0 : index
    %c16_16 = arith.constant 16 : index
    %c0_17 = arith.constant 0 : index
    %53 = vector.load %arg11[%c0_15, %c16_16, %c0_17] : memref<10x33x128xbf16, #tpu.memory_space<vmem>>, vector<10x16x128xbf16>
    %c0_18 = arith.constant 0 : index
    %c17_19 = arith.constant 17 : index
    %c0_20 = arith.constant 0 : index
    %54 = vector.load %arg11[%c0_18, %c17_19, %c0_20] : memref<10x33x128xbf16, #tpu.memory_space<vmem>>, vector<10x16x128xbf16>
    %55 = vector.extract_strided_slice %52 {offsets = [0, 0, 0], sizes = [8, 16, 128], strides = [1, 1, 1]} : vector<10x16x128xbf16> to vector<8x16x128xbf16>
    %56 = vector.shape_cast %55 : vector<8x16x128xbf16> to vector<128x128xbf16>
    %57 = vector.extract_strided_slice %53 {offsets = [0, 0, 0], sizes = [8, 16, 128], strides = [1, 1, 1]} : vector<10x16x128xbf16> to vector<8x16x128xbf16>
    %58 = vector.shape_cast %57 : vector<8x16x128xbf16> to vector<128x128xbf16>
    %59 = vector.extract_strided_slice %54 {offsets = [0, 0, 0], sizes = [8, 16, 128], strides = [1, 1, 1]} : vector<10x16x128xbf16> to vector<8x16x128xbf16>
    %60 = vector.shape_cast %59 : vector<8x16x128xbf16> to vector<128x128xbf16>
    %61 = vector.extract_strided_slice %52 {offsets = [1, 0, 0], sizes = [8, 16, 128], strides = [1, 1, 1]} : vector<10x16x128xbf16> to vector<8x16x128xbf16>
    %62 = vector.shape_cast %61 : vector<8x16x128xbf16> to vector<128x128xbf16>
    %63 = vector.extract_strided_slice %53 {offsets = [1, 0, 0], sizes = [8, 16, 128], strides = [1, 1, 1]} : vector<10x16x128xbf16> to vector<8x16x128xbf16>
    %64 = vector.shape_cast %63 : vector<8x16x128xbf16> to vector<128x128xbf16>
    %65 = vector.extract_strided_slice %54 {offsets = [1, 0, 0], sizes = [8, 16, 128], strides = [1, 1, 1]} : vector<10x16x128xbf16> to vector<8x16x128xbf16>
    %66 = vector.shape_cast %65 : vector<8x16x128xbf16> to vector<128x128xbf16>
    %67 = vector.extract_strided_slice %52 {offsets = [2, 0, 0], sizes = [8, 16, 128], strides = [1, 1, 1]} : vector<10x16x128xbf16> to vector<8x16x128xbf16>
    %68 = vector.shape_cast %67 : vector<8x16x128xbf16> to vector<128x128xbf16>
    %69 = vector.extract_strided_slice %53 {offsets = [2, 0, 0], sizes = [8, 16, 128], strides = [1, 1, 1]} : vector<10x16x128xbf16> to vector<8x16x128xbf16>
    %70 = vector.shape_cast %69 : vector<8x16x128xbf16> to vector<128x128xbf16>
    %71 = vector.extract_strided_slice %54 {offsets = [2, 0, 0], sizes = [8, 16, 128], strides = [1, 1, 1]} : vector<10x16x128xbf16> to vector<8x16x128xbf16>
    %72 = vector.shape_cast %71 : vector<8x16x128xbf16> to vector<128x128xbf16>
    %73 = tpu.concatenate %56, %58, %60, %62, %64, %66, %68, %70, %72 in 1 : vector<128x128xbf16>, vector<128x128xbf16>, vector<128x128xbf16>, vector<128x128xbf16>, vector<128x128xbf16>, vector<128x128xbf16>, vector<128x128xbf16>, vector<128x128xbf16>, vector<128x128xbf16> -> vector<128x1152xbf16>
    %c0_21 = arith.constant 0 : index
    %c0_22 = arith.constant 0 : index
    %74 = vector.load %arg5[%c0_21, %c0_22] : memref<1152x128xbf16, #tpu.memory_space<vmem>>, vector<1152x128xbf16>
    %cst_23 = arith.constant dense<0.000000e+00> : vector<128x128xf32>
    %75 = tpu.matmul %73, %74, %cst_23 {dimension_numbers = #tpu.dot_dimension_numbers<[1], [0], [0], [1], [0, 0, 1, 1], [], []>} : vector<128x1152xbf16>, vector<1152x128xbf16>, vector<128x128xf32> -> vector<128x128xf32>
    %c0_24 = arith.constant 0 : index
    %c0_25 = arith.constant 0 : index
    %76 = vector.load %arg6[%c0_24, %c0_25] : memref<1x128xf32, #tpu.memory_space<vmem>>, vector<1x128xf32>
    %77 = vector.broadcast %76 : vector<1x128xf32> to vector<128x128xf32>
    %78 = arith.addf %75, %77 : vector<128x128xf32>
    %cst_26 = arith.constant 0.000000e+00 : f32
    %79 = vector.broadcast %cst_26 : f32 to vector<128x128xf32>
    %80 = arith.maximumf %78, %79 : vector<128x128xf32>
    %81 = arith.truncf %80 : vector<128x128xf32> to vector<128x128xbf16>
    %c0_27 = arith.constant 0 : index
    %c0_28 = arith.constant 0 : index
    %82 = vector.load %arg7[%c0_27, %c0_28] : memref<128x128xbf16, #tpu.memory_space<vmem>>, vector<128x128xbf16>
    %cst_29 = arith.constant dense<0.000000e+00> : vector<128x128xf32>
    %83 = tpu.matmul %81, %82, %cst_29 {dimension_numbers = #tpu.dot_dimension_numbers<[1], [0], [0], [1], [0, 0, 1, 1], [], []>} : vector<128x128xbf16>, vector<128x128xbf16>, vector<128x128xf32> -> vector<128x128xf32>
    %c0_30 = arith.constant 0 : index
    %c0_31 = arith.constant 0 : index
    %84 = vector.load %arg8[%c0_30, %c0_31] : memref<1x128xf32, #tpu.memory_space<vmem>>, vector<1x128xf32>
    %85 = vector.broadcast %84 : vector<1x128xf32> to vector<128x128xf32>
    %86 = arith.addf %83, %85 : vector<128x128xf32>
    %c2_i32 = arith.constant 2 : i32
    %87 = arith.addi %4, %c2_i32 : i32
    %88 = arith.index_cast %87 : i32 to index
    %c16_32 = arith.constant 16 : index
    %c0_33 = arith.constant 0 : index
    %89 = vector.load %arg10[%88, %c16_32, %c0_33] : memref<20x33x128xbf16, #tpu.memory_space<vmem>>, vector<8x16x128xbf16>
    %90 = vector.shape_cast %89 : vector<8x16x128xbf16> to vector<128x128xbf16>
    %91 = arith.extf %90 : vector<128x128xbf16> to vector<128x128xf32>
    %92 = arith.addf %86, %91 : vector<128x128xf32>
    %93 = vector.shape_cast %92 : vector<128x128xf32> to vector<1x8x16x128xf32>
    %c0_34 = arith.constant 0 : index
    %c0_35 = arith.constant 0 : index
    %c0_36 = arith.constant 0 : index
    %c0_37 = arith.constant 0 : index
    %94 = vector.load %arg9[%c0_34, %c0_35, %c0_36, %c0_37] : memref<1x8x16x128xf32, #tpu.memory_space<vmem>>, vector<1x8x16x128xf32>
    tpu.vector_store %arg9[%c0_34, %c0_35, %c0_36, %c0_37], %93 {strides = array<i32>} : memref<1x8x16x128xf32, #tpu.memory_space<vmem>>, vector<1x8x16x128xf32>,
    return
  }
  func.func @transform_0(%arg0: i32, %arg1: i32) -> (i32, i32, i32, i32) {
    %c0_i32 = arith.constant 0 : i32
    %c0_i32_0 = arith.constant 0 : i32
    %c0_i32_1 = arith.constant 0 : i32
    %c0_i32_2 = arith.constant 0 : i32
    return %arg0, %c0_i32, %c0_i32_0, %c0_i32_1 : i32, i32, i32, i32
  }
  func.func @transform_1(%arg0: i32, %arg1: i32) -> (i32, i32) {
    %c0_i32 = arith.constant 0 : i32
    %c0_i32_0 = arith.constant 0 : i32
    %c0_i32_1 = arith.constant 0 : i32
    return %c0_i32, %c0_i32_0 : i32, i32
  }
  func.func @transform_2(%arg0: i32, %arg1: i32) -> (i32, i32) {
    %c0_i32 = arith.constant 0 : i32
    %c0_i32_0 = arith.constant 0 : i32
    %c0_i32_1 = arith.constant 0 : i32
    return %c0_i32, %c0_i32_0 : i32, i32
  }
  func.func @transform_3(%arg0: i32, %arg1: i32) -> (i32, i32) {
    %c0_i32 = arith.constant 0 : i32
    %c0_i32_0 = arith.constant 0 : i32
    %c0_i32_1 = arith.constant 0 : i32
    return %c0_i32, %c0_i32_0 : i32, i32
  }
  func.func @transform_4(%arg0: i32, %arg1: i32) -> (i32, i32) {
    %c0_i32 = arith.constant 0 : i32
    %c0_i32_0 = arith.constant 0 : i32
    %c0_i32_1 = arith.constant 0 : i32
    return %c0_i32, %c0_i32_0 : i32, i32
  }
  func.func @transform_5(%arg0: i32, %arg1: i32) -> (i32, i32) {
    %c0_i32 = arith.constant 0 : i32
    %c0_i32_0 = arith.constant 0 : i32
    %c0_i32_1 = arith.constant 0 : i32
    return %c0_i32, %c0_i32_0 : i32, i32
  }
  func.func @transform_6(%arg0: i32, %arg1: i32) -> (i32, i32) {
    %c0_i32 = arith.constant 0 : i32
    %c0_i32_0 = arith.constant 0 : i32
    %c0_i32_1 = arith.constant 0 : i32
    return %c0_i32, %c0_i32_0 : i32, i32
  }
  func.func @transform_7(%arg0: i32, %arg1: i32) -> (i32, i32, i32, i32) {
    %c0_i32 = arith.constant 0 : i32
    %c0_i32_0 = arith.constant 0 : i32
    %c0_i32_1 = arith.constant 0 : i32
    return %arg0, %arg1, %c0_i32, %c0_i32_0 : i32, i32, i32, i32
  }
}

</mosaic_0001>

<llo_original>
// kernel: tpu_custom_call.1
$region0: #{tpu_custom_call.1}
  #allocation0 [shape = 'u32[]', space=smem, size = 0x4, offset = 0x4, fixed_abs, tag = 'smem constant byte address 0x4 - core index']
  #allocation1 [shape = 'u32[144,128]{1,0:T(1,128)}', space=vmem, size = 0x12000, scoped, tag = 'internal scratch']
  #allocation2 [shape = 'bf16[20,33,128]{2,1,0:T(8,128)(2,1)}', space=vmem, size = 0x32000, scoped, tag = 'scratch operand']
  #allocation3 [shape = 'bf16[10,33,128]{2,1,0:T(8,128)(2,1)}', space=vmem, size = 0x19000, scoped, tag = 'scratch operand']
  %s0 = inlined_call_operand.hbm [shape: bf16[2,16,16,128], index: 0, kind: input, shape index: {}]
  %s1 = inlined_call_operand.hbm [shape: bf16[1152,128], index: 1, kind: input, shape index: {}]
  %s2 = inlined_call_operand.vmem [shape: f32[1,128], index: 2, kind: input, shape index: {}]
  %s3 = inlined_call_operand.hbm [shape: bf16[1152,128], index: 3, kind: input, shape index: {}]
  %s4 = inlined_call_operand.vmem [shape: f32[1,128], index: 4, kind: input, shape index: {}]
  %s5 = inlined_call_operand.hbm [shape: bf16[128,128], index: 5, kind: input, shape index: {}]
  %s6 = inlined_call_operand.vmem [shape: f32[1,128], index: 6, kind: input, shape index: {}]
  %s7 = inlined_call_operand.hbm [shape: f32[2,16,16,128], index: 7, kind: output, shape index: {}]
  %s8 = sld [smem:[#allocation0]]
  $region81: #{tpu_custom_call.1} parent=0
    _
  %s10 = ssub.s32 1, %s8
  %s11 = scalar_select 0, %s10, %s8
  $region1: #{tpu_custom_call.1} parent=0
    #allocation4 [shape = 'u8[131072]{0}', space=vmem, size = 0x20000, scoped, tag = 'input window, operand 0']
    #allocation5 [shape = 's32[2]{0}', space=sflag, size = 0x8, scoped, tag = 'scoped memory for tpu_custom_call.1']
    #allocation6 [shape = 's32[2]{0}', space=sflag, size = 0x8, scoped, tag = 'scoped memory for tpu_custom_call.1']
    #allocation7 [shape = 'u8[294912]{0}', space=vmem, size = 0x48000, scoped, tag = 'input window, operand 1, single buffered']
    #allocation8 [shape = 's32[1]{0}', space=sflag, size = 0x4, scoped, tag = 'scoped memory for tpu_custom_call.1']
    #allocation9 [shape = 'u8[294912]{0}', space=vmem, size = 0x48000, scoped, tag = 'input window, operand 3, single buffered']
    #allocation10 [shape = 'u8[32768]{0}', space=vmem, size = 0x8000, scoped, tag = 'input window, operand 5, single buffered']
    #allocation11 [shape = 's32[1]{0}', space=sflag, size = 0x4, scoped, tag = 'scoped memory for tpu_custom_call.1']
    #allocation12 [shape = 'u8[131072]{0}', space=vmem, size = 0x20000, scoped, tag = 'output window, operand 0']
    %12 = vsyncpa [#allocation5], 0
    %s13 = scalar_lea.sflag [#allocation5], 1
    %14 = vsyncpa %s13, 0
    %15 = vsyncpa [#allocation8], 0
    %16 = vsyncpa [#allocation11], 0
    %17 = vsyncpa [#allocation6], 0
    %s18 = scalar_lea.sflag [#allocation6], 1
    %19 = vsyncpa %s18, 0
    loop: start=0, step=1, limit=6
    $region2: #{tpu_custom_call.1} parent=1 // loop_pre_header
      _
    $region3: #{tpu_custom_call.1} parent=1 // loop_header
      %s21 = sphi 0, %s25
      %p22 = scmp.ge.s32.totalorder %s21, 6
      %s28 = sphi 0, %s40
      %s29 = sphi 0, %s36
      %s30 = sphi 0, %s28
      %s31 = sphi 0, %s29
      %s32 = sphi 0, %s30
      %s33 = sphi 0, %s31
      %s43 = sphi 0, %s45
      %s46 = sphi 0, %s43
      %s47 = sphi 0, %s46
      %s63 = sphi 0, %s47
      %s67 = sphi 0, %s67
      %s69 = sphi 0, %s67
      %s70 = sphi 0, %s69
      %s84 = sphi 0, %s70
      %s88 = sphi 0, %s88
      %s90 = sphi 0, %s88
      %s91 = sphi 0, %s90
      %s105 = sphi 0, %s91
      %s109 = sphi 0, %s109
      %s111 = sphi 0, %s109
      %s112 = sphi 0, %s111
      %s126 = sphi 0, %s112
      %s130 = sphi 0, %s130
      %s132 = sphi 0, %s130
      %s133 = sphi 0, %s132
      %s147 = sphi 0, %s133
      %s151 = sphi 0, %s151
      %s153 = sphi 0, %s151
      %s154 = sphi 0, %s153
      %s168 = sphi 0, %s154
      %s172 = sphi 0, %s172
      %s174 = sphi 0, %s172
      %s175 = sphi 0, %s174
      %s189 = sphi 0, %s175
      %s197 = sphi 0, %s199
      %s200 = sphi 0, %s197
      %s201 = sphi 0, %s200
      %s217 = sphi 0, %s201
    $region4: #{tpu_custom_call.1} parent=1 // loop_header_branch
      %24 = sbr.rel (%p22) target = $region8
    $region5: #{tpu_custom_call.1} parent=1 // loop_body
      %s26 = ssub.s32 %s21, 1
      %s27 = ssub.s32 %s21, 2
      %s34 = sadd.s32 1, %s29
      %p35 = scmp.ge.s32.totalorder %s34, 2
      %s36 = scalar_select %p35, 0, %s34
      %s37 = sadd.s32 1, %s28
      %s38 = scalar_select %p35, %s37, %s28
      %p39 = scmp.ge.s32.totalorder %s38, 2
      %s40 = scalar_select %p39, 0, %s38
      %s41 = ssub.s32 %s28, %s40
      %p42 = scmp.eq.s32.totalorder %s41, 0
      %s44 = sadd.s32 %s43, 1
      %s45 = scalar_select %p42, %s43, %s44
      %p48 = pneg %p42
      %p49 = scmp.eq.s32.totalorder %s21, 3
      %p50 = por %p48, %p49
      %p51 = scmp.ne.s32.totalorder %s43, %s46
      %p52 = scmp.eq.s32.totalorder %s21, 0
      %p53 = por %p51, %p52
      %p54 = scmp.ne.s32.totalorder %s43, %s46
      %p55 = scmp.eq.s32.totalorder %s26, 3
      %p56 = por %p54, %p55
      %p57 = scmp.ne.s32.totalorder %s46, %s47
      %p58 = scmp.eq.s32.totalorder %s26, 0
      %p59 = por %p57, %p58
      %p60 = scmp.ne.s32.totalorder %s46, %s47
      %p61 = scmp.eq.s32.totalorder %s27, 3
      %p62 = por %p60, %p61
      %p64 = scmp.ne.s32.totalorder %s47, %s63
      %p65 = scmp.eq.s32.totalorder %s27, 0
      %p66 = por %p64, %p65
      %s68 = sadd.s32 %s67, 1
      %p71 = scmp.eq.s32.totalorder %s21, 3
      %p72 = scmp.ne.s32.totalorder %s67, %s69
      %p73 = scmp.eq.s32.totalorder %s21, 0
      %p74 = por %p72, %p73
      %p75 = scmp.ne.s32.totalorder %s67, %s69
      %p76 = scmp.eq.s32.totalorder %s26, 3
      %p77 = por %p75, %p76
      %p78 = scmp.ne.s32.totalorder %s69, %s70
      %p79 = scmp.eq.s32.totalorder %s26, 0
      %p80 = por %p78, %p79
      %p81 = scmp.ne.s32.totalorder %s69, %s70
      %p82 = scmp.eq.s32.totalorder %s27, 3
      %p83 = por %p81, %p82
      %p85 = scmp.ne.s32.totalorder %s70, %s84
      %p86 = scmp.eq.s32.totalorder %s27, 0
      %p87 = por %p85, %p86
      %s89 = sadd.s32 %s88, 1
      %p92 = scmp.eq.s32.totalorder %s21, 3
      %p93 = scmp.ne.s32.totalorder %s88, %s90
      %p94 = scmp.eq.s32.totalorder %s21, 0
      %p95 = por %p93, %p94
      %p96 = scmp.ne.s32.totalorder %s88, %s90
      %p97 = scmp.eq.s32.totalorder %s26, 3
      %p98 = por %p96, %p97
      %p99 = scmp.ne.s32.totalorder %s90, %s91
      %p100 = scmp.eq.s32.totalorder %s26, 0
      %p101 = por %p99, %p100
      %p102 = scmp.ne.s32.totalorder %s90, %s91
      %p103 = scmp.eq.s32.totalorder %s27, 3
      %p104 = por %p102, %p103
      %p106 = scmp.ne.s32.totalorder %s91, %s105
      %p107 = scmp.eq.s32.totalorder %s27, 0
      %p108 = por %p106, %p107
      %s110 = sadd.s32 %s109, 1
      %p113 = scmp.eq.s32.totalorder %s21, 3
      %p114 = scmp.ne.s32.totalorder %s109, %s111
      %p115 = scmp.eq.s32.totalorder %s21, 0
      %p116 = por %p114, %p115
      %p117 = scmp.ne.s32.totalorder %s109, %s111
      %p118 = scmp.eq.s32.totalorder %s26, 3
      %p119 = por %p117, %p118
      %p120 = scmp.ne.s32.totalorder %s111, %s112
      %p121 = scmp.eq.s32.totalorder %s26, 0
      %p122 = por %p120, %p121
      %p123 = scmp.ne.s32.totalorder %s111, %s112
      %p124 = scmp.eq.s32.totalorder %s27, 3
      %p125 = por %p123, %p124
      %p127 = scmp.ne.s32.totalorder %s112, %s126
      %p128 = scmp.eq.s32.totalorder %s27, 0
      %p129 = por %p127, %p128
      %s131 = sadd.s32 %s130, 1
      %p134 = scmp.eq.s32.totalorder %s21, 3
      %p135 = scmp.ne.s32.totalorder %s130, %s132
      %p136 = scmp.eq.s32.totalorder %s21, 0
      %p137 = por %p135, %p136
      %p138 = scmp.ne.s32.totalorder %s130, %s132
      %p139 = scmp.eq.s32.totalorder %s26, 3
      %p140 = por %p138, %p139
      %p141 = scmp.ne.s32.totalorder %s132, %s133
      %p142 = scmp.eq.s32.totalorder %s26, 0
      %p143 = por %p141, %p142
      %p144 = scmp.ne.s32.totalorder %s132, %s133
      %p145 = scmp.eq.s32.totalorder %s27, 3
      %p146 = por %p144, %p145
      %p148 = scmp.ne.s32.totalorder %s133, %s147
      %p149 = scmp.eq.s32.totalorder %s27, 0
      %p150 = por %p148, %p149
      %s152 = sadd.s32 %s151, 1
      %p155 = scmp.eq.s32.totalorder %s21, 3
      %p156 = scmp.ne.s32.totalorder %s151, %s153
      %p157 = scmp.eq.s32.totalorder %s21, 0
      %p158 = por %p156, %p157
      %p159 = scmp.ne.s32.totalorder %s151, %s153
      %p160 = scmp.eq.s32.totalorder %s26, 3
      %p161 = por %p159, %p160
      %p162 = scmp.ne.s32.totalorder %s153, %s154
      %p163 = scmp.eq.s32.totalorder %s26, 0
      %p164 = por %p162, %p163
      %p165 = scmp.ne.s32.totalorder %s153, %s154
      %p166 = scmp.eq.s32.totalorder %s27, 3
      %p167 = por %p165, %p166
      %p169 = scmp.ne.s32.totalorder %s154, %s168
      %p170 = scmp.eq.s32.totalorder %s27, 0
      %p171 = por %p169, %p170
      %s173 = sadd.s32 %s172, 1
      %p176 = scmp.eq.s32.totalorder %s21, 3
      %p177 = scmp.ne.s32.totalorder %s172, %s174
      %p178 = scmp.eq.s32.totalorder %s21, 0
      %p179 = por %p177, %p178
      %p180 = scmp.ne.s32.totalorder %s172, %s174
      %p181 = scmp.eq.s32.totalorder %s26, 3
      %p182 = por %p180, %p181
      %p183 = scmp.ne.s32.totalorder %s174, %s175
      %p184 = scmp.eq.s32.totalorder %s26, 0
      %p185 = por %p183, %p184
      %p186 = scmp.ne.s32.totalorder %s174, %s175
      %p187 = scmp.eq.s32.totalorder %s27, 3
      %p188 = por %p186, %p187
      %p190 = scmp.ne.s32.totalorder %s175, %s189
      %p191 = scmp.eq.s32.totalorder %s27, 0
      %p192 = por %p190, %p191
      %s193 = ssub.s32 %s28, %s40
      %s194 = ssub.s32 %s29, %s36
      %s195 = sor.u32 %s193, %s194
      %p196 = scmp.eq.s32.totalorder %s195, 0
      %s198 = sadd.s32 %s197, 1
      %s199 = scalar_select %p196, %s197, %s198
      %p202 = pneg %p196
      %p203 = scmp.eq.s32.totalorder %s21, 3
      %p204 = por %p202, %p203
      %p205 = scmp.ne.s32.totalorder %s197, %s200
      %p206 = scmp.eq.s32.totalorder %s21, 0
      %p207 = por %p205, %p206
      %p208 = scmp.ne.s32.totalorder %s197, %s200
      %p209 = scmp.eq.s32.totalorder %s26, 3
      %p210 = por %p208, %p209
      %p211 = scmp.ne.s32.totalorder %s200, %s201
      %p212 = scmp.eq.s32.totalorder %s26, 0
      %p213 = por %p211, %p212
      %p214 = scmp.ne.s32.totalorder %s200, %s201
      %p215 = scmp.eq.s32.totalorder %s27, 3
      %p216 = por %p214, %p215
      %p218 = scmp.ne.s32.totalorder %s201, %s217
      %p219 = scmp.eq.s32.totalorder %s27, 0
      %p220 = por %p218, %p219
      %p221 = scmp.le.s32.totalorder 1, %s21
      %p222 = scmp.lt.s32.totalorder %s21, 5
      %p223 = pnand %p221, %p222
      %p224 = pneg %p223
      // Predicated region
      $region9: #{tpu_custom_call.1} parent=5 // pred_check
        _
      $region10: #{tpu_custom_call.1} parent=5 // pred_check_branch
        %226 = sbr.rel (%p223) target = $region12
      $region11: #{tpu_custom_call.1} parent=5 // pred_region
        %s227 = ssub.s32 %s21, 1
        // Predicated region
        $region13: #{tpu_custom_call.1} parent=11 // pred_check
          %p228 = pneg %p80
        $region14: #{tpu_custom_call.1} parent=11 // pred_check_branch
          %230 = sbr.rel (%p228) target = $region16
        $region15: #{tpu_custom_call.1} parent=11 // pred_region
          %s232 = ssub.s32 9216, 9216
          %233 = vsyncadd [#allocation8], %s232
          %s234 = sshll.u32 [#allocation7], 4
          %s235 = int_to_ptr.vmem [resolvable:$true] %s234
          %240 = dma.hbm_to_vmem [thread:$0]  %s1, 9216, %s235, [#allocation8], 64, 64, 4
        $region16: #{tpu_custom_call.1} parent=11 // pred_fallthru
          _
        // Predicated region
        $region17: #{tpu_custom_call.1} parent=11 // pred_check
          %p241 = pneg %p101
        $region18: #{tpu_custom_call.1} parent=11 // pred_check_branch
          %243 = sbr.rel (%p241) target = $region20
        $region19: #{tpu_custom_call.1} parent=11 // pred_region
          _
        $region20: #{tpu_custom_call.1} parent=11 // pred_fallthru
          _
        // Predicated region
        $region21: #{tpu_custom_call.1} parent=11 // pred_check
          %p244 = pneg %p122
        $region22: #{tpu_custom_call.1} parent=11 // pred_check_branch
          %246 = sbr.rel (%p244) target = $region24
        $region23: #{tpu_custom_call.1} parent=11 // pred_region
          %s248 = ssub.s32 9216, 9216
          %249 = vsyncadd [#allocation8], %s248
          %s250 = sshll.u32 [#allocation9], 4
          %s251 = int_to_ptr.vmem [resolvable:$true] %s250
          %256 = dma.hbm_to_vmem [thread:$0]  %s3, 9216, %s251, [#allocation8], 64, 64, 4
        $region24: #{tpu_custom_call.1} parent=11 // pred_fallthru
          _
        // Predicated region
        $region25: #{tpu_custom_call.1} parent=11 // pred_check
          %p257 = pneg %p143
        $region26: #{tpu_custom_call.1} parent=11 // pred_check_branch
          %259 = sbr.rel (%p257) target = $region28
        $region27: #{tpu_custom_call.1} parent=11 // pred_region
          _
        $region28: #{tpu_custom_call.1} parent=11 // pred_fallthru
          _
        // Predicated region
        $region29: #{tpu_custom_call.1} parent=11 // pred_check
          %p260 = pneg %p164
        $region30: #{tpu_custom_call.1} parent=11 // pred_check_branch
          %262 = sbr.rel (%p260) target = $region32
        $region31: #{tpu_custom_call.1} parent=11 // pred_region
          %s264 = ssub.s32 1024, 1024
          %265 = vsyncadd [#allocation11], %s264
          %s266 = sshll.u32 [#allocation10], 4
          %s267 = int_to_ptr.vmem [resolvable:$true] %s266
          %272 = dma.hbm_to_vmem [thread:$0]  %s5, 1024, %s267, [#allocation11], 64, 64, 4
        $region32: #{tpu_custom_call.1} parent=11 // pred_fallthru
          _
        // Predicated region
        $region33: #{tpu_custom_call.1} parent=11 // pred_check
          %p273 = pneg %p185
        $region34: #{tpu_custom_call.1} parent=11 // pred_check_branch
          %275 = sbr.rel (%p273) target = $region36
        $region35: #{tpu_custom_call.1} parent=11 // pred_region
          _
        $region36: #{tpu_custom_call.1} parent=11 // pred_fallthru
          _
      $region12: #{tpu_custom_call.1} parent=5 // pred_fallthru
        _
      %p276 = scmp.lt.s32.totalorder %s21, 4
      // Predicated region
      $region37: #{tpu_custom_call.1} parent=5 // pred_check
        %p277 = pneg %p276
      $region38: #{tpu_custom_call.1} parent=5 // pred_check_branch
        %279 = sbr.rel (%p277) target = $region40
      $region39: #{tpu_custom_call.1} parent=5 // pred_region
        // Predicated region
        $region41: #{tpu_custom_call.1} parent=39 // pred_check
          %p280 = pneg %p53
        $region42: #{tpu_custom_call.1} parent=39 // pred_check_branch
          %282 = sbr.rel (%p280) target = $region44
        $region43: #{tpu_custom_call.1} parent=39 // pred_region
          %s283 = sand.u32 %s43, 1
          %s284 = scalar_lea.sflag [#allocation5], %s283
          %s285 = sand.u32 %s43, 1
          %s286 = smul.addr %s285, 128
          %s287 = scalar_lea.vmem [#allocation4], %s286
          %s289 = ssub.s32 2048, 2048
          %290 = vsyncadd %s284, %s289
          %s291 = smul.addr %s28, 32
          %s292 = smul.addr %s291, 64
          %s293 = scalar_lea.hbm %s0, %s292
          %s294 = sshll.u32 %s287, 4
          %s295 = int_to_ptr.vmem [resolvable:$true] %s294
          %300 = dma.hbm_to_vmem [thread:$0]  %s293, 2048, %s295, %s284, 64, 64, 4
        $region44: #{tpu_custom_call.1} parent=39 // pred_fallthru
          _
      $region40: #{tpu_custom_call.1} parent=5 // pred_fallthru
        _
      %p301 = scmp.le.s32.totalorder 1, %s21
      %p302 = scmp.lt.s32.totalorder %s21, 5
      %p303 = pnand %p301, %p302
      %p304 = pneg %p303
      // Predicated region
      $region45: #{tpu_custom_call.1} parent=5 // pred_check
        _
      $region46: #{tpu_custom_call.1} parent=5 // pred_check_branch
        %306 = sbr.rel (%p303) target = $region48
      $region47: #{tpu_custom_call.1} parent=5 // pred_region
        %s307 = ssub.s32 %s21, 1
        %s308 = sand.u32 %s46, 1
        %s309 = scalar_lea.sflag [#allocation5], %s308
        %s310 = sand.u32 %s46, 1
        %s311 = smul.addr %s310, 128
        %s312 = scalar_lea.vmem [#allocation4], %s311
        // Predicated region
        $region49: #{tpu_custom_call.1} parent=47 // pred_check
          %p313 = pneg %p59
        $region50: #{tpu_custom_call.1} parent=47 // pred_check_branch
          %315 = sbr.rel (%p313) target = $region52
        $region51: #{tpu_custom_call.1} parent=47 // pred_region
          %316 = dma.done %s309, 2048
        $region52: #{tpu_custom_call.1} parent=47 // pred_fallthru
          _
        // Predicated region
        $region53: #{tpu_custom_call.1} parent=47 // pred_check
          %p317 = pneg %p80
        $region54: #{tpu_custom_call.1} parent=47 // pred_check_branch
          %319 = sbr.rel (%p317) target = $region56
        $region55: #{tpu_custom_call.1} parent=47 // pred_region
          %320 = dma.done [#allocation8], 9216
        $region56: #{tpu_custom_call.1} parent=47 // pred_fallthru
          _
        // Predicated region
        $region57: #{tpu_custom_call.1} parent=47 // pred_check
          %p321 = pneg %p122
        $region58: #{tpu_custom_call.1} parent=47 // pred_check_branch
          %323 = sbr.rel (%p321) target = $region60
        $region59: #{tpu_custom_call.1} parent=47 // pred_region
          %324 = dma.done [#allocation8], 9216
        $region60: #{tpu_custom_call.1} parent=47 // pred_fallthru
          _
        // Predicated region
        $region61: #{tpu_custom_call.1} parent=47 // pred_check
          %p325 = pneg %p164
        $region62: #{tpu_custom_call.1} parent=47 // pred_check_branch
          %327 = sbr.rel (%p325) target = $region64
        $region63: #{tpu_custom_call.1} parent=47 // pred_region
          %328 = dma.done [#allocation11], 1024
        $region64: #{tpu_custom_call.1} parent=47 // pred_fallthru
          _
        %s329 = sand.u32 %s46, 1
        %s330 = scalar_lea.sflag [#allocation5], %s329
        %s331 = sand.u32 %s46, 1
        %s332 = smul.addr %s331, 128
        %s333 = scalar_lea.vmem [#allocation4], %s332
        %p334 = pneg %p59
        %p335 = pneg %p56
        %p336 = pneg %p80
        %p337 = pneg %p77
        %p338 = pneg %p101
        %p339 = pneg %p98
        %p340 = pneg %p122
        %p341 = pneg %p119
        %p342 = pneg %p143
        %p343 = pneg %p140
        %p344 = pneg %p164
        %p345 = pneg %p161
        %p346 = pneg %p185
        %p347 = pneg %p182
        %p348 = pneg %p213
        %p349 = pneg %p210
        %s350 = sand.u32 %s200, 1
        %s351 = scalar_lea.sflag [#allocation6], %s350
        %s352 = sand.u32 %s200, 1
        %s353 = smul.addr %s352, 128
        %s354 = scalar_lea.vmem [#allocation12], %s353
        %s355 = smul.u32 8, %s31
        %p357 = scmp.eq.s32.totalorder %s31, 0
        // Predicated region
        $region65: #{tpu_custom_call.1} parent=47 // pred_check
          %p358 = pneg %p357
        $region66: #{tpu_custom_call.1} parent=47 // pred_check_branch
          %360 = sbr.rel (%p358) target = $region68
        $region67: #{tpu_custom_call.1} parent=47 // pred_region
          %361 = vst [vmem:[#allocation2] sm:$0xf] 0
          %362 = vst [vmem:[#allocation2 + $0x4] sm:$0xf] 0
          %363 = vst [vmem:[#allocation2 + $0x8] sm:$0xf] 0
          %364 = vst [vmem:[#allocation2 + $0xc] sm:$0xf] 0
          %vm365 = vcmask 1040384
          %vm366 = vsmask.f32 256
          %vm367 = vmand %vm365, %vm366
          %v368 = vld [vmem:[#allocation2 + $0x10] sm:$0x1]
          %v369 = vsel %vm367, 0, %v368
          %370 = vst [vmem:[#allocation2 + $0x10] sm:$0x1] %v369
          %371 = vst [vmem:[#allocation2 + $0x14] sm:$0xf] 0
          %372 = vst [vmem:[#allocation2 + $0x18] sm:$0xf] 0
          %373 = vst [vmem:[#allocation2 + $0x1c] sm:$0xf] 0
          %374 = vst [vmem:[#allocation2 + $0x20] sm:$0xf] 0
          %v375 = vld [vmem:[#allocation2 + $0x24] sm:$0x1]
          %v376 = vsel %vm367, 0, %v375
          %377 = vst [vmem:[#allocation2 + $0x24] sm:$0x1] %v376
          %378 = vst [vmem:[#allocation2 + $0x28] sm:$0xf] 0
          %379 = vst [vmem:[#allocation2 + $0x2c] sm:$0xf] 0
          %380 = vst [vmem:[#allocation2 + $0x30] sm:$0xf] 0
          %381 = vst [vmem:[#allocation2 + $0x34] sm:$0xf] 0
          %v382 = vld [vmem:[#allocation2 + $0x38] sm:$0x1]
          %v383 = vsel %vm367, 0, %v382
          %384 = vst [vmem:[#allocation2 + $0x38] sm:$0x1] %v383
          %385 = vst [vmem:[#allocation2 + $0x3c] sm:$0xf] 0
          %386 = vst [vmem:[#allocation2 + $0x40] sm:$0xf] 0
          %387 = vst [vmem:[#allocation2 + $0x44] sm:$0xf] 0
          %388 = vst [vmem:[#allocation2 + $0x48] sm:$0xf] 0
          %v389 = vld [vmem:[#allocation2 + $0x4c] sm:$0x1]
          %v390 = vsel %vm367, 0, %v389
          %391 = vst [vmem:[#allocation2 + $0x4c] sm:$0x1] %v390
          %392 = vst [vmem:[#allocation2 + $0x50] sm:$0xf] 0
          %393 = vst [vmem:[#allocation2 + $0x54] sm:$0xf] 0
          %394 = vst [vmem:[#allocation2 + $0x58] sm:$0xf] 0
          %395 = vst [vmem:[#allocation2 + $0x5c] sm:$0xf] 0
          %v396 = vld [vmem:[#allocation2 + $0x60] sm:$0x1]
          %v397 = vsel %vm367, 0, %v396
          %398 = vst [vmem:[#allocation2 + $0x60] sm:$0x1] %v397
          %399 = vst [vmem:[#allocation2 + $0x64] sm:$0xf] 0
          %400 = vst [vmem:[#allocation2 + $0x68] sm:$0xf] 0
          %401 = vst [vmem:[#allocation2 + $0x6c] sm:$0xf] 0
          %402 = vst [vmem:[#allocation2 + $0x70] sm:$0xf] 0
          %v403 = vld [vmem:[#allocation2 + $0x74] sm:$0x1]
          %v404 = vsel %vm367, 0, %v403
          %405 = vst [vmem:[#allocation2 + $0x74] sm:$0x1] %v404
          %406 = vst [vmem:[#allocation2 + $0x78] sm:$0xf] 0
          %407 = vst [vmem:[#allocation2 + $0x7c] sm:$0xf] 0
          %408 = vst [vmem:[#allocation2 + $0x80] sm:$0xf] 0
          %409 = vst [vmem:[#allocation2 + $0x84] sm:$0xf] 0
          %v410 = vld [vmem:[#allocation2 + $0x88] sm:$0x1]
          %v411 = vsel %vm367, 0, %v410
          %412 = vst [vmem:[#allocation2 + $0x88] sm:$0x1] %v411
          %413 = vst [vmem:[#allocation2 + $0x8c] sm:$0xf] 0
          %414 = vst [vmem:[#allocation2 + $0x90] sm:$0xf] 0
          %415 = vst [vmem:[#allocation2 + $0x94] sm:$0xf] 0
          %416 = vst [vmem:[#allocation2 + $0x98] sm:$0xf] 0
          %v417 = vld [vmem:[#allocation2 + $0x9c] sm:$0x1]
          %v418 = vsel %vm367, 0, %v417
          %419 = vst [vmem:[#allocation2 + $0x9c] sm:$0x1] %v418
          %420 = vst [vmem:[#allocation2 + $0xa0] sm:$0xf] 0
          %421 = vst [vmem:[#allocation2 + $0xa4] sm:$0xf] 0
          %422 = vst [vmem:[#allocation2 + $0xa8] sm:$0xf] 0
          %423 = vst [vmem:[#allocation2 + $0xac] sm:$0xf] 0
          %v424 = vld [vmem:[#allocation2 + $0xb0] sm:$0x1]
          %v425 = vsel %vm367, 0, %v424
          %426 = vst [vmem:[#allocation2 + $0xb0] sm:$0x1] %v425
          %427 = vst [vmem:[#allocation2 + $0xb4] sm:$0xf] 0
          %428 = vst [vmem:[#allocation2 + $0xb8] sm:$0xf] 0
          %429 = vst [vmem:[#allocation2 + $0xbc] sm:$0xf] 0
          %430 = vst [vmem:[#allocation2 + $0xc0] sm:$0xf] 0
          %v431 = vld [vmem:[#allocation2 + $0xc4] sm:$0x1]
          %v432 = vsel %vm367, 0, %v431
          %433 = vst [vmem:[#allocation2 + $0xc4] sm:$0x1] %v432
          %434 = vst [vmem:[#allocation2 + $0xc8] sm:$0xf] 0
          %435 = vst [vmem:[#allocation2 + $0xcc] sm:$0xf] 0
          %436 = vst [vmem:[#allocation2 + $0xd0] sm:$0xf] 0
          %437 = vst [vmem:[#allocation2 + $0xd4] sm:$0xf] 0
          %v438 = vld [vmem:[#allocation2 + $0xd8] sm:$0x1]
          %v439 = vsel %vm367, 0, %v438
          %440 = vst [vmem:[#allocation2 + $0xd8] sm:$0x1] %v439
          %441 = vst [vmem:[#allocation2 + $0xdc] sm:$0xf] 0
          %442 = vst [vmem:[#allocation2 + $0xe0] sm:$0xf] 0
          %443 = vst [vmem:[#allocation2 + $0xe4] sm:$0xf] 0
          %444 = vst [vmem:[#allocation2 + $0xe8] sm:$0xf] 0
          %v445 = vld [vmem:[#allocation2 + $0xec] sm:$0x1]
          %v446 = vsel %vm367, 0, %v445
          %447 = vst [vmem:[#allocation2 + $0xec] sm:$0x1] %v446
          %448 = vst [vmem:[#allocation2 + $0xf0] sm:$0xf] 0
          %449 = vst [vmem:[#allocation2 + $0xf4] sm:$0xf] 0
          %450 = vst [vmem:[#allocation2 + $0xf8] sm:$0xf] 0
          %451 = vst [vmem:[#allocation2 + $0xfc] sm:$0xf] 0
          %v452 = vld [vmem:[#allocation2 + $0x100] sm:$0x1]
          %v453 = vsel %vm367, 0, %v452
          %454 = vst [vmem:[#allocation2 + $0x100] sm:$0x1] %v453
          %455 = vst [vmem:[#allocation2 + $0x104] sm:$0xf] 0
          %456 = vst [vmem:[#allocation2 + $0x108] sm:$0xf] 0
          %457 = vst [vmem:[#allocation2 + $0x10c] sm:$0xf] 0
          %458 = vst [vmem:[#allocation2 + $0x110] sm:$0xf] 0
          %v459 = vld [vmem:[#allocation2 + $0x114] sm:$0x1]
          %v460 = vsel %vm367, 0, %v459
          %461 = vst [vmem:[#allocation2 + $0x114] sm:$0x1] %v460
          %462 = vst [vmem:[#allocation2 + $0x118] sm:$0xf] 0
          %463 = vst [vmem:[#allocation2 + $0x11c] sm:$0xf] 0
          %464 = vst [vmem:[#allocation2 + $0x120] sm:$0xf] 0
          %465 = vst [vmem:[#allocation2 + $0x124] sm:$0xf] 0
          %v466 = vld [vmem:[#allocation2 + $0x128] sm:$0x1]
          %v467 = vsel %vm367, 0, %v466
          %468 = vst [vmem:[#allocation2 + $0x128] sm:$0x1] %v467
          %469 = vst [vmem:[#allocation2 + $0x12c] sm:$0xf] 0
          %470 = vst [vmem:[#allocation2 + $0x130] sm:$0xf] 0
          %471 = vst [vmem:[#allocation2 + $0x134] sm:$0xf] 0
          %472 = vst [vmem:[#allocation2 + $0x138] sm:$0xf] 0
          %v473 = vld [vmem:[#allocation2 + $0x13c] sm:$0x1]
          %v474 = vsel %vm367, 0, %v473
          %475 = vst [vmem:[#allocation2 + $0x13c] sm:$0x1] %v474
          %476 = vst [vmem:[#allocation2 + $0x140] sm:$0xf] 0
          %477 = vst [vmem:[#allocation2 + $0x144] sm:$0xf] 0
          %478 = vst [vmem:[#allocation2 + $0x148] sm:$0xf] 0
          %479 = vst [vmem:[#allocation2 + $0x14c] sm:$0xf] 0
          %v480 = vld [vmem:[#allocation2 + $0x150] sm:$0x1]
          %v481 = vsel %vm367, 0, %v480
          %482 = vst [vmem:[#allocation2 + $0x150] sm:$0x1] %v481
          %483 = vst [vmem:[#allocation2 + $0x154] sm:$0xf] 0
          %484 = vst [vmem:[#allocation2 + $0x158] sm:$0xf] 0
          %485 = vst [vmem:[#allocation2 + $0x15c] sm:$0xf] 0
          %486 = vst [vmem:[#allocation2 + $0x160] sm:$0xf] 0
          %v487 = vld [vmem:[#allocation2 + $0x164] sm:$0x1]
          %v488 = vsel %vm367, 0, %v487
          %489 = vst [vmem:[#allocation2 + $0x164] sm:$0x1] %v488
          %490 = vst [vmem:[#allocation2 + $0x168] sm:$0xf] 0
          %491 = vst [vmem:[#allocation2 + $0x16c] sm:$0xf] 0
          %492 = vst [vmem:[#allocation2 + $0x170] sm:$0xf] 0
          %493 = vst [vmem:[#allocation2 + $0x174] sm:$0xf] 0
          %v494 = vld [vmem:[#allocation2 + $0x178] sm:$0x1]
          %v495 = vsel %vm367, 0, %v494
          %496 = vst [vmem:[#allocation2 + $0x178] sm:$0x1] %v495
          %497 = vst [vmem:[#allocation2 + $0x17c] sm:$0xf] 0
          %498 = vst [vmem:[#allocation2 + $0x180] sm:$0xf] 0
          %499 = vst [vmem:[#allocation2 + $0x184] sm:$0xf] 0
          %500 = vst [vmem:[#allocation2 + $0x188] sm:$0xf] 0
          %v501 = vld [vmem:[#allocation2 + $0x18c] sm:$0x1]
          %v502 = vsel %vm367, 0, %v501
          %503 = vst [vmem:[#allocation2 + $0x18c] sm:$0x1] %v502
          %504 = vst [vmem:[#allocation3] sm:$0xf] 0
          %505 = vst [vmem:[#allocation3 + $0x4] sm:$0xf] 0
          %506 = vst [vmem:[#allocation3 + $0x8] sm:$0xf] 0
          %507 = vst [vmem:[#allocation3 + $0xc] sm:$0xf] 0
          %v508 = vld [vmem:[#allocation3 + $0x10] sm:$0x1]
          %v509 = vsel %vm367, 0, %v508
          %510 = vst [vmem:[#allocation3 + $0x10] sm:$0x1] %v509
          %511 = vst [vmem:[#allocation3 + $0x14] sm:$0xf] 0
          %512 = vst [vmem:[#allocation3 + $0x18] sm:$0xf] 0
          %513 = vst [vmem:[#allocation3 + $0x1c] sm:$0xf] 0
          %514 = vst [vmem:[#allocation3 + $0x20] sm:$0xf] 0
          %v515 = vld [vmem:[#allocation3 + $0x24] sm:$0x1]
          %v516 = vsel %vm367, 0, %v515
          %517 = vst [vmem:[#allocation3 + $0x24] sm:$0x1] %v516
          %518 = vst [vmem:[#allocation3 + $0x28] sm:$0xf] 0
          %519 = vst [vmem:[#allocation3 + $0x2c] sm:$0xf] 0
          %520 = vst [vmem:[#allocation3 + $0x30] sm:$0xf] 0
          %521 = vst [vmem:[#allocation3 + $0x34] sm:$0xf] 0
          %v522 = vld [vmem:[#allocation3 + $0x38] sm:$0x1]
          %v523 = vsel %vm367, 0, %v522
          %524 = vst [vmem:[#allocation3 + $0x38] sm:$0x1] %v523
          %525 = vst [vmem:[#allocation3 + $0x3c] sm:$0xf] 0
          %526 = vst [vmem:[#allocation3 + $0x40] sm:$0xf] 0
          %527 = vst [vmem:[#allocation3 + $0x44] sm:$0xf] 0
          %528 = vst [vmem:[#allocation3 + $0x48] sm:$0xf] 0
          %v529 = vld [vmem:[#allocation3 + $0x4c] sm:$0x1]
          %v530 = vsel %vm367, 0, %v529
          %531 = vst [vmem:[#allocation3 + $0x4c] sm:$0x1] %v530
          %532 = vst [vmem:[#allocation3 + $0x50] sm:$0xf] 0
          %533 = vst [vmem:[#allocation3 + $0x54] sm:$0xf] 0
          %534 = vst [vmem:[#allocation3 + $0x58] sm:$0xf] 0
          %535 = vst [vmem:[#allocation3 + $0x5c] sm:$0xf] 0
          %v536 = vld [vmem:[#allocation3 + $0x60] sm:$0x1]
          %v537 = vsel %vm367, 0, %v536
          %538 = vst [vmem:[#allocation3 + $0x60] sm:$0x1] %v537
          %539 = vst [vmem:[#allocation3 + $0x64] sm:$0xf] 0
          %540 = vst [vmem:[#allocation3 + $0x68] sm:$0xf] 0
          %541 = vst [vmem:[#allocation3 + $0x6c] sm:$0xf] 0
          %542 = vst [vmem:[#allocation3 + $0x70] sm:$0xf] 0
          %v543 = vld [vmem:[#allocation3 + $0x74] sm:$0x1]
          %v544 = vsel %vm367, 0, %v543
          %545 = vst [vmem:[#allocation3 + $0x74] sm:$0x1] %v544
          %546 = vst [vmem:[#allocation3 + $0x78] sm:$0xf] 0
          %547 = vst [vmem:[#allocation3 + $0x7c] sm:$0xf] 0
          %548 = vst [vmem:[#allocation3 + $0x80] sm:$0xf] 0
          %549 = vst [vmem:[#allocation3 + $0x84] sm:$0xf] 0
          %v550 = vld [vmem:[#allocation3 + $0x88] sm:$0x1]
          %v551 = vsel %vm367, 0, %v550
          %552 = vst [vmem:[#allocation3 + $0x88] sm:$0x1] %v551
          %553 = vst [vmem:[#allocation3 + $0x8c] sm:$0xf] 0
          %554 = vst [vmem:[#allocation3 + $0x90] sm:$0xf] 0
          %555 = vst [vmem:[#allocation3 + $0x94] sm:$0xf] 0
          %556 = vst [vmem:[#allocation3 + $0x98] sm:$0xf] 0
          %v557 = vld [vmem:[#allocation3 + $0x9c] sm:$0x1]
          %v558 = vsel %vm367, 0, %v557
          %559 = vst [vmem:[#allocation3 + $0x9c] sm:$0x1] %v558
          %560 = vst [vmem:[#allocation3 + $0xa0] sm:$0xf] 0
          %561 = vst [vmem:[#allocation3 + $0xa4] sm:$0xf] 0
          %562 = vst [vmem:[#allocation3 + $0xa8] sm:$0xf] 0
          %563 = vst [vmem:[#allocation3 + $0xac] sm:$0xf] 0
          %v564 = vld [vmem:[#allocation3 + $0xb0] sm:$0x1]
          %v565 = vsel %vm367, 0, %v564
          %566 = vst [vmem:[#allocation3 + $0xb0] sm:$0x1] %v565
          %567 = vst [vmem:[#allocation3 + $0xb4] sm:$0xf] 0
          %568 = vst [vmem:[#allocation3 + $0xb8] sm:$0xf] 0
          %569 = vst [vmem:[#allocation3 + $0xbc] sm:$0xf] 0
          %570 = vst [vmem:[#allocation3 + $0xc0] sm:$0xf] 0
          %v571 = vld [vmem:[#allocation3 + $0xc4] sm:$0x1]
          %v572 = vsel %vm367, 0, %v571
          %573 = vst [vmem:[#allocation3 + $0xc4] sm:$0x1] %v572
          %v574 = vld [vmem:[%s312] sm:$0xf]
          %v575 = vld [vmem:[%s312 + $0x4] sm:$0xf]
          %v576 = vld [vmem:[%s312 + $0x8] sm:$0xf]
          %v577 = vld [vmem:[%s312 + $0xc] sm:$0xf]
          %v578 = vld [vmem:[%s312 + $0x10] sm:$0xf]
          %v579 = vld [vmem:[%s312 + $0x14] sm:$0xf]
          %v580 = vld [vmem:[%s312 + $0x18] sm:$0xf]
          %v581 = vld [vmem:[%s312 + $0x1c] sm:$0xf]
          %v582 = vld [vmem:[%s312 + $0x20] sm:$0xf]
          %v583 = vld [vmem:[%s312 + $0x24] sm:$0xf]
          %v584 = vld [vmem:[%s312 + $0x28] sm:$0xf]
          %v585 = vld [vmem:[%s312 + $0x2c] sm:$0xf]
          %v586 = vld [vmem:[%s312 + $0x30] sm:$0xf]
          %v587 = vld [vmem:[%s312 + $0x34] sm:$0xf]
          %v588 = vld [vmem:[%s312 + $0x38] sm:$0xf]
          %v589 = vld [vmem:[%s312 + $0x3c] sm:$0xf]
          %v590 = vld [vmem:[%s312 + $0x40] sm:$0xf]
          %v591 = vld [vmem:[%s312 + $0x44] sm:$0xf]
          %v592 = vld [vmem:[%s312 + $0x48] sm:$0xf]
          %v593 = vld [vmem:[%s312 + $0x4c] sm:$0xf]
          %v594 = vld [vmem:[%s312 + $0x50] sm:$0xf]
          %v595 = vld [vmem:[%s312 + $0x54] sm:$0xf]
          %v596 = vld [vmem:[%s312 + $0x58] sm:$0xf]
          %v597 = vld [vmem:[%s312 + $0x5c] sm:$0xf]
          %v598 = vld [vmem:[%s312 + $0x60] sm:$0xf]
          %v599 = vld [vmem:[%s312 + $0x64] sm:$0xf]
          %v600 = vld [vmem:[%s312 + $0x68] sm:$0xf]
          %v601 = vld [vmem:[%s312 + $0x6c] sm:$0xf]
          %v602 = vld [vmem:[%s312 + $0x70] sm:$0xf]
          %v603 = vld [vmem:[%s312 + $0x74] sm:$0xf]
          %v604 = vld [vmem:[%s312 + $0x78] sm:$0xf]
          %v605 = vld [vmem:[%s312 + $0x7c] sm:$0xf]
          %s606 = scalar_lea.vmem [#allocation2], 40
          %607 = vst [vmem:[%s606 + $0x8] sm:$0xf] %v574
          %608 = vst [vmem:[%s606 + $0xc] sm:$0xf] %v575
          %609 = vst [vmem:[%s606 + $0x1c] sm:$0xf] %v576
          %610 = vst [vmem:[%s606 + $0x20] sm:$0xf] %v577
          %611 = vst [vmem:[%s606 + $0x30] sm:$0xf] %v578
          %612 = vst [vmem:[%s606 + $0x34] sm:$0xf] %v579
          %613 = vst [vmem:[%s606 + $0x44] sm:$0xf] %v580
          %614 = vst [vmem:[%s606 + $0x48] sm:$0xf] %v581
          %615 = vst [vmem:[%s606 + $0x58] sm:$0xf] %v582
          %616 = vst [vmem:[%s606 + $0x5c] sm:$0xf] %v583
          %617 = vst [vmem:[%s606 + $0x6c] sm:$0xf] %v584
          %618 = vst [vmem:[%s606 + $0x70] sm:$0xf] %v585
          %619 = vst [vmem:[%s606 + $0x80] sm:$0xf] %v586
          %620 = vst [vmem:[%s606 + $0x84] sm:$0xf] %v587
          %621 = vst [vmem:[%s606 + $0x94] sm:$0xf] %v588
          %622 = vst [vmem:[%s606 + $0x98] sm:$0xf] %v589
          %623 = vst [vmem:[%s606 + $0xa8] sm:$0xf] %v590
          %624 = vst [vmem:[%s606 + $0xac] sm:$0xf] %v591
          %625 = vst [vmem:[%s606 + $0xbc] sm:$0xf] %v592
          %626 = vst [vmem:[%s606 + $0xc0] sm:$0xf] %v593
          %627 = vst [vmem:[%s606 + $0xd0] sm:$0xf] %v594
          %628 = vst [vmem:[%s606 + $0xd4] sm:$0xf] %v595
          %629 = vst [vmem:[%s606 + $0xe4] sm:$0xf] %v596
          %630 = vst [vmem:[%s606 + $0xe8] sm:$0xf] %v597
          %631 = vst [vmem:[%s606 + $0xf8] sm:$0xf] %v598
          %632 = vst [vmem:[%s606 + $0xfc] sm:$0xf] %v599
          %633 = vst [vmem:[%s606 + $0x10c] sm:$0xf] %v600
          %634 = vst [vmem:[%s606 + $0x110] sm:$0xf] %v601
          %635 = vst [vmem:[%s606 + $0x120] sm:$0xf] %v602
          %636 = vst [vmem:[%s606 + $0x124] sm:$0xf] %v603
          %637 = vst [vmem:[%s606 + $0x134] sm:$0xf] %v604
          %638 = vst [vmem:[%s606 + $0x138] sm:$0xf] %v605
        $region68: #{tpu_custom_call.1} parent=47 // pred_fallthru
          _
        %s639 = smul.u32 %s31, 8
        %s640 = smul.u32 %s639, 5
        %s641 = smul.addr %s640, 4
        %s642 = scalar_lea.vmem [#allocation2], %s641
        %v643 = vld [vmem:[%s642 + $0x4] sm:$0x8]
        %v644 = vld [vmem:[%s642 + $0x8] sm:$0xf]
        %v645 = vld [vmem:[%s642 + $0xc] sm:$0xf]
        %v646 = vld [vmem:[%s642 + $0x18] sm:$0x8]
        %v647 = vld [vmem:[%s642 + $0x1c] sm:$0xf]
        %v648 = vld [vmem:[%s642 + $0x20] sm:$0xf]
        %v649 = vld [vmem:[%s642 + $0x2c] sm:$0x8]
        %v650 = vld [vmem:[%s642 + $0x30] sm:$0xf]
        %v651 = vld [vmem:[%s642 + $0x34] sm:$0xf]
        %v652 = vld [vmem:[%s642 + $0x40] sm:$0x8]
        %v653 = vld [vmem:[%s642 + $0x44] sm:$0xf]
        %v654 = vld [vmem:[%s642 + $0x48] sm:$0xf]
        %v655 = vld [vmem:[%s642 + $0x54] sm:$0x8]
        %v656 = vld [vmem:[%s642 + $0x58] sm:$0xf]
        %v657 = vld [vmem:[%s642 + $0x5c] sm:$0xf]
        %v658 = vld [vmem:[%s642 + $0x68] sm:$0x8]
        %v659 = vld [vmem:[%s642 + $0x6c] sm:$0xf]
        %v660 = vld [vmem:[%s642 + $0x70] sm:$0xf]
        %v661 = vld [vmem:[%s642 + $0x7c] sm:$0x8]
        %v662 = vld [vmem:[%s642 + $0x80] sm:$0xf]
        %v663 = vld [vmem:[%s642 + $0x84] sm:$0xf]
        %v664 = vld [vmem:[%s642 + $0x90] sm:$0x8]
        %v665 = vld [vmem:[%s642 + $0x94] sm:$0xf]
        %v666 = vld [vmem:[%s642 + $0x98] sm:$0xf]
        %v667 = vld [vmem:[%s642 + $0xa4] sm:$0x8]
        %v668 = vld [vmem:[%s642 + $0xa8] sm:$0xf]
        %v669 = vld [vmem:[%s642 + $0xac] sm:$0xf]
        %v670 = vld [vmem:[%s642 + $0xb8] sm:$0x8]
        %v671 = vld [vmem:[%s642 + $0xbc] sm:$0xf]
        %v672 = vld [vmem:[%s642 + $0xc0] sm:$0xf]
        %v673 = vld [vmem:[%s642 + $0xcc] sm:$0x8]
        %v674 = vld [vmem:[%s642 + $0xd0] sm:$0xf]
        %v675 = vld [vmem:[%s642 + $0xd4] sm:$0xf]
        %v676 = vld [vmem:[%s642 + $0xe0] sm:$0x8]
        %v677 = vld [vmem:[%s642 + $0xe4] sm:$0xf]
        %v678 = vld [vmem:[%s642 + $0xe8] sm:$0xf]
        %v679 = vld [vmem:[%s642 + $0x10] sm:$0x1]
        %v680 = vld [vmem:[%s642 + $0x24] sm:$0x1]
        %v681 = vld [vmem:[%s642 + $0x38] sm:$0x1]
        %v682 = vld [vmem:[%s642 + $0x4c] sm:$0x1]
        %v683 = vld [vmem:[%s642 + $0x60] sm:$0x1]
        %v684 = vld [vmem:[%s642 + $0x74] sm:$0x1]
        %v685 = vld [vmem:[%s642 + $0x88] sm:$0x1]
        %v686 = vld [vmem:[%s642 + $0x9c] sm:$0x1]
        %v687 = vld [vmem:[%s642 + $0xb0] sm:$0x1]
        %v688 = vld [vmem:[%s642 + $0xc4] sm:$0x1]
        %v689 = vld [vmem:[%s642 + $0xd8] sm:$0x1]
        %v690 = vld [vmem:[%s642 + $0xec] sm:$0x1]
        %vm691 = vsmask.f32 256
        %vm692 = vsmask.f32 4368
        %vm693 = vmor %vm691, %vm692
        %v695 = vshrl.u32 %v643, 16
        %v697 = vrot.slane %v695, 7
        %v698 = vrot.slane %v697, 4
        %v700 = vshrl.u32 %v644, 16
        %v702 = vrot.slane %v700, 7
        %v703 = vshll.u32 %v644, 16
        %v705 = vor.u32 %v702, %v703
        %v706 = vsel %vm693, %v698, %v705
        %v707 = vrot.slane %v702, 4
        %v709 = vshrl.u32 %v645, 16
        %v711 = vrot.slane %v709, 7
        %v712 = vshll.u32 %v645, 16
        %v714 = vor.u32 %v711, %v712
        %v715 = vsel %vm693, %v707, %v714
        %v717 = vshrl.u32 %v646, 16
        %v719 = vrot.slane %v717, 7
        %v720 = vrot.slane %v719, 4
        %v722 = vshrl.u32 %v647, 16
        %v724 = vrot.slane %v722, 7
        %v725 = vshll.u32 %v647, 16
        %v727 = vor.u32 %v724, %v725
        %v728 = vsel %vm693, %v720, %v727
        %v729 = vrot.slane %v724, 4
        %v731 = vshrl.u32 %v648, 16
        %v733 = vrot.slane %v731, 7
        %v734 = vshll.u32 %v648, 16
        %v736 = vor.u32 %v733, %v734
        %v737 = vsel %vm693, %v729, %v736
        %v739 = vshrl.u32 %v649, 16
        %v741 = vrot.slane %v739, 7
        %v742 = vrot.slane %v741, 4
        %v744 = vshrl.u32 %v650, 16
        %v746 = vrot.slane %v744, 7
        %v747 = vshll.u32 %v650, 16
        %v749 = vor.u32 %v746, %v747
        %v750 = vsel %vm693, %v742, %v749
        %v751 = vrot.slane %v746, 4
        %v753 = vshrl.u32 %v651, 16
        %v755 = vrot.slane %v753, 7
        %v756 = vshll.u32 %v651, 16
        %v758 = vor.u32 %v755, %v756
        %v759 = vsel %vm693, %v751, %v758
        %v761 = vshrl.u32 %v652, 16
        %v763 = vrot.slane %v761, 7
        %v764 = vrot.slane %v763, 4
        %v766 = vshrl.u32 %v653, 16
        %v768 = vrot.slane %v766, 7
        %v769 = vshll.u32 %v653, 16
        %v771 = vor.u32 %v768, %v769
        %v772 = vsel %vm693, %v764, %v771
        %v773 = vrot.slane %v768, 4
        %v775 = vshrl.u32 %v654, 16
        %v777 = vrot.slane %v775, 7
        %v778 = vshll.u32 %v654, 16
        %v780 = vor.u32 %v777, %v778
        %v781 = vsel %vm693, %v773, %v780
        %v783 = vshrl.u32 %v655, 16
        %v785 = vrot.slane %v783, 7
        %v786 = vrot.slane %v785, 4
        %v788 = vshrl.u32 %v656, 16
        %v790 = vrot.slane %v788, 7
        %v791 = vshll.u32 %v656, 16
        %v793 = vor.u32 %v790, %v791
        %v794 = vsel %vm693, %v786, %v793
        %v795 = vrot.slane %v790, 4
        %v797 = vshrl.u32 %v657, 16
        %v799 = vrot.slane %v797, 7
        %v800 = vshll.u32 %v657, 16
        %v802 = vor.u32 %v799, %v800
        %v803 = vsel %vm693, %v795, %v802
        %v805 = vshrl.u32 %v658, 16
        %v807 = vrot.slane %v805, 7
        %v808 = vrot.slane %v807, 4
        %v810 = vshrl.u32 %v659, 16
        %v812 = vrot.slane %v810, 7
        %v813 = vshll.u32 %v659, 16
        %v815 = vor.u32 %v812, %v813
        %v816 = vsel %vm693, %v808, %v815
        %v817 = vrot.slane %v812, 4
        %v819 = vshrl.u32 %v660, 16
        %v821 = vrot.slane %v819, 7
        %v822 = vshll.u32 %v660, 16
        %v824 = vor.u32 %v821, %v822
        %v825 = vsel %vm693, %v817, %v824
        %v827 = vshrl.u32 %v661, 16
        %v829 = vrot.slane %v827, 7
        %v830 = vrot.slane %v829, 4
        %v832 = vshrl.u32 %v662, 16
        %v834 = vrot.slane %v832, 7
        %v835 = vshll.u32 %v662, 16
        %v837 = vor.u32 %v834, %v835
        %v838 = vsel %vm693, %v830, %v837
        %v839 = vrot.slane %v834, 4
        %v841 = vshrl.u32 %v663, 16
        %v843 = vrot.slane %v841, 7
        %v844 = vshll.u32 %v663, 16
        %v846 = vor.u32 %v843, %v844
        %v847 = vsel %vm693, %v839, %v846
        %v849 = vshrl.u32 %v664, 16
        %v851 = vrot.slane %v849, 7
        %v852 = vrot.slane %v851, 4
        %v854 = vshrl.u32 %v665, 16
        %v856 = vrot.slane %v854, 7
        %v857 = vshll.u32 %v665, 16
        %v859 = vor.u32 %v856, %v857
        %v860 = vsel %vm693, %v852, %v859
        %v861 = vrot.slane %v856, 4
        %v863 = vshrl.u32 %v666, 16
        %v865 = vrot.slane %v863, 7
        %v866 = vshll.u32 %v666, 16
        %v868 = vor.u32 %v865, %v866
        %v869 = vsel %vm693, %v861, %v868
        %v871 = vshrl.u32 %v667, 16
        %v873 = vrot.slane %v871, 7
        %v874 = vrot.slane %v873, 4
        %v876 = vshrl.u32 %v668, 16
        %v878 = vrot.slane %v876, 7
        %v879 = vshll.u32 %v668, 16
        %v881 = vor.u32 %v878, %v879
        %v882 = vsel %vm693, %v874, %v881
        %v883 = vrot.slane %v878, 4
        %v885 = vshrl.u32 %v669, 16
        %v887 = vrot.slane %v885, 7
        %v888 = vshll.u32 %v669, 16
        %v890 = vor.u32 %v887, %v888
        %v891 = vsel %vm693, %v883, %v890
        %v893 = vshrl.u32 %v670, 16
        %v895 = vrot.slane %v893, 7
        %v896 = vrot.slane %v895, 4
        %v898 = vshrl.u32 %v671, 16
        %v900 = vrot.slane %v898, 7
        %v901 = vshll.u32 %v671, 16
        %v903 = vor.u32 %v900, %v901
        %v904 = vsel %vm693, %v896, %v903
        %v905 = vrot.slane %v900, 4
        %v907 = vshrl.u32 %v672, 16
        %v909 = vrot.slane %v907, 7
        %v910 = vshll.u32 %v672, 16
        %v912 = vor.u32 %v909, %v910
        %v913 = vsel %vm693, %v905, %v912
        %vm914 = vsmask.f32 3328
        %vm915 = vsmask.f32 7440
        %vm916 = vmor %vm914, %vm915
        %v917 = vrot.slane %v700, 4
        %v918 = vrot.slane %v703, 5
        %v919 = vor.u32 %v917, %v918
        %v920 = vrot.slane %v919, 4
        %v921 = vrot.slane %v712, 5
        %v922 = vsel %vm916, %v920, %v921
        %v923 = vrot.slane %v709, 4
        %v924 = vor.u32 %v923, %v921
        %v925 = vrot.slane %v924, 4
        %v927 = vshll.u32 %v679, 16
        %v929 = vrot.slane %v927, 5
        %v930 = vsel %vm916, %v925, %v929
        %v931 = vrot.slane %v722, 4
        %v932 = vrot.slane %v725, 5
        %v933 = vor.u32 %v931, %v932
        %v934 = vrot.slane %v933, 4
        %v935 = vrot.slane %v734, 5
        %v936 = vsel %vm916, %v934, %v935
        %v937 = vrot.slane %v731, 4
        %v938 = vor.u32 %v937, %v935
        %v939 = vrot.slane %v938, 4
        %v941 = vshll.u32 %v680, 16
        %v943 = vrot.slane %v941, 5
        %v944 = vsel %vm916, %v939, %v943
        %v945 = vrot.slane %v744, 4
        %v946 = vrot.slane %v747, 5
        %v947 = vor.u32 %v945, %v946
        %v948 = vrot.slane %v947, 4
        %v949 = vrot.slane %v756, 5
        %v950 = vsel %vm916, %v948, %v949
        %v951 = vrot.slane %v753, 4
        %v952 = vor.u32 %v951, %v949
        %v953 = vrot.slane %v952, 4
        %v955 = vshll.u32 %v681, 16
        %v957 = vrot.slane %v955, 5
        %v958 = vsel %vm916, %v953, %v957
        %v959 = vrot.slane %v766, 4
        %v960 = vrot.slane %v769, 5
        %v961 = vor.u32 %v959, %v960
        %v962 = vrot.slane %v961, 4
        %v963 = vrot.slane %v778, 5
        %v964 = vsel %vm916, %v962, %v963
        %v965 = vrot.slane %v775, 4
        %v966 = vor.u32 %v965, %v963
        %v967 = vrot.slane %v966, 4
        %v969 = vshll.u32 %v682, 16
        %v971 = vrot.slane %v969, 5
        %v972 = vsel %vm916, %v967, %v971
        %v973 = vrot.slane %v788, 4
        %v974 = vrot.slane %v791, 5
        %v975 = vor.u32 %v973, %v974
        %v976 = vrot.slane %v975, 4
        %v977 = vrot.slane %v800, 5
        %v978 = vsel %vm916, %v976, %v977
        %v979 = vrot.slane %v797, 4
        %v980 = vor.u32 %v979, %v977
        %v981 = vrot.slane %v980, 4
        %v983 = vshll.u32 %v683, 16
        %v985 = vrot.slane %v983, 5
        %v986 = vsel %vm916, %v981, %v985
        %v987 = vrot.slane %v810, 4
        %v988 = vrot.slane %v813, 5
        %v989 = vor.u32 %v987, %v988
        %v990 = vrot.slane %v989, 4
        %v991 = vrot.slane %v822, 5
        %v992 = vsel %vm916, %v990, %v991
        %v993 = vrot.slane %v819, 4
        %v994 = vor.u32 %v993, %v991
        %v995 = vrot.slane %v994, 4
        %v997 = vshll.u32 %v684, 16
        %v999 = vrot.slane %v997, 5
        %v1000 = vsel %vm916, %v995, %v999
        %v1001 = vrot.slane %v832, 4
        %v1002 = vrot.slane %v835, 5
        %v1003 = vor.u32 %v1001, %v1002
        %v1004 = vrot.slane %v1003, 4
        %v1005 = vrot.slane %v844, 5
        %v1006 = vsel %vm916, %v1004, %v1005
        %v1007 = vrot.slane %v841, 4
        %v1008 = vor.u32 %v1007, %v1005
        %v1009 = vrot.slane %v1008, 4
        %v1011 = vshll.u32 %v685, 16
        %v1013 = vrot.slane %v1011, 5
        %v1014 = vsel %vm916, %v1009, %v1013
        %v1015 = vrot.slane %v854, 4
        %v1016 = vrot.slane %v857, 5
        %v1017 = vor.u32 %v1015, %v1016
        %v1018 = vrot.slane %v1017, 4
        %v1019 = vrot.slane %v866, 5
        %v1020 = vsel %vm916, %v1018, %v1019
        %v1021 = vrot.slane %v863, 4
        %v1022 = vor.u32 %v1021, %v1019
        %v1023 = vrot.slane %v1022, 4
        %v1025 = vshll.u32 %v686, 16
        %v1027 = vrot.slane %v1025, 5
        %v1028 = vsel %vm916, %v1023, %v1027
        %v1029 = vrot.slane %v876, 4
        %v1030 = vrot.slane %v879, 5
        %v1031 = vor.u32 %v1029, %v1030
        %v1032 = vrot.slane %v1031, 4
        %v1033 = vrot.slane %v888, 5
        %v1034 = vsel %vm916, %v1032, %v1033
        %v1035 = vrot.slane %v885, 4
        %v1036 = vor.u32 %v1035, %v1033
        %v1037 = vrot.slane %v1036, 4
        %v1039 = vshll.u32 %v687, 16
        %v1041 = vrot.slane %v1039, 5
        %v1042 = vsel %vm916, %v1037, %v1041
        %v1043 = vrot.slane %v898, 4
        %v1044 = vrot.slane %v901, 5
        %v1045 = vor.u32 %v1043, %v1044
        %v1046 = vrot.slane %v1045, 4
        %v1047 = vrot.slane %v910, 5
        %v1048 = vsel %vm916, %v1046, %v1047
        %v1049 = vrot.slane %v907, 4
        %v1050 = vor.u32 %v1049, %v1047
        %v1051 = vrot.slane %v1050, 4
        %v1053 = vshll.u32 %v688, 16
        %v1055 = vrot.slane %v1053, 5
        %v1056 = vsel %vm916, %v1051, %v1055
        %v1058 = vshrl.u32 %v673, 16
        %v1060 = vrot.slane %v1058, 7
        %v1061 = vrot.slane %v1060, 4
        %v1063 = vshrl.u32 %v674, 16
        %v1065 = vrot.slane %v1063, 7
        %v1066 = vshll.u32 %v674, 16
        %v1068 = vor.u32 %v1065, %v1066
        %v1069 = vsel %vm693, %v1061, %v1068
        %v1070 = vrot.slane %v1065, 4
        %v1072 = vshrl.u32 %v675, 16
        %v1074 = vrot.slane %v1072, 7
        %v1075 = vshll.u32 %v675, 16
        %v1077 = vor.u32 %v1074, %v1075
        %v1078 = vsel %vm693, %v1070, %v1077
        %v1079 = vrot.slane %v1063, 4
        %v1080 = vrot.slane %v1066, 5
        %v1081 = vor.u32 %v1079, %v1080
        %v1082 = vrot.slane %v1081, 4
        %v1083 = vrot.slane %v1075, 5
        %v1084 = vsel %vm916, %v1082, %v1083
        %v1085 = vrot.slane %v1072, 4
        %v1086 = vor.u32 %v1085, %v1083
        %v1087 = vrot.slane %v1086, 4
        %v1089 = vshll.u32 %v689, 16
        %v1091 = vrot.slane %v1089, 5
        %v1092 = vsel %vm916, %v1087, %v1091
        %v1094 = vshrl.u32 %v676, 16
        %v1096 = vrot.slane %v1094, 7
        %v1097 = vrot.slane %v1096, 4
        %v1099 = vshrl.u32 %v677, 16
        %v1101 = vrot.slane %v1099, 7
        %v1102 = vshll.u32 %v677, 16
        %v1104 = vor.u32 %v1101, %v1102
        %v1105 = vsel %vm693, %v1097, %v1104
        %v1106 = vrot.slane %v1101, 4
        %v1108 = vshrl.u32 %v678, 16
        %v1110 = vrot.slane %v1108, 7
        %v1111 = vshll.u32 %v678, 16
        %v1113 = vor.u32 %v1110, %v1111
        %v1114 = vsel %vm693, %v1106, %v1113
        %v1115 = vrot.slane %v1099, 4
        %v1116 = vrot.slane %v1102, 5
        %v1117 = vor.u32 %v1115, %v1116
        %v1118 = vrot.slane %v1117, 4
        %v1119 = vrot.slane %v1111, 5
        %v1120 = vsel %vm916, %v1118, %v1119
        %v1121 = vrot.slane %v1108, 4
        %v1122 = vor.u32 %v1121, %v1119
        %v1123 = vrot.slane %v1122, 4
        %v1125 = vshll.u32 %v690, 16
        %v1127 = vrot.slane %v1125, 5
        %v1128 = vsel %vm916, %v1123, %v1127
        %v1129 = vunpack.c.l.b16 %v706
        %v1130 = vunpack.c.l.b16 %v715
        %v1131 = vunpack.c.l.b16 %v728
        %v1132 = vunpack.c.l.b16 %v737
        %v1133 = vunpack.c.l.b16 %v750
        %v1134 = vunpack.c.l.b16 %v759
        %v1135 = vunpack.c.l.b16 %v772
        %v1136 = vunpack.c.l.b16 %v781
        %v1137 = vunpack.c.l.b16 %v794
        %v1138 = vunpack.c.l.b16 %v803
        %v1139 = vunpack.c.l.b16 %v816
        %v1140 = vunpack.c.l.b16 %v825
        %v1141 = vunpack.c.l.b16 %v838
        %v1142 = vunpack.c.l.b16 %v847
        %v1143 = vunpack.c.l.b16 %v860
        %v1144 = vunpack.c.l.b16 %v869
        %v1145 = vunpack.c.l.b16 %v882
        %v1146 = vunpack.c.l.b16 %v891
        %v1147 = vunpack.c.l.b16 %v904
        %v1148 = vunpack.c.l.b16 %v913
        %v1149 = vpack.c.b16 %v1130, %v1129
        %v1150 = vpack.c.b16 %v1132, %v1131
        %v1151 = vpack.c.b16 %v1134, %v1133
        %v1152 = vpack.c.b16 %v1136, %v1135
        %v1153 = vpack.c.b16 %v1138, %v1137
        %v1154 = vpack.c.b16 %v1140, %v1139
        %v1155 = vpack.c.b16 %v1142, %v1141
        %v1156 = vpack.c.b16 %v1144, %v1143
        %v1157 = vpack.c.b16 %v1146, %v1145
        %v1158 = vpack.c.b16 %v1148, %v1147
        %v1189 = vunpack.c.l.b16 %v644
        %v1190 = vunpack.c.l.b16 %v645
        %v1191 = vunpack.c.l.b16 %v647
        %v1192 = vunpack.c.l.b16 %v648
        %v1193 = vunpack.c.l.b16 %v650
        %v1194 = vunpack.c.l.b16 %v651
        %v1195 = vunpack.c.l.b16 %v653
        %v1196 = vunpack.c.l.b16 %v654
        %v1197 = vunpack.c.l.b16 %v656
        %v1198 = vunpack.c.l.b16 %v657
        %v1199 = vunpack.c.l.b16 %v659
        %v1200 = vunpack.c.l.b16 %v660
        %v1201 = vunpack.c.l.b16 %v662
        %v1202 = vunpack.c.l.b16 %v663
        %v1203 = vunpack.c.l.b16 %v665
        %v1204 = vunpack.c.l.b16 %v666
        %v1205 = vunpack.c.l.b16 %v668
        %v1206 = vunpack.c.l.b16 %v669
        %v1207 = vunpack.c.l.b16 %v671
        %v1208 = vunpack.c.l.b16 %v672
        %v1209 = vpack.c.b16 %v1190, %v1189
        %v1210 = vpack.c.b16 %v1192, %v1191
        %v1211 = vpack.c.b16 %v1194, %v1193
        %v1212 = vpack.c.b16 %v1196, %v1195
        %v1213 = vpack.c.b16 %v1198, %v1197
        %v1214 = vpack.c.b16 %v1200, %v1199
        %v1215 = vpack.c.b16 %v1202, %v1201
        %v1216 = vpack.c.b16 %v1204, %v1203
        %v1217 = vpack.c.b16 %v1206, %v1205
        %v1218 = vpack.c.b16 %v1208, %v1207
        %v1229 = vunpack.c.l.b16 %v922
        %v1230 = vunpack.c.l.b16 %v930
        %v1231 = vunpack.c.l.b16 %v936
        %v1232 = vunpack.c.l.b16 %v944
        %v1233 = vunpack.c.l.b16 %v950
        %v1234 = vunpack.c.l.b16 %v958
        %v1235 = vunpack.c.l.b16 %v964
        %v1236 = vunpack.c.l.b16 %v972
        %v1237 = vunpack.c.l.b16 %v978
        %v1238 = vunpack.c.l.b16 %v986
        %v1239 = vunpack.c.l.b16 %v992
        %v1240 = vunpack.c.l.b16 %v1000
        %v1241 = vunpack.c.l.b16 %v1006
        %v1242 = vunpack.c.l.b16 %v1014
        %v1243 = vunpack.c.l.b16 %v1020
        %v1244 = vunpack.c.l.b16 %v1028
        %v1245 = vunpack.c.l.b16 %v1034
        %v1246 = vunpack.c.l.b16 %v1042
        %v1247 = vunpack.c.l.b16 %v1048
        %v1248 = vunpack.c.l.b16 %v1056
        %v1249 = vpack.c.b16 %v1230, %v1229
        %v1250 = vpack.c.b16 %v1232, %v1231
        %v1251 = vpack.c.b16 %v1234, %v1233
        %v1252 = vpack.c.b16 %v1236, %v1235
        %v1253 = vpack.c.b16 %v1238, %v1237
        %v1254 = vpack.c.b16 %v1240, %v1239
        %v1255 = vpack.c.b16 %v1242, %v1241
        %v1256 = vpack.c.b16 %v1244, %v1243
        %v1257 = vpack.c.b16 %v1246, %v1245
        %v1258 = vpack.c.b16 %v1248, %v1247
        %v1269 = vunpack.c.l.b16 %v1069
        %v1270 = vunpack.c.l.b16 %v1078
        %v1271 = vpack.c.b16 %v1270, %v1269
        %v1275 = vunpack.c.l.b16 %v674
        %v1276 = vunpack.c.l.b16 %v675
        %v1277 = vpack.c.b16 %v1276, %v1275
        %v1279 = vunpack.c.l.b16 %v1084
        %v1280 = vunpack.c.l.b16 %v1092
        %v1281 = vpack.c.b16 %v1280, %v1279
        %v1283 = vunpack.c.l.b16 %v1105
        %v1284 = vunpack.c.l.b16 %v1114
        %v1285 = vpack.c.b16 %v1284, %v1283
        %v1289 = vunpack.c.l.b16 %v677
        %v1290 = vunpack.c.l.b16 %v678
        %v1291 = vpack.c.b16 %v1290, %v1289
        %v1293 = vunpack.c.l.b16 %v1120
        %v1294 = vunpack.c.l.b16 %v1128
        %v1295 = vpack.c.b16 %v1294, %v1293
        %v1297 = vld [vmem:[#allocation7] sm:$0xf]
        %v1298 = vld [vmem:[#allocation7 + $0x4] sm:$0xf]
        %v1299 = vld [vmem:[#allocation7 + $0x8] sm:$0xf]
        %v1300 = vld [vmem:[#allocation7 + $0xc] sm:$0xf]
        %v1301 = vld [vmem:[#allocation7 + $0x10] sm:$0xf]
        %v1302 = vld [vmem:[#allocation7 + $0x14] sm:$0xf]
        %v1303 = vld [vmem:[#allocation7 + $0x18] sm:$0xf]
        %v1304 = vld [vmem:[#allocation7 + $0x1c] sm:$0xf]
        %v1305 = vld [vmem:[#allocation7 + $0x20] sm:$0xf]
        %v1306 = vld [vmem:[#allocation7 + $0x24] sm:$0xf]
        %v1307 = vld [vmem:[#allocation7 + $0x28] sm:$0xf]
        %v1308 = vld [vmem:[#allocation7 + $0x2c] sm:$0xf]
        %v1309 = vld [vmem:[#allocation7 + $0x30] sm:$0xf]
        %v1310 = vld [vmem:[#allocation7 + $0x34] sm:$0xf]
        %v1311 = vld [vmem:[#allocation7 + $0x38] sm:$0xf]
        %v1312 = vld [vmem:[#allocation7 + $0x3c] sm:$0xf]
        %v1313 = vld [vmem:[#allocation7 + $0x40] sm:$0xf]
        %v1314 = vld [vmem:[#allocation7 + $0x44] sm:$0xf]
        %v1315 = vld [vmem:[#allocation7 + $0x48] sm:$0xf]
        %v1316 = vld [vmem:[#allocation7 + $0x4c] sm:$0xf]
        %v1317 = vld [vmem:[#allocation7 + $0x50] sm:$0xf]
        %v1318 = vld [vmem:[#allocation7 + $0x54] sm:$0xf]
        %v1319 = vld [vmem:[#allocation7 + $0x58] sm:$0xf]
        %v1320 = vld [vmem:[#allocation7 + $0x5c] sm:$0xf]
        %v1321 = vld [vmem:[#allocation7 + $0x60] sm:$0xf]
        %v1322 = vld [vmem:[#allocation7 + $0x64] sm:$0xf]
        %v1323 = vld [vmem:[#allocation7 + $0x68] sm:$0xf]
        %v1324 = vld [vmem:[#allocation7 + $0x6c] sm:$0xf]
        %v1325 = vld [vmem:[#allocation7 + $0x70] sm:$0xf]
        %v1326 = vld [vmem:[#allocation7 + $0x74] sm:$0xf]
        %v1327 = vld [vmem:[#allocation7 + $0x78] sm:$0xf]
        %v1328 = vld [vmem:[#allocation7 + $0x7c] sm:$0xf]
        %v1329 = vld [vmem:[#allocation7 + $0x80] sm:$0xf]
        %v1330 = vld [vmem:[#allocation7 + $0x84] sm:$0xf]
        %v1331 = vld [vmem:[#allocation7 + $0x88] sm:$0xf]
        %v1332 = vld [vmem:[#allocation7 + $0x8c] sm:$0xf]
        %v1333 = vld [vmem:[#allocation7 + $0x90] sm:$0xf]
        %v1334 = vld [vmem:[#allocation7 + $0x94] sm:$0xf]
        %v1335 = vld [vmem:[#allocation7 + $0x98] sm:$0xf]
        %v1336 = vld [vmem:[#allocation7 + $0x9c] sm:$0xf]
        %v1337 = vld [vmem:[#allocation7 + $0xa0] sm:$0xf]
        %v1338 = vld [vmem:[#allocation7 + $0xa4] sm:$0xf]
        %v1339 = vld [vmem:[#allocation7 + $0xa8] sm:$0xf]
        %v1340 = vld [vmem:[#allocation7 + $0xac] sm:$0xf]
        %v1341 = vld [vmem:[#allocation7 + $0xb0] sm:$0xf]
        %v1342 = vld [vmem:[#allocation7 + $0xb4] sm:$0xf]
        %v1343 = vld [vmem:[#allocation7 + $0xb8] sm:$0xf]
        %v1344 = vld [vmem:[#allocation7 + $0xbc] sm:$0xf]
        %v1345 = vld [vmem:[#allocation7 + $0xc0] sm:$0xf]
        %v1346 = vld [vmem:[#allocation7 + $0xc4] sm:$0xf]
        %v1347 = vld [vmem:[#allocation7 + $0xc8] sm:$0xf]
        %v1348 = vld [vmem:[#allocation7 + $0xcc] sm:$0xf]
        %v1349 = vld [vmem:[#allocation7 + $0xd0] sm:$0xf]
        %v1350 = vld [vmem:[#allocation7 + $0xd4] sm:$0xf]
        %v1351 = vld [vmem:[#allocation7 + $0xd8] sm:$0xf]
        %v1352 = vld [vmem:[#allocation7 + $0xdc] sm:$0xf]
        %v1353 = vld [vmem:[#allocation7 + $0xe0] sm:$0xf]
        %v1354 = vld [vmem:[#allocation7 + $0xe4] sm:$0xf]
        %v1355 = vld [vmem:[#allocation7 + $0xe8] sm:$0xf]
        %v1356 = vld [vmem:[#allocation7 + $0xec] sm:$0xf]
        %v1357 = vld [vmem:[#allocation7 + $0xf0] sm:$0xf]
        %v1358 = vld [vmem:[#allocation7 + $0xf4] sm:$0xf]
        %v1359 = vld [vmem:[#allocation7 + $0xf8] sm:$0xf]
        %v1360 = vld [vmem:[#allocation7 + $0xfc] sm:$0xf]
        %v1361 = vld [vmem:[#allocation7 + $0x100] sm:$0xf]
        %v1362 = vld [vmem:[#allocation7 + $0x104] sm:$0xf]
        %v1363 = vld [vmem:[#allocation7 + $0x108] sm:$0xf]
        %v1364 = vld [vmem:[#allocation7 + $0x10c] sm:$0xf]
        %v1365 = vld [vmem:[#allocation7 + $0x110] sm:$0xf]
        %v1366 = vld [vmem:[#allocation7 + $0x114] sm:$0xf]
        %v1367 = vld [vmem:[#allocation7 + $0x118] sm:$0xf]
        %v1368 = vld [vmem:[#allocation7 + $0x11c] sm:$0xf]
        %v1369 = vld [vmem:[#allocation7 + $0x120] sm:$0xf]
        %v1370 = vld [vmem:[#allocation7 + $0x124] sm:$0xf]
        %v1371 = vld [vmem:[#allocation7 + $0x128] sm:$0xf]
        %v1372 = vld [vmem:[#allocation7 + $0x12c] sm:$0xf]
        %v1373 = vld [vmem:[#allocation7 + $0x130] sm:$0xf]
        %v1374 = vld [vmem:[#allocation7 + $0x134] sm:$0xf]
        %v1375 = vld [vmem:[#allocation7 + $0x138] sm:$0xf]
        %v1376 = vld [vmem:[#allocation7 + $0x13c] sm:$0xf]
        %v1377 = vld [vmem:[#allocation7 + $0x140] sm:$0xf]
        %v1378 = vld [vmem:[#allocation7 + $0x144] sm:$0xf]
        %v1379 = vld [vmem:[#allocation7 + $0x148] sm:$0xf]
        %v1380 = vld [vmem:[#allocation7 + $0x14c] sm:$0xf]
        %v1381 = vld [vmem:[#allocation7 + $0x150] sm:$0xf]
        %v1382 = vld [vmem:[#allocation7 + $0x154] sm:$0xf]
        %v1383 = vld [vmem:[#allocation7 + $0x158] sm:$0xf]
        %v1384 = vld [vmem:[#allocation7 + $0x15c] sm:$0xf]
        %v1385 = vld [vmem:[#allocation7 + $0x160] sm:$0xf]
        %v1386 = vld [vmem:[#allocation7 + $0x164] sm:$0xf]
        %v1387 = vld [vmem:[#allocation7 + $0x168] sm:$0xf]
        %v1388 = vld [vmem:[#allocation7 + $0x16c] sm:$0xf]
        %v1389 = vld [vmem:[#allocation7 + $0x170] sm:$0xf]
        %v1390 = vld [vmem:[#allocation7 + $0x174] sm:$0xf]
        %v1391 = vld [vmem:[#allocation7 + $0x178] sm:$0xf]
        %v1392 = vld [vmem:[#allocation7 + $0x17c] sm:$0xf]
        %v1393 = vld [vmem:[#allocation7 + $0x180] sm:$0xf]
        %v1394 = vld [vmem:[#allocation7 + $0x184] sm:$0xf]
        %v1395 = vld [vmem:[#allocation7 + $0x188] sm:$0xf]
        %v1396 = vld [vmem:[#allocation7 + $0x18c] sm:$0xf]
        %v1397 = vld [vmem:[#allocation7 + $0x190] sm:$0xf]
        %v1398 = vld [vmem:[#allocation7 + $0x194] sm:$0xf]
        %v1399 = vld [vmem:[#allocation7 + $0x198] sm:$0xf]
        %v1400 = vld [vmem:[#allocation7 + $0x19c] sm:$0xf]
        %v1401 = vld [vmem:[#allocation7 + $0x1a0] sm:$0xf]
        %v1402 = vld [vmem:[#allocation7 + $0x1a4] sm:$0xf]
        %v1403 = vld [vmem:[#allocation7 + $0x1a8] sm:$0xf]
        %v1404 = vld [vmem:[#allocation7 + $0x1ac] sm:$0xf]
        %v1405 = vld [vmem:[#allocation7 + $0x1b0] sm:$0xf]
        %v1406 = vld [vmem:[#allocation7 + $0x1b4] sm:$0xf]
        %v1407 = vld [vmem:[#allocation7 + $0x1b8] sm:$0xf]
        %v1408 = vld [vmem:[#allocation7 + $0x1bc] sm:$0xf]
        %v1409 = vld [vmem:[#allocation7 + $0x1c0] sm:$0xf]
        %v1410 = vld [vmem:[#allocation7 + $0x1c4] sm:$0xf]
        %v1411 = vld [vmem:[#allocation7 + $0x1c8] sm:$0xf]
        %v1412 = vld [vmem:[#allocation7 + $0x1cc] sm:$0xf]
        %v1413 = vld [vmem:[#allocation7 + $0x1d0] sm:$0xf]
        %v1414 = vld [vmem:[#allocation7 + $0x1d4] sm:$0xf]
        %v1415 = vld [vmem:[#allocation7 + $0x1d8] sm:$0xf]
        %v1416 = vld [vmem:[#allocation7 + $0x1dc] sm:$0xf]
        %v1417 = vld [vmem:[#allocation7 + $0x1e0] sm:$0xf]
        %v1418 = vld [vmem:[#allocation7 + $0x1e4] sm:$0xf]
        %v1419 = vld [vmem:[#allocation7 + $0x1e8] sm:$0xf]
        %v1420 = vld [vmem:[#allocation7 + $0x1ec] sm:$0xf]
        %v1421 = vld [vmem:[#allocation7 + $0x1f0] sm:$0xf]
        %v1422 = vld [vmem:[#allocation7 + $0x1f4] sm:$0xf]
        %v1423 = vld [vmem:[#allocation7 + $0x1f8] sm:$0xf]
        %v1424 = vld [vmem:[#allocation7 + $0x1fc] sm:$0xf]
        %v1425 = vld [vmem:[#allocation7 + $0x200] sm:$0xf]
        %v1426 = vld [vmem:[#allocation7 + $0x204] sm:$0xf]
        %v1427 = vld [vmem:[#allocation7 + $0x208] sm:$0xf]
        %v1428 = vld [vmem:[#allocation7 + $0x20c] sm:$0xf]
        %v1429 = vld [vmem:[#allocation7 + $0x210] sm:$0xf]
        %v1430 = vld [vmem:[#allocation7 + $0x214] sm:$0xf]
        %v1431 = vld [vmem:[#allocation7 + $0x218] sm:$0xf]
        %v1432 = vld [vmem:[#allocation7 + $0x21c] sm:$0xf]
        %v1433 = vld [vmem:[#allocation7 + $0x220] sm:$0xf]
        %v1434 = vld [vmem:[#allocation7 + $0x224] sm:$0xf]
        %v1435 = vld [vmem:[#allocation7 + $0x228] sm:$0xf]
        %v1436 = vld [vmem:[#allocation7 + $0x22c] sm:$0xf]
        %v1437 = vld [vmem:[#allocation7 + $0x230] sm:$0xf]
        %v1438 = vld [vmem:[#allocation7 + $0x234] sm:$0xf]
        %v1439 = vld [vmem:[#allocation7 + $0x238] sm:$0xf]
        %v1440 = vld [vmem:[#allocation7 + $0x23c] sm:$0xf]
        %v1441 = vld [vmem:[%s2] sm:$0x1]
        %v1443 = vlaneseq
        %v1444 = vshrl.u32 %v1443, 7
        %v1445 = vsub.s32 0, %v1444
        %v1446 = vrot.slane %v1441, %v1445
        %v1592 = vunpack.c.l.b16 %v1297
        %v1593 = vunpack.c.l.b16 %v1298
        %v1594 = vunpack.c.l.b16 %v1299
        %v1595 = vunpack.c.l.b16 %v1300
        %v1596 = vunpack.c.l.b16 %v1301
        %v1597 = vunpack.c.l.b16 %v1302
        %v1598 = vunpack.c.l.b16 %v1303
        %v1599 = vunpack.c.l.b16 %v1304
        %v1600 = vunpack.c.l.b16 %v1305
        %v1601 = vunpack.c.l.b16 %v1306
        %v1602 = vunpack.c.l.b16 %v1307
        %v1603 = vunpack.c.l.b16 %v1308
        %v1604 = vunpack.c.l.b16 %v1309
        %v1605 = vunpack.c.l.b16 %v1310
        %v1606 = vunpack.c.l.b16 %v1311
        %v1607 = vunpack.c.l.b16 %v1312
        %v1608 = vunpack.c.l.b16 %v1313
        %v1609 = vunpack.c.l.b16 %v1314
        %v1610 = vunpack.c.l.b16 %v1315
        %v1611 = vunpack.c.l.b16 %v1316
        %v1612 = vunpack.c.l.b16 %v1317
        %v1613 = vunpack.c.l.b16 %v1318
        %v1614 = vunpack.c.l.b16 %v1319
        %v1615 = vunpack.c.l.b16 %v1320
        %v1616 = vunpack.c.l.b16 %v1321
        %v1617 = vunpack.c.l.b16 %v1322
        %v1618 = vunpack.c.l.b16 %v1323
        %v1619 = vunpack.c.l.b16 %v1324
        %v1620 = vunpack.c.l.b16 %v1325
        %v1621 = vunpack.c.l.b16 %v1326
        %v1622 = vunpack.c.l.b16 %v1327
        %v1623 = vunpack.c.l.b16 %v1328
        %v1624 = vunpack.c.l.b16 %v1329
        %v1625 = vunpack.c.l.b16 %v1330
        %v1626 = vunpack.c.l.b16 %v1331
        %v1627 = vunpack.c.l.b16 %v1332
        %v1628 = vunpack.c.l.b16 %v1333
        %v1629 = vunpack.c.l.b16 %v1334
        %v1630 = vunpack.c.l.b16 %v1335
        %v1631 = vunpack.c.l.b16 %v1336
        %v1632 = vunpack.c.l.b16 %v1337
        %v1633 = vunpack.c.l.b16 %v1338
        %v1634 = vunpack.c.l.b16 %v1339
        %v1635 = vunpack.c.l.b16 %v1340
        %v1636 = vunpack.c.l.b16 %v1341
        %v1637 = vunpack.c.l.b16 %v1342
        %v1638 = vunpack.c.l.b16 %v1343
        %v1639 = vunpack.c.l.b16 %v1344
        %v1640 = vunpack.c.l.b16 %v1345
        %v1641 = vunpack.c.l.b16 %v1346
        %v1642 = vunpack.c.l.b16 %v1347
        %v1643 = vunpack.c.l.b16 %v1348
        %v1644 = vunpack.c.l.b16 %v1349
        %v1645 = vunpack.c.l.b16 %v1350
        %v1646 = vunpack.c.l.b16 %v1351
        %v1647 = vunpack.c.l.b16 %v1352
        %v1648 = vunpack.c.l.b16 %v1353
        %v1649 = vunpack.c.l.b16 %v1354
        %v1650 = vunpack.c.l.b16 %v1355
        %v1651 = vunpack.c.l.b16 %v1356
        %v1652 = vunpack.c.l.b16 %v1357
        %v1653 = vunpack.c.l.b16 %v1358
        %v1654 = vunpack.c.l.b16 %v1359
        %v1655 = vunpack.c.l.b16 %v1360
        %v1656 = vunpack.c.l.b16 %v1361
        %v1657 = vunpack.c.l.b16 %v1362
        %v1658 = vunpack.c.l.b16 %v1363
        %v1659 = vunpack.c.l.b16 %v1364
        %v1660 = vunpack.c.l.b16 %v1365
        %v1661 = vunpack.c.l.b16 %v1366
        %v1662 = vunpack.c.l.b16 %v1367
        %v1663 = vunpack.c.l.b16 %v1368
        %v1664 = vunpack.c.l.b16 %v1369
        %v1665 = vunpack.c.l.b16 %v1370
        %v1666 = vunpack.c.l.b16 %v1371
        %v1667 = vunpack.c.l.b16 %v1372
        %v1668 = vunpack.c.l.b16 %v1373
        %v1669 = vunpack.c.l.b16 %v1374
        %v1670 = vunpack.c.l.b16 %v1375
        %v1671 = vunpack.c.l.b16 %v1376
        %v1672 = vunpack.c.l.b16 %v1377
        %v1673 = vunpack.c.l.b16 %v1378
        %v1674 = vunpack.c.l.b16 %v1379
        %v1675 = vunpack.c.l.b16 %v1380
        %v1676 = vunpack.c.l.b16 %v1381
        %v1677 = vunpack.c.l.b16 %v1382
        %v1678 = vunpack.c.l.b16 %v1383
        %v1679 = vunpack.c.l.b16 %v1384
        %v1680 = vunpack.c.l.b16 %v1385
        %v1681 = vunpack.c.l.b16 %v1386
        %v1682 = vunpack.c.l.b16 %v1387
        %v1683 = vunpack.c.l.b16 %v1388
        %v1684 = vunpack.c.l.b16 %v1389
        %v1685 = vunpack.c.l.b16 %v1390
        %v1686 = vunpack.c.l.b16 %v1391
        %v1687 = vunpack.c.l.b16 %v1392
        %v1688 = vunpack.c.l.b16 %v1393
        %v1689 = vunpack.c.l.b16 %v1394
        %v1690 = vunpack.c.l.b16 %v1395
        %v1691 = vunpack.c.l.b16 %v1396
        %v1692 = vunpack.c.l.b16 %v1397
        %v1693 = vunpack.c.l.b16 %v1398
        %v1694 = vunpack.c.l.b16 %v1399
        %v1695 = vunpack.c.l.b16 %v1400
        %v1696 = vunpack.c.l.b16 %v1401
        %v1697 = vunpack.c.l.b16 %v1402
        %v1698 = vunpack.c.l.b16 %v1403
        %v1699 = vunpack.c.l.b16 %v1404
        %v1700 = vunpack.c.l.b16 %v1405
        %v1701 = vunpack.c.l.b16 %v1406
        %v1702 = vunpack.c.l.b16 %v1407
        %v1703 = vunpack.c.l.b16 %v1408
        %v1704 = vunpack.c.l.b16 %v1409
        %v1705 = vunpack.c.l.b16 %v1410
        %v1706 = vunpack.c.l.b16 %v1411
        %v1707 = vunpack.c.l.b16 %v1412
        %v1708 = vunpack.c.l.b16 %v1413
        %v1709 = vunpack.c.l.b16 %v1414
        %v1710 = vunpack.c.l.b16 %v1415
        %v1711 = vunpack.c.l.b16 %v1416
        %v1712 = vunpack.c.l.b16 %v1417
        %v1713 = vunpack.c.l.b16 %v1418
        %v1714 = vunpack.c.l.b16 %v1419
        %v1715 = vunpack.c.l.b16 %v1420
        %v1716 = vunpack.c.l.b16 %v1421
        %v1717 = vunpack.c.l.b16 %v1422
        %v1718 = vunpack.c.l.b16 %v1423
        %v1719 = vunpack.c.l.b16 %v1424
        %v1720 = vunpack.c.l.b16 %v1425
        %v1721 = vunpack.c.l.b16 %v1426
        %v1722 = vunpack.c.l.b16 %v1427
        %v1723 = vunpack.c.l.b16 %v1428
        %v1724 = vunpack.c.l.b16 %v1429
        %v1725 = vunpack.c.l.b16 %v1430
        %v1726 = vunpack.c.l.b16 %v1431
        %v1727 = vunpack.c.l.b16 %v1432
        %v1728 = vunpack.c.l.b16 %v1433
        %v1729 = vunpack.c.l.b16 %v1434
        %v1730 = vunpack.c.l.b16 %v1435
        %v1731 = vunpack.c.l.b16 %v1436
        %v1732 = vunpack.c.l.b16 %v1437
        %v1733 = vunpack.c.l.b16 %v1438
        %v1734 = vunpack.c.l.b16 %v1439
        %v1735 = vunpack.c.l.b16 %v1440
        %v1736 = vpack.c.b16 %v1593, %v1592
        %v1737 = vpack.c.b16 %v1595, %v1594
        %v1738 = vpack.c.b16 %v1597, %v1596
        %v1739 = vpack.c.b16 %v1599, %v1598
        %v1740 = vpack.c.b16 %v1601, %v1600
        %v1741 = vpack.c.b16 %v1603, %v1602
        %v1742 = vpack.c.b16 %v1605, %v1604
        %v1743 = vpack.c.b16 %v1607, %v1606
        %v1744 = vpack.c.b16 %v1609, %v1608
        %v1745 = vpack.c.b16 %v1611, %v1610
        %v1746 = vpack.c.b16 %v1613, %v1612
        %v1747 = vpack.c.b16 %v1615, %v1614
        %v1748 = vpack.c.b16 %v1617, %v1616
        %v1749 = vpack.c.b16 %v1619, %v1618
        %v1750 = vpack.c.b16 %v1621, %v1620
        %v1751 = vpack.c.b16 %v1623, %v1622
        %v1752 = vpack.c.b16 %v1625, %v1624
        %v1753 = vpack.c.b16 %v1627, %v1626
        %v1754 = vpack.c.b16 %v1629, %v1628
        %v1755 = vpack.c.b16 %v1631, %v1630
        %v1756 = vpack.c.b16 %v1633, %v1632
        %v1757 = vpack.c.b16 %v1635, %v1634
        %v1758 = vpack.c.b16 %v1637, %v1636
        %v1759 = vpack.c.b16 %v1639, %v1638
        %v1760 = vpack.c.b16 %v1641, %v1640
        %v1761 = vpack.c.b16 %v1643, %v1642
        %v1762 = vpack.c.b16 %v1645, %v1644
        %v1763 = vpack.c.b16 %v1647, %v1646
        %v1764 = vpack.c.b16 %v1649, %v1648
        %v1765 = vpack.c.b16 %v1651, %v1650
        %v1766 = vpack.c.b16 %v1653, %v1652
        %v1767 = vpack.c.b16 %v1655, %v1654
        %v1768 = vpack.c.b16 %v1657, %v1656
        %v1769 = vpack.c.b16 %v1659, %v1658
        %v1770 = vpack.c.b16 %v1661, %v1660
        %v1771 = vpack.c.b16 %v1663, %v1662
        %v1772 = vpack.c.b16 %v1665, %v1664
        %v1773 = vpack.c.b16 %v1667, %v1666
        %v1774 = vpack.c.b16 %v1669, %v1668
        %v1775 = vpack.c.b16 %v1671, %v1670
        %v1776 = vpack.c.b16 %v1673, %v1672
        %v1777 = vpack.c.b16 %v1675, %v1674
        %v1778 = vpack.c.b16 %v1677, %v1676
        %v1779 = vpack.c.b16 %v1679, %v1678
        %v1780 = vpack.c.b16 %v1681, %v1680
        %v1781 = vpack.c.b16 %v1683, %v1682
        %v1782 = vpack.c.b16 %v1685, %v1684
        %v1783 = vpack.c.b16 %v1687, %v1686
        %v1784 = vpack.c.b16 %v1689, %v1688
        %v1785 = vpack.c.b16 %v1691, %v1690
        %v1786 = vpack.c.b16 %v1693, %v1692
        %v1787 = vpack.c.b16 %v1695, %v1694
        %v1788 = vpack.c.b16 %v1697, %v1696
        %v1789 = vpack.c.b16 %v1699, %v1698
        %v1790 = vpack.c.b16 %v1701, %v1700
        %v1791 = vpack.c.b16 %v1703, %v1702
        %v1792 = vpack.c.b16 %v1705, %v1704
        %v1793 = vpack.c.b16 %v1707, %v1706
        %v1794 = vpack.c.b16 %v1709, %v1708
        %v1795 = vpack.c.b16 %v1711, %v1710
        %v1796 = vpack.c.b16 %v1713, %v1712
        %v1797 = vpack.c.b16 %v1715, %v1714
        %v1798 = vpack.c.b16 %v1717, %v1716
        %v1799 = vpack.c.b16 %v1719, %v1718
        %v1800 = vpack.c.b16 %v1721, %v1720
        %v1801 = vpack.c.b16 %v1723, %v1722
        %v1802 = vpack.c.b16 %v1725, %v1724
        %v1803 = vpack.c.b16 %v1727, %v1726
        %v1804 = vpack.c.b16 %v1729, %v1728
        %v1805 = vpack.c.b16 %v1731, %v1730
        %v1806 = vpack.c.b16 %v1733, %v1732
        %v1807 = vpack.c.b16 %v1735, %v1734
        %1880 = vmatprep.subr.bf16.mxu0 0
        %1881 = vmatpush1.bf16.msra.mxu0 %v1736
        %1882 = vmatprep.subr.bf16.mxu0 0
        %1883 = vmatpush1.bf16.msra.mxu0 %v1737
        %1884 = vmatprep.subr.bf16.mxu0 0
        %1885 = vmatpush1.bf16.msra.mxu0 %v1738
        %1886 = vmatprep.subr.bf16.mxu0 0
        %1887 = vmatpush1.bf16.msra.mxu0 %v1739
        %1888 = vmatprep.subr.bf16.mxu0 0
        %1889 = vmatpush1.bf16.msra.mxu0 %v1740
        %1890 = vmatprep.subr.bf16.mxu0 0
        %1891 = vmatpush1.bf16.msra.mxu0 %v1741
        %1892 = vmatprep.subr.bf16.mxu0 0
        %1893 = vmatpush1.bf16.msra.mxu0 %v1742
        %1894 = vmatprep.subr.bf16.mxu0 0
        %1895 = vmatpush1.bf16.msra.mxu0 %v1743
        %1896 = vmatprep.subr.bf16.mxu0 0
        %1897 = vmatpush1.bf16.msra.mxu0 %v1744
        %1898 = vmatprep.subr.bf16.mxu0 0
        %1899 = vmatpush1.bf16.msra.mxu0 %v1745
        %1900 = vmatprep.subr.bf16.mxu0 0
        %1901 = vmatpush1.bf16.msra.mxu0 %v1746
        %1902 = vmatprep.subr.bf16.mxu0 0
        %1903 = vmatpush1.bf16.msra.mxu0 %v1747
        %1904 = vmatprep.subr.bf16.mxu0 0
        %1905 = vmatpush1.bf16.msra.mxu0 %v1748
        %1906 = vmatprep.subr.bf16.mxu0 0
        %1907 = vmatpush1.bf16.msra.mxu0 %v1749
        %1908 = vmatprep.subr.bf16.mxu0 0
        %1909 = vmatpush1.bf16.msra.mxu0 %v1750
        %1910 = vmatprep.subr.bf16.mxu0 0
        %1911 = vmatpush1.bf16.msra.mxu0 %v1751
        %1912 = vmatprep.mubr.bf16.mxu0 %v1209
        %1913 = vmatmul.mubr.bf16.gmra.mrb[0].mxu0 %v1149
        %v1914 = vpop.f32.mrb[0].mxu0
        %v1915 = vadd.f32 %v1446, %v1914
        %v1916 = vpop.f32.mrb[0].mxu0
        %v1917 = vpop.f32.mrb[0].mxu0
        %v1918 = vadd.f32 %v1446, %v1917
        %v1919 = vpop.f32.mrb[0].mxu0
        %1920 = vmatprep.mubr.bf16.mxu0 %v1210
        %1921 = vmatmul.mubr.bf16.gmra.mrb[0].mxu0 %v1150
        %v1922 = vpop.f32.mrb[0].mxu0
        %v1923 = vadd.f32 %v1446, %v1922
        %v1924 = vpop.f32.mrb[0].mxu0
        %v1925 = vpop.f32.mrb[0].mxu0
        %v1926 = vadd.f32 %v1446, %v1925
        %v1927 = vpop.f32.mrb[0].mxu0
        %1928 = vmatprep.mubr.bf16.mxu0 %v1211
        %1929 = vmatmul.mubr.bf16.gmra.mrb[0].mxu0 %v1151
        %v1930 = vpop.f32.mrb[0].mxu0
        %v1931 = vadd.f32 %v1446, %v1930
        %v1932 = vpop.f32.mrb[0].mxu0
        %v1933 = vpop.f32.mrb[0].mxu0
        %v1934 = vadd.f32 %v1446, %v1933
        %v1935 = vpop.f32.mrb[0].mxu0
        %1936 = vmatprep.mubr.bf16.mxu0 %v1212
        %1937 = vmatmul.mubr.bf16.gmra.mrb[0].mxu0 %v1152
        %v1938 = vpop.f32.mrb[0].mxu0
        %v1939 = vadd.f32 %v1446, %v1938
        %v1940 = vpop.f32.mrb[0].mxu0
        %v1941 = vpop.f32.mrb[0].mxu0
        %v1942 = vadd.f32 %v1446, %v1941
        %v1943 = vpop.f32.mrb[0].mxu0
        %1944 = vmatprep.mubr.bf16.mxu0 %v1213
        %1945 = vmatmul.mubr.bf16.gmra.mrb[0].mxu0 %v1153
        %v1946 = vpop.f32.mrb[0].mxu0
        %v1947 = vadd.f32 %v1446, %v1946
        %v1948 = vpop.f32.mrb[0].mxu0
        %v1949 = vpop.f32.mrb[0].mxu0
        %v1950 = vadd.f32 %v1446, %v1949
        %v1951 = vpop.f32.mrb[0].mxu0
        %1952 = vmatprep.mubr.bf16.mxu0 %v1214
        %1953 = vmatmul.mubr.bf16.gmra.mrb[0].mxu0 %v1154
        %v1954 = vpop.f32.mrb[0].mxu0
        %v1955 = vadd.f32 %v1446, %v1954
        %v1956 = vpop.f32.mrb[0].mxu0
        %v1957 = vpop.f32.mrb[0].mxu0
        %v1958 = vadd.f32 %v1446, %v1957
        %v1959 = vpop.f32.mrb[0].mxu0
        %1960 = vmatprep.mubr.bf16.mxu0 %v1215
        %1961 = vmatmul.mubr.bf16.gmra.mrb[0].mxu0 %v1155
        %v1962 = vpop.f32.mrb[0].mxu0
        %v1963 = vadd.f32 %v1446, %v1962
        %v1964 = vpop.f32.mrb[0].mxu0
        %v1965 = vpop.f32.mrb[0].mxu0
        %v1966 = vadd.f32 %v1446, %v1965
        %v1967 = vpop.f32.mrb[0].mxu0
        %1968 = vmatprep.mubr.bf16.mxu0 %v1216
        %1969 = vmatmul.mubr.bf16.gmra.mrb[0].mxu0 %v1156
        %v1970 = vpop.f32.mrb[0].mxu0
        %v1971 = vadd.f32 %v1446, %v1970
        %v1972 = vpop.f32.mrb[0].mxu0
        %v1973 = vpop.f32.mrb[0].mxu0
        %v1974 = vadd.f32 %v1446, %v1973
        %v1975 = vpop.f32.mrb[0].mxu0
        %1976 = vmatprep.mubr.bf16.mxu0 %v1217
        %1977 = vmatmul.mubr.bf16.gmra.mrb[0].mxu0 %v1157
        %v1978 = vpop.f32.mrb[0].mxu0
        %v1979 = vadd.f32 %v1446, %v1978
        %v1980 = vpop.f32.mrb[0].mxu0
        %v1981 = vpop.f32.mrb[0].mxu0
        %v1982 = vadd.f32 %v1446, %v1981
        %v1983 = vpop.f32.mrb[0].mxu0
        %1984 = vmatprep.mubr.bf16.mxu0 %v1218
        %1985 = vmatmul.mubr.bf16.gmra.mrb[0].mxu0 %v1158
        %v1986 = vpop.f32.mrb[0].mxu0
        %v1987 = vadd.f32 %v1446, %v1986
        %v1988 = vpop.f32.mrb[0].mxu0
        %v1989 = vpop.f32.mrb[0].mxu0
        %v1990 = vadd.f32 %v1446, %v1989
        %v1991 = vpop.f32.mrb[0].mxu0
        %1992 = vdwg.mxu0
        %1993 = vmatprep.subr.bf16.mxu0 0
        %1994 = vmatpush1.bf16.msra.mxu0 %v1752
        %1995 = vmatprep.subr.bf16.mxu0 0
        %1996 = vmatpush1.bf16.msra.mxu0 %v1753
        %1997 = vmatprep.subr.bf16.mxu0 0
        %1998 = vmatpush1.bf16.msra.mxu0 %v1754
        %1999 = vmatprep.subr.bf16.mxu0 0
        %2000 = vmatpush1.bf16.msra.mxu0 %v1755
        %2001 = vmatprep.subr.bf16.mxu0 0
        %2002 = vmatpush1.bf16.msra.mxu0 %v1756
        %2003 = vmatprep.subr.bf16.mxu0 0
        %2004 = vmatpush1.bf16.msra.mxu0 %v1757
        %2005 = vmatprep.subr.bf16.mxu0 0
        %2006 = vmatpush1.bf16.msra.mxu0 %v1758
        %2007 = vmatprep.subr.bf16.mxu0 0
        %2008 = vmatpush1.bf16.msra.mxu0 %v1759
        %2009 = vmatprep.subr.bf16.mxu0 0
        %2010 = vmatpush1.bf16.msra.mxu0 %v1760
        %2011 = vmatprep.subr.bf16.mxu0 0
        %2012 = vmatpush1.bf16.msra.mxu0 %v1761
        %2013 = vmatprep.subr.bf16.mxu0 0
        %2014 = vmatpush1.bf16.msra.mxu0 %v1762
        %2015 = vmatprep.subr.bf16.mxu0 0
        %2016 = vmatpush1.bf16.msra.mxu0 %v1763
        %2017 = vmatprep.subr.bf16.mxu0 0
        %2018 = vmatpush1.bf16.msra.mxu0 %v1764
        %2019 = vmatprep.subr.bf16.mxu0 0
        %2020 = vmatpush1.bf16.msra.mxu0 %v1765
        %2021 = vmatprep.subr.bf16.mxu0 0
        %2022 = vmatpush1.bf16.msra.mxu0 %v1766
        %2023 = vmatprep.subr.bf16.mxu0 0
        %2024 = vmatpush1.bf16.msra.mxu0 %v1767
        %2025 = vmatprep.mubr.bf16.mxu0 %v1150
        %2026 = vmatmul.mubr.bf16.gmra.mrb[0].mxu0 %v1249
        %v2027 = vpop.f32.mrb[0].mxu0
        %v2028 = vadd.f32 %v1915, %v2027
        %v2029 = vpop.f32.mrb[0].mxu0
        %v2030 = vpop.f32.mrb[0].mxu0
        %v2031 = vadd.f32 %v1918, %v2030
        %v2032 = vpop.f32.mrb[0].mxu0
        %2033 = vmatprep.mubr.bf16.mxu0 %v1151
        %2034 = vmatmul.mubr.bf16.gmra.mrb[0].mxu0 %v1250
        %v2035 = vpop.f32.mrb[0].mxu0
        %v2036 = vadd.f32 %v1923, %v2035
        %v2037 = vpop.f32.mrb[0].mxu0
        %v2038 = vpop.f32.mrb[0].mxu0
        %v2039 = vadd.f32 %v1926, %v2038
        %v2040 = vpop.f32.mrb[0].mxu0
        %2041 = vmatprep.mubr.bf16.mxu0 %v1152
        %2042 = vmatmul.mubr.bf16.gmra.mrb[0].mxu0 %v1251
        %v2043 = vpop.f32.mrb[0].mxu0
        %v2044 = vadd.f32 %v1931, %v2043
        %v2045 = vpop.f32.mrb[0].mxu0
        %v2046 = vpop.f32.mrb[0].mxu0
        %v2047 = vadd.f32 %v1934, %v2046
        %v2048 = vpop.f32.mrb[0].mxu0
        %2049 = vmatprep.mubr.bf16.mxu0 %v1153
        %2050 = vmatmul.mubr.bf16.gmra.mrb[0].mxu0 %v1252
        %v2051 = vpop.f32.mrb[0].mxu0
        %v2052 = vadd.f32 %v1939, %v2051
        %v2053 = vpop.f32.mrb[0].mxu0
        %v2054 = vpop.f32.mrb[0].mxu0
        %v2055 = vadd.f32 %v1942, %v2054
        %v2056 = vpop.f32.mrb[0].mxu0
        %2057 = vmatprep.mubr.bf16.mxu0 %v1154
        %2058 = vmatmul.mubr.bf16.gmra.mrb[0].mxu0 %v1253
        %v2059 = vpop.f32.mrb[0].mxu0
        %v2060 = vadd.f32 %v1947, %v2059
        %v2061 = vpop.f32.mrb[0].mxu0
        %v2062 = vpop.f32.mrb[0].mxu0
        %v2063 = vadd.f32 %v1950, %v2062
        %v2064 = vpop.f32.mrb[0].mxu0
        %2065 = vmatprep.mubr.bf16.mxu0 %v1155
        %2066 = vmatmul.mubr.bf16.gmra.mrb[0].mxu0 %v1254
        %v2067 = vpop.f32.mrb[0].mxu0
        %v2068 = vadd.f32 %v1955, %v2067
        %v2069 = vpop.f32.mrb[0].mxu0
        %v2070 = vpop.f32.mrb[0].mxu0
        %v2071 = vadd.f32 %v1958, %v2070
        %v2072 = vpop.f32.mrb[0].mxu0
        %2073 = vmatprep.mubr.bf16.mxu0 %v1156
        %2074 = vmatmul.mubr.bf16.gmra.mrb[0].mxu0 %v1255
        %v2075 = vpop.f32.mrb[0].mxu0
        %v2076 = vadd.f32 %v1963, %v2075
        %v2077 = vpop.f32.mrb[0].mxu0
        %v2078 = vpop.f32.mrb[0].mxu0
        %v2079 = vadd.f32 %v1966, %v2078
        %v2080 = vpop.f32.mrb[0].mxu0
        %2081 = vmatprep.mubr.bf16.mxu0 %v1157
        %2082 = vmatmul.mubr.bf16.gmra.mrb[0].mxu0 %v1256
        %v2083 = vpop.f32.mrb[0].mxu0
        %v2084 = vadd.f32 %v1971, %v2083
        %v2085 = vpop.f32.mrb[0].mxu0
        %v2086 = vpop.f32.mrb[0].mxu0
        %v2087 = vadd.f32 %v1974, %v2086
        %v2088 = vpop.f32.mrb[0].mxu0
        %2089 = vmatprep.mubr.bf16.mxu0 %v1158
        %2090 = vmatmul.mubr.bf16.gmra.mrb[0].mxu0 %v1257
        %v2091 = vpop.f32.mrb[0].mxu0
        %v2092 = vadd.f32 %v1979, %v2091
        %v2093 = vpop.f32.mrb[0].mxu0
        %v2094 = vpop.f32.mrb[0].mxu0
        %v2095 = vadd.f32 %v1982, %v2094
        %v2096 = vpop.f32.mrb[0].mxu0
        %2097 = vmatprep.mubr.bf16.mxu0 %v1271
        %2098 = vmatmul.mubr.bf16.gmra.mrb[0].mxu0 %v1258
        %v2099 = vpop.f32.mrb[0].mxu0
        %v2100 = vadd.f32 %v1987, %v2099
        %v2101 = vpop.f32.mrb[0].mxu0
        %v2102 = vpop.f32.mrb[0].mxu0
        %v2103 = vadd.f32 %v1990, %v2102
        %v2104 = vpop.f32.mrb[0].mxu0
        %2105 = vdwg.mxu0
        %2106 = vmatprep.subr.bf16.mxu0 0
        %2107 = vmatpush1.bf16.msra.mxu0 %v1768
        %2108 = vmatprep.subr.bf16.mxu0 0
        %2109 = vmatpush1.bf16.msra.mxu0 %v1769
        %2110 = vmatprep.subr.bf16.mxu0 0
        %2111 = vmatpush1.bf16.msra.mxu0 %v1770
        %2112 = vmatprep.subr.bf16.mxu0 0
        %2113 = vmatpush1.bf16.msra.mxu0 %v1771
        %2114 = vmatprep.subr.bf16.mxu0 0
        %2115 = vmatpush1.bf16.msra.mxu0 %v1772
        %2116 = vmatprep.subr.bf16.mxu0 0
        %2117 = vmatpush1.bf16.msra.mxu0 %v1773
        %2118 = vmatprep.subr.bf16.mxu0 0
        %2119 = vmatpush1.bf16.msra.mxu0 %v1774
        %2120 = vmatprep.subr.bf16.mxu0 0
        %2121 = vmatpush1.bf16.msra.mxu0 %v1775
        %2122 = vmatprep.subr.bf16.mxu0 0
        %2123 = vmatpush1.bf16.msra.mxu0 %v1776
        %2124 = vmatprep.subr.bf16.mxu0 0
        %2125 = vmatpush1.bf16.msra.mxu0 %v1777
        %2126 = vmatprep.subr.bf16.mxu0 0
        %2127 = vmatpush1.bf16.msra.mxu0 %v1778
        %2128 = vmatprep.subr.bf16.mxu0 0
        %2129 = vmatpush1.bf16.msra.mxu0 %v1779
        %2130 = vmatprep.subr.bf16.mxu0 0
        %2131 = vmatpush1.bf16.msra.mxu0 %v1780
        %2132 = vmatprep.subr.bf16.mxu0 0
        %2133 = vmatpush1.bf16.msra.mxu0 %v1781
        %2134 = vmatprep.subr.bf16.mxu0 0
        %2135 = vmatpush1.bf16.msra.mxu0 %v1782
        %2136 = vmatprep.subr.bf16.mxu0 0
        %2137 = vmatpush1.bf16.msra.mxu0 %v1783
        %2138 = vmatprep.mubr.bf16.mxu0 %v1250
        %2139 = vmatmul.mubr.bf16.gmra.mrb[0].mxu0 %v1210
        %v2140 = vpop.f32.mrb[0].mxu0
        %v2141 = vadd.f32 %v2028, %v2140
        %v2142 = vpop.f32.mrb[0].mxu0
        %v2143 = vpop.f32.mrb[0].mxu0
        %v2144 = vadd.f32 %v2031, %v2143
        %v2145 = vpop.f32.mrb[0].mxu0
        %2146 = vmatprep.mubr.bf16.mxu0 %v1251
        %2147 = vmatmul.mubr.bf16.gmra.mrb[0].mxu0 %v1211
        %v2148 = vpop.f32.mrb[0].mxu0
        %v2149 = vadd.f32 %v2036, %v2148
        %v2150 = vpop.f32.mrb[0].mxu0
        %v2151 = vpop.f32.mrb[0].mxu0
        %v2152 = vadd.f32 %v2039, %v2151
        %v2153 = vpop.f32.mrb[0].mxu0
        %2154 = vmatprep.mubr.bf16.mxu0 %v1252
        %2155 = vmatmul.mubr.bf16.gmra.mrb[0].mxu0 %v1212
        %v2156 = vpop.f32.mrb[0].mxu0
        %v2157 = vadd.f32 %v2044, %v2156
        %v2158 = vpop.f32.mrb[0].mxu0
        %v2159 = vpop.f32.mrb[0].mxu0
        %v2160 = vadd.f32 %v2047, %v2159
        %v2161 = vpop.f32.mrb[0].mxu0
        %2162 = vmatprep.mubr.bf16.mxu0 %v1253
        %2163 = vmatmul.mubr.bf16.gmra.mrb[0].mxu0 %v1213
        %v2164 = vpop.f32.mrb[0].mxu0
        %v2165 = vadd.f32 %v2052, %v2164
        %v2166 = vpop.f32.mrb[0].mxu0
        %v2167 = vpop.f32.mrb[0].mxu0
        %v2168 = vadd.f32 %v2055, %v2167
        %v2169 = vpop.f32.mrb[0].mxu0
        %2170 = vmatprep.mubr.bf16.mxu0 %v1254
        %2171 = vmatmul.mubr.bf16.gmra.mrb[0].mxu0 %v1214
        %v2172 = vpop.f32.mrb[0].mxu0
        %v2173 = vadd.f32 %v2060, %v2172
        %v2174 = vpop.f32.mrb[0].mxu0
        %v2175 = vpop.f32.mrb[0].mxu0
        %v2176 = vadd.f32 %v2063, %v2175
        %v2177 = vpop.f32.mrb[0].mxu0
        %2178 = vmatprep.mubr.bf16.mxu0 %v1255
        %2179 = vmatmul.mubr.bf16.gmra.mrb[0].mxu0 %v1215
        %v2180 = vpop.f32.mrb[0].mxu0
        %v2181 = vadd.f32 %v2068, %v2180
        %v2182 = vpop.f32.mrb[0].mxu0
        %v2183 = vpop.f32.mrb[0].mxu0
        %v2184 = vadd.f32 %v2071, %v2183
        %v2185 = vpop.f32.mrb[0].mxu0
        %2186 = vmatprep.mubr.bf16.mxu0 %v1256
        %2187 = vmatmul.mubr.bf16.gmra.mrb[0].mxu0 %v1216
        %v2188 = vpop.f32.mrb[0].mxu0
        %v2189 = vadd.f32 %v2076, %v2188
        %v2190 = vpop.f32.mrb[0].mxu0
        %v2191 = vpop.f32.mrb[0].mxu0
        %v2192 = vadd.f32 %v2079, %v2191
        %v2193 = vpop.f32.mrb[0].mxu0
        %2194 = vmatprep.mubr.bf16.mxu0 %v1257
        %2195 = vmatmul.mubr.bf16.gmra.mrb[0].mxu0 %v1217
        %v2196 = vpop.f32.mrb[0].mxu0
        %v2197 = vadd.f32 %v2084, %v2196
        %v2198 = vpop.f32.mrb[0].mxu0
        %v2199 = vpop.f32.mrb[0].mxu0
        %v2200 = vadd.f32 %v2087, %v2199
        %v2201 = vpop.f32.mrb[0].mxu0
        %2202 = vmatprep.mubr.bf16.mxu0 %v1258
        %2203 = vmatmul.mubr.bf16.gmra.mrb[0].mxu0 %v1218
        %v2204 = vpop.f32.mrb[0].mxu0
        %v2205 = vadd.f32 %v2092, %v2204
        %v2206 = vpop.f32.mrb[0].mxu0
        %v2207 = vpop.f32.mrb[0].mxu0
        %v2208 = vadd.f32 %v2095, %v2207
        %v2209 = vpop.f32.mrb[0].mxu0
        %2210 = vmatprep.mubr.bf16.mxu0 %v1281
        %2211 = vmatmul.mubr.bf16.gmra.mrb[0].mxu0 %v1277
        %v2212 = vpop.f32.mrb[0].mxu0
        %v2213 = vadd.f32 %v2100, %v2212
        %v2214 = vpop.f32.mrb[0].mxu0
        %v2215 = vpop.f32.mrb[0].mxu0
        %v2216 = vadd.f32 %v2103, %v2215
        %v2217 = vpop.f32.mrb[0].mxu0
        %2218 = vdwg.mxu0
        %2219 = vmatprep.subr.bf16.mxu0 0
        %2220 = vmatpush1.bf16.msra.mxu0 %v1784
        %2221 = vmatprep.subr.bf16.mxu0 0
        %2222 = vmatpush1.bf16.msra.mxu0 %v1785
        %2223 = vmatprep.subr.bf16.mxu0 0
        %2224 = vmatpush1.bf16.msra.mxu0 %v1786
        %2225 = vmatprep.subr.bf16.mxu0 0
        %2226 = vmatpush1.bf16.msra.mxu0 %v1787
        %2227 = vmatprep.subr.bf16.mxu0 0
        %2228 = vmatpush1.bf16.msra.mxu0 %v1788
        %2229 = vmatprep.subr.bf16.mxu0 0
        %2230 = vmatpush1.bf16.msra.mxu0 %v1789
        %2231 = vmatprep.subr.bf16.mxu0 0
        %2232 = vmatpush1.bf16.msra.mxu0 %v1790
        %2233 = vmatprep.subr.bf16.mxu0 0
        %2234 = vmatpush1.bf16.msra.mxu0 %v1791
        %2235 = vmatprep.subr.bf16.mxu0 0
        %2236 = vmatpush1.bf16.msra.mxu0 %v1792
        %2237 = vmatprep.subr.bf16.mxu0 0
        %2238 = vmatpush1.bf16.msra.mxu0 %v1793
        %2239 = vmatprep.subr.bf16.mxu0 0
        %2240 = vmatpush1.bf16.msra.mxu0 %v1794
        %2241 = vmatprep.subr.bf16.mxu0 0
        %2242 = vmatpush1.bf16.msra.mxu0 %v1795
        %2243 = vmatprep.subr.bf16.mxu0 0
        %2244 = vmatpush1.bf16.msra.mxu0 %v1796
        %2245 = vmatprep.subr.bf16.mxu0 0
        %2246 = vmatpush1.bf16.msra.mxu0 %v1797
        %2247 = vmatprep.subr.bf16.mxu0 0
        %2248 = vmatpush1.bf16.msra.mxu0 %v1798
        %2249 = vmatprep.subr.bf16.mxu0 0
        %2250 = vmatpush1.bf16.msra.mxu0 %v1799
        %2251 = vmatprep.mubr.bf16.mxu0 %v1211
        %2252 = vmatmul.mubr.bf16.gmra.mrb[0].mxu0 %v1151
        %v2253 = vpop.f32.mrb[0].mxu0
        %v2254 = vadd.f32 %v2141, %v2253
        %v2255 = vpop.f32.mrb[0].mxu0
        %v2256 = vpop.f32.mrb[0].mxu0
        %v2257 = vadd.f32 %v2144, %v2256
        %v2258 = vpop.f32.mrb[0].mxu0
        %2259 = vmatprep.mubr.bf16.mxu0 %v1212
        %2260 = vmatmul.mubr.bf16.gmra.mrb[0].mxu0 %v1152
        %v2261 = vpop.f32.mrb[0].mxu0
        %v2262 = vadd.f32 %v2149, %v2261
        %v2263 = vpop.f32.mrb[0].mxu0
        %v2264 = vpop.f32.mrb[0].mxu0
        %v2265 = vadd.f32 %v2152, %v2264
        %v2266 = vpop.f32.mrb[0].mxu0
        %2267 = vmatprep.mubr.bf16.mxu0 %v1213
        %2268 = vmatmul.mubr.bf16.gmra.mrb[0].mxu0 %v1153
        %v2269 = vpop.f32.mrb[0].mxu0
        %v2270 = vadd.f32 %v2157, %v2269
        %v2271 = vpop.f32.mrb[0].mxu0
        %v2272 = vpop.f32.mrb[0].mxu0
        %v2273 = vadd.f32 %v2160, %v2272
        %v2274 = vpop.f32.mrb[0].mxu0
        %2275 = vmatprep.mubr.bf16.mxu0 %v1214
        %2276 = vmatmul.mubr.bf16.gmra.mrb[0].mxu0 %v1154
        %v2277 = vpop.f32.mrb[0].mxu0
        %v2278 = vadd.f32 %v2165, %v2277
        %v2279 = vpop.f32.mrb[0].mxu0
        %v2280 = vpop.f32.mrb[0].mxu0
        %v2281 = vadd.f32 %v2168, %v2280
        %v2282 = vpop.f32.mrb[0].mxu0
        %2283 = vmatprep.mubr.bf16.mxu0 %v1215
        %2284 = vmatmul.mubr.bf16.gmra.mrb[0].mxu0 %v1155
        %v2285 = vpop.f32.mrb[0].mxu0
        %v2286 = vadd.f32 %v2173, %v2285
        %v2287 = vpop.f32.mrb[0].mxu0
        %v2288 = vpop.f32.mrb[0].mxu0
        %v2289 = vadd.f32 %v2176, %v2288
        %v2290 = vpop.f32.mrb[0].mxu0
        %2291 = vmatprep.mubr.bf16.mxu0 %v1216
        %2292 = vmatmul.mubr.bf16.gmra.mrb[0].mxu0 %v1156
        %v2293 = vpop.f32.mrb[0].mxu0
        %v2294 = vadd.f32 %v2181, %v2293
        %v2295 = vpop.f32.mrb[0].mxu0
        %v2296 = vpop.f32.mrb[0].mxu0
        %v2297 = vadd.f32 %v2184, %v2296
        %v2298 = vpop.f32.mrb[0].mxu0
        %2299 = vmatprep.mubr.bf16.mxu0 %v1217
        %2300 = vmatmul.mubr.bf16.gmra.mrb[0].mxu0 %v1157
        %v2301 = vpop.f32.mrb[0].mxu0
        %v2302 = vadd.f32 %v2189, %v2301
        %v2303 = vpop.f32.mrb[0].mxu0
        %v2304 = vpop.f32.mrb[0].mxu0
        %v2305 = vadd.f32 %v2192, %v2304
        %v2306 = vpop.f32.mrb[0].mxu0
        %2307 = vmatprep.mubr.bf16.mxu0 %v1218
        %2308 = vmatmul.mubr.bf16.gmra.mrb[0].mxu0 %v1158
        %v2309 = vpop.f32.mrb[0].mxu0
        %v2310 = vadd.f32 %v2197, %v2309
        %v2311 = vpop.f32.mrb[0].mxu0
        %v2312 = vpop.f32.mrb[0].mxu0
        %v2313 = vadd.f32 %v2200, %v2312
        %v2314 = vpop.f32.mrb[0].mxu0
        %2315 = vmatprep.mubr.bf16.mxu0 %v1277
        %2316 = vmatmul.mubr.bf16.gmra.mrb[0].mxu0 %v1271
        %v2317 = vpop.f32.mrb[0].mxu0
        %v2318 = vadd.f32 %v2205, %v2317
        %v2319 = vpop.f32.mrb[0].mxu0
        %v2320 = vpop.f32.mrb[0].mxu0
        %v2321 = vadd.f32 %v2208, %v2320
        %v2322 = vpop.f32.mrb[0].mxu0
        %2323 = vmatprep.mubr.bf16.mxu0 %v1291
        %2324 = vmatmul.mubr.bf16.gmra.mrb[0].mxu0 %v1285
        %v2325 = vpop.f32.mrb[0].mxu0
        %v2326 = vadd.f32 %v2213, %v2325
        %v2327 = vpop.f32.mrb[0].mxu0
        %v2328 = vpop.f32.mrb[0].mxu0
        %v2329 = vadd.f32 %v2216, %v2328
        %v2330 = vpop.f32.mrb[0].mxu0
        %2331 = vdwg.mxu0
        %2332 = vmatprep.subr.bf16.mxu0 0
        %2333 = vmatpush1.bf16.msra.mxu0 %v1800
        %2334 = vmatprep.subr.bf16.mxu0 0
        %2335 = vmatpush1.bf16.msra.mxu0 %v1801
        %2336 = vmatprep.subr.bf16.mxu0 0
        %2337 = vmatpush1.bf16.msra.mxu0 %v1802
        %2338 = vmatprep.subr.bf16.mxu0 0
        %2339 = vmatpush1.bf16.msra.mxu0 %v1803
        %2340 = vmatprep.subr.bf16.mxu0 0
        %2341 = vmatpush1.bf16.msra.mxu0 %v1804
        %2342 = vmatprep.subr.bf16.mxu0 0
        %2343 = vmatpush1.bf16.msra.mxu0 %v1805
        %2344 = vmatprep.subr.bf16.mxu0 0
        %2345 = vmatpush1.bf16.msra.mxu0 %v1806
        %2346 = vmatprep.subr.bf16.mxu0 0
        %2347 = vmatpush1.bf16.msra.mxu0 %v1807
        %2348 = vmatprep.subr.bf16.mxu0 0
        %2349 = vmatpush1.bf16.msra.mxu0 0
        %2350 = vmatprep.subr.bf16.mxu0 0
        %2351 = vmatpush1.bf16.msra.mxu0 0
        %2352 = vmatprep.subr.bf16.mxu0 0
        %2353 = vmatpush1.bf16.msra.mxu0 0
        %2354 = vmatprep.subr.bf16.mxu0 0
        %2355 = vmatpush1.bf16.msra.mxu0 0
        %2356 = vmatprep.subr.bf16.mxu0 0
        %2357 = vmatpush1.bf16.msra.mxu0 0
        %2358 = vmatprep.subr.bf16.mxu0 0
        %2359 = vmatpush1.bf16.msra.mxu0 0
        %2360 = vmatprep.subr.bf16.mxu0 0
        %2361 = vmatpush1.bf16.msra.mxu0 0
        %2362 = vmatprep.subr.bf16.mxu0 0
        %2363 = vmatpush1.bf16.msra.mxu0 0
        %2364 = vmatprep.mubr.bf16.mxu0 0
        %2365 = vmatmul.mubr.bf16.gmra.mrb[0].mxu0 %v1251
        %v2366 = vpop.f32.mrb[0].mxu0
        %v2367 = vadd.f32 %v2254, %v2366
        %v2368 = vpop.f32.mrb[0].mxu0
        %v2369 = vpop.f32.mrb[0].mxu0
        %v2370 = vadd.f32 %v2257, %v2369
        %v2371 = vpop.f32.mrb[0].mxu0
        %2372 = vmatprep.mubr.bf16.mxu0 0
        %2373 = vmatmul.mubr.bf16.gmra.mrb[0].mxu0 %v1252
        %v2374 = vpop.f32.mrb[0].mxu0
        %v2375 = vadd.f32 %v2262, %v2374
        %v2376 = vpop.f32.mrb[0].mxu0
        %v2377 = vpop.f32.mrb[0].mxu0
        %v2378 = vadd.f32 %v2265, %v2377
        %v2379 = vpop.f32.mrb[0].mxu0
        %2380 = vmatprep.mubr.bf16.mxu0 0
        %2381 = vmatmul.mubr.bf16.gmra.mrb[0].mxu0 %v1253
        %v2382 = vpop.f32.mrb[0].mxu0
        %v2383 = vadd.f32 %v2270, %v2382
        %v2384 = vpop.f32.mrb[0].mxu0
        %v2385 = vpop.f32.mrb[0].mxu0
        %v2386 = vadd.f32 %v2273, %v2385
        %v2387 = vpop.f32.mrb[0].mxu0
        %2388 = vmatprep.mubr.bf16.mxu0 0
        %2389 = vmatmul.mubr.bf16.gmra.mrb[0].mxu0 %v1254
        %v2390 = vpop.f32.mrb[0].mxu0
        %v2391 = vadd.f32 %v2278, %v2390
        %v2392 = vpop.f32.mrb[0].mxu0
        %v2393 = vpop.f32.mrb[0].mxu0
        %v2394 = vadd.f32 %v2281, %v2393
        %v2395 = vpop.f32.mrb[0].mxu0
        %2396 = vmatprep.mubr.bf16.mxu0 0
        %2397 = vmatmul.mubr.bf16.gmra.mrb[0].mxu0 %v1255
        %v2398 = vpop.f32.mrb[0].mxu0
        %v2399 = vadd.f32 %v2286, %v2398
        %v2400 = vpop.f32.mrb[0].mxu0
        %v2401 = vpop.f32.mrb[0].mxu0
        %v2402 = vadd.f32 %v2289, %v2401
        %v2403 = vpop.f32.mrb[0].mxu0
        %2404 = vmatprep.mubr.bf16.mxu0 0
        %2405 = vmatmul.mubr.bf16.gmra.mrb[0].mxu0 %v1256
        %v2406 = vpop.f32.mrb[0].mxu0
        %v2407 = vadd.f32 %v2294, %v2406
        %v2408 = vpop.f32.mrb[0].mxu0
        %v2409 = vpop.f32.mrb[0].mxu0
        %v2410 = vadd.f32 %v2297, %v2409
        %v2411 = vpop.f32.mrb[0].mxu0
        %2412 = vmatprep.mubr.bf16.mxu0 0
        %2413 = vmatmul.mubr.bf16.gmra.mrb[0].mxu0 %v1257
        %v2414 = vpop.f32.mrb[0].mxu0
        %v2415 = vadd.f32 %v2302, %v2414
        %v2416 = vpop.f32.mrb[0].mxu0
        %v2417 = vpop.f32.mrb[0].mxu0
        %v2418 = vadd.f32 %v2305, %v2417
        %v2419 = vpop.f32.mrb[0].mxu0
        %2420 = vmatprep.mubr.bf16.mxu0 0
        %2421 = vmatmul.mubr.bf16.gmra.mrb[0].mxu0 %v1258
        %v2422 = vpop.f32.mrb[0].mxu0
        %v2423 = vadd.f32 %v2310, %v2422
        %v2424 = vpop.f32.mrb[0].mxu0
        %v2425 = vpop.f32.mrb[0].mxu0
        %v2426 = vadd.f32 %v2313, %v2425
        %v2427 = vpop.f32.mrb[0].mxu0
        %2428 = vmatprep.mubr.bf16.mxu0 0
        %2429 = vmatmul.mubr.bf16.gmra.mrb[0].mxu0 %v1281
        %v2430 = vpop.f32.mrb[0].mxu0
        %v2431 = vadd.f32 %v2318, %v2430
        %v2432 = vpop.f32.mrb[0].mxu0
        %v2433 = vpop.f32.mrb[0].mxu0
        %v2434 = vadd.f32 %v2321, %v2433
        %v2435 = vpop.f32.mrb[0].mxu0
        %2436 = vmatprep.mubr.bf16.mxu0 0
        %2437 = vmatmul.mubr.bf16.gmra.mrb[0].mxu0 %v1295
        %v2438 = vpop.f32.mrb[0].mxu0
        %v2439 = vadd.f32 %v2326, %v2438
        %v2440 = vpop.f32.mrb[0].mxu0
        %v2441 = vpop.f32.mrb[0].mxu0
        %v2442 = vadd.f32 %v2329, %v2441
        %v2443 = vpop.f32.mrb[0].mxu0
        %2444 = vdwg.mxu0
        %v2445 = vmax.f32 %v2367, 0.0
        %v2446 = vmax.f32 %v2370, 0.0
        %v2447 = vmax.f32 %v2375, 0.0
        %v2448 = vmax.f32 %v2378, 0.0
        %v2449 = vmax.f32 %v2383, 0.0
        %v2450 = vmax.f32 %v2386, 0.0
        %v2451 = vmax.f32 %v2391, 0.0
        %v2452 = vmax.f32 %v2394, 0.0
        %v2453 = vmax.f32 %v2399, 0.0
        %v2454 = vmax.f32 %v2402, 0.0
        %v2455 = vmax.f32 %v2407, 0.0
        %v2456 = vmax.f32 %v2410, 0.0
        %v2457 = vmax.f32 %v2415, 0.0
        %v2458 = vmax.f32 %v2418, 0.0
        %v2459 = vmax.f32 %v2423, 0.0
        %v2460 = vmax.f32 %v2426, 0.0
        %v2461 = vmax.f32 %v2431, 0.0
        %v2462 = vmax.f32 %v2434, 0.0
        %v2463 = vmax.f32 %v2439, 0.0
        %v2464 = vmax.f32 %v2442, 0.0
        %v2465 = vstv %s639
        %v2466 = vadd.s32 %v2465, 1
        %v2467 = vadd.s32 %v2465, 2
        %v2468 = vadd.s32 %v2465, 3
        %v2469 = vadd.s32 %v2465, 4
        %v2470 = vadd.s32 %v2465, 5
        %v2471 = vadd.s32 %v2465, 6
        %v2472 = vadd.s32 %v2465, 7
        %v2473 = vadd.s32 %v2465, 8
        %v2474 = vadd.s32 %v2465, 9
        %vm2475 = vcmp.ge.s32.totalorder %v2465, 1
        %vm2476 = vcmp.ge.s32.totalorder %v2466, 1
        %vm2477 = vcmp.ge.s32.totalorder %v2467, 1
        %vm2478 = vcmp.ge.s32.totalorder %v2468, 1
        %vm2479 = vcmp.ge.s32.totalorder %v2469, 1
        %vm2480 = vcmp.ge.s32.totalorder %v2470, 1
        %vm2481 = vcmp.ge.s32.totalorder %v2471, 1
        %vm2482 = vcmp.ge.s32.totalorder %v2472, 1
        %vm2483 = vcmp.ge.s32.totalorder %v2473, 1
        %vm2484 = vcmp.ge.s32.totalorder %v2474, 1
        %vm2485 = vcmp.le.s32.totalorder %v2465, 16
        %vm2486 = vcmp.le.s32.totalorder %v2466, 16
        %vm2487 = vcmp.le.s32.totalorder %v2467, 16
        %vm2488 = vcmp.le.s32.totalorder %v2468, 16
        %vm2489 = vcmp.le.s32.totalorder %v2469, 16
        %vm2490 = vcmp.le.s32.totalorder %v2470, 16
        %vm2491 = vcmp.le.s32.totalorder %v2471, 16
        %vm2492 = vcmp.le.s32.totalorder %v2472, 16
        %vm2493 = vcmp.le.s32.totalorder %v2473, 16
        %vm2494 = vcmp.le.s32.totalorder %v2474, 16
        %vm2495 = vmand %vm2475, %vm2485
        %vm2496 = vmand %vm2476, %vm2486
        %vm2497 = vmand %vm2477, %vm2487
        %vm2498 = vmand %vm2478, %vm2488
        %vm2499 = vmand %vm2479, %vm2489
        %vm2500 = vmand %vm2480, %vm2490
        %vm2501 = vmand %vm2481, %vm2491
        %vm2502 = vmand %vm2482, %vm2492
        %vm2503 = vmand %vm2483, %vm2493
        %vm2504 = vmand %vm2484, %vm2494
        %v2505 = vsel %vm2495, 1, 0
        %v2506 = vsel %vm2496, 1, 0
        %v2507 = vsel %vm2497, 1, 0
        %v2508 = vsel %vm2498, 1, 0
        %v2509 = vsel %vm2499, 1, 0
        %v2510 = vsel %vm2500, 1, 0
        %v2511 = vsel %vm2501, 1, 0
        %v2512 = vsel %vm2502, 1, 0
        %v2513 = vsel %vm2503, 1, 0
        %v2514 = vsel %vm2504, 1, 0
        %vm2515 = vcmp.eq.s32.totalorder %v2505, 1
        %vm2516 = vcmp.eq.s32.totalorder %v2506, 1
        %vm2517 = vcmp.eq.s32.totalorder %v2507, 1
        %vm2518 = vcmp.eq.s32.totalorder %v2508, 1
        %vm2519 = vcmp.eq.s32.totalorder %v2509, 1
        %vm2520 = vcmp.eq.s32.totalorder %v2510, 1
        %vm2521 = vcmp.eq.s32.totalorder %v2511, 1
        %vm2522 = vcmp.eq.s32.totalorder %v2512, 1
        %vm2523 = vcmp.eq.s32.totalorder %v2513, 1
        %vm2524 = vcmp.eq.s32.totalorder %v2514, 1
        %v2525 = vsel %vm2515, %v2445, 0.0
        %v2526 = vsel %vm2515, %v2446, 0.0
        %v2527 = vsel %vm2516, %v2447, 0.0
        %v2528 = vsel %vm2516, %v2448, 0.0
        %v2529 = vsel %vm2517, %v2449, 0.0
        %v2530 = vsel %vm2517, %v2450, 0.0
        %v2531 = vsel %vm2518, %v2451, 0.0
        %v2532 = vsel %vm2518, %v2452, 0.0
        %v2533 = vsel %vm2519, %v2453, 0.0
        %v2534 = vsel %vm2519, %v2454, 0.0
        %v2535 = vsel %vm2520, %v2455, 0.0
        %v2536 = vsel %vm2520, %v2456, 0.0
        %v2537 = vsel %vm2521, %v2457, 0.0
        %v2538 = vsel %vm2521, %v2458, 0.0
        %v2539 = vsel %vm2522, %v2459, 0.0
        %v2540 = vsel %vm2522, %v2460, 0.0
        %v2541 = vsel %vm2523, %v2461, 0.0
        %v2542 = vsel %vm2523, %v2462, 0.0
        %v2543 = vsel %vm2524, %v2463, 0.0
        %v2544 = vsel %vm2524, %v2464, 0.0
        %v2545 = vpack.c.bf16 %v2526, %v2525
        %v2546 = vpack.c.bf16 %v2528, %v2527
        %v2547 = vpack.c.bf16 %v2530, %v2529
        %v2548 = vpack.c.bf16 %v2532, %v2531
        %v2549 = vpack.c.bf16 %v2534, %v2533
        %v2550 = vpack.c.bf16 %v2536, %v2535
        %v2551 = vpack.c.bf16 %v2538, %v2537
        %v2552 = vpack.c.bf16 %v2540, %v2539
        %v2553 = vpack.c.bf16 %v2542, %v2541
        %v2554 = vpack.c.bf16 %v2544, %v2543
        %v2565 = vunpack.c.l.b16 %v2545
        %v2566 = vunpack.c.h.b16 %v2545
        %v2567 = vunpack.c.l.b16 %v2546
        %v2568 = vunpack.c.h.b16 %v2546
        %v2569 = vunpack.c.l.b16 %v2547
        %v2570 = vunpack.c.h.b16 %v2547
        %v2571 = vunpack.c.l.b16 %v2548
        %v2572 = vunpack.c.h.b16 %v2548
        %v2573 = vunpack.c.l.b16 %v2549
        %v2574 = vunpack.c.h.b16 %v2549
        %v2575 = vunpack.c.l.b16 %v2550
        %v2576 = vunpack.c.h.b16 %v2550
        %v2577 = vunpack.c.l.b16 %v2551
        %v2578 = vunpack.c.h.b16 %v2551
        %v2579 = vunpack.c.l.b16 %v2552
        %v2580 = vunpack.c.h.b16 %v2552
        %v2581 = vunpack.c.l.b16 %v2553
        %v2582 = vunpack.c.h.b16 %v2553
        %v2583 = vunpack.c.l.b16 %v2554
        %v2584 = vunpack.c.h.b16 %v2554
        %v2585 = vpack.c.b16 %v2565, %v2565
        %v2586 = vpack.c.b16 %v2566, %v2566
        %v2587 = vpack.c.b16 %v2567, %v2567
        %v2588 = vpack.c.b16 %v2568, %v2568
        %v2589 = vpack.c.b16 %v2569, %v2569
        %v2590 = vpack.c.b16 %v2570, %v2570
        %v2591 = vpack.c.b16 %v2571, %v2571
        %v2592 = vpack.c.b16 %v2572, %v2572
        %v2593 = vpack.c.b16 %v2573, %v2573
        %v2594 = vpack.c.b16 %v2574, %v2574
        %v2595 = vpack.c.b16 %v2575, %v2575
        %v2596 = vpack.c.b16 %v2576, %v2576
        %v2597 = vpack.c.b16 %v2577, %v2577
        %v2598 = vpack.c.b16 %v2578, %v2578
        %v2599 = vpack.c.b16 %v2579, %v2579
        %v2600 = vpack.c.b16 %v2580, %v2580
        %v2601 = vpack.c.b16 %v2581, %v2581
        %v2602 = vpack.c.b16 %v2582, %v2582
        %v2603 = vpack.c.b16 %v2583, %v2583
        %v2604 = vpack.c.b16 %v2584, %v2584
        %2625 = vst [vmem:[#allocation3 + $0x8] sm:$0xf] %v2585
        %2626 = vst [vmem:[#allocation3 + $0xc] sm:$0xf] %v2586
        %2627 = vst [vmem:[#allocation3 + $0x1c] sm:$0xf] %v2587
        %2628 = vst [vmem:[#allocation3 + $0x20] sm:$0xf] %v2588
        %2629 = vst [vmem:[#allocation3 + $0x30] sm:$0xf] %v2589
        %2630 = vst [vmem:[#allocation3 + $0x34] sm:$0xf] %v2590
        %2631 = vst [vmem:[#allocation3 + $0x44] sm:$0xf] %v2591
        %2632 = vst [vmem:[#allocation3 + $0x48] sm:$0xf] %v2592
        %2633 = vst [vmem:[#allocation3 + $0x58] sm:$0xf] %v2593
        %2634 = vst [vmem:[#allocation3 + $0x5c] sm:$0xf] %v2594
        %2635 = vst [vmem:[#allocation3 + $0x6c] sm:$0xf] %v2595
        %2636 = vst [vmem:[#allocation3 + $0x70] sm:$0xf] %v2596
        %2637 = vst [vmem:[#allocation3 + $0x80] sm:$0xf] %v2597
        %2638 = vst [vmem:[#allocation3 + $0x84] sm:$0xf] %v2598
        %2639 = vst [vmem:[#allocation3 + $0x94] sm:$0xf] %v2599
        %2640 = vst [vmem:[#allocation3 + $0x98] sm:$0xf] %v2600
        %2641 = vst [vmem:[#allocation3 + $0xa8] sm:$0xf] %v2601
        %2642 = vst [vmem:[#allocation3 + $0xac] sm:$0xf] %v2602
        %2643 = vst [vmem:[#allocation3 + $0xbc] sm:$0xf] %v2603
        %2644 = vst [vmem:[#allocation3 + $0xc0] sm:$0xf] %v2604
        %v2645 = vld [vmem:[#allocation3 + $0x4] sm:$0x8]
        %v2646 = vld [vmem:[#allocation3 + $0x8] sm:$0xf]
        %v2647 = vld [vmem:[#allocation3 + $0xc] sm:$0xf]
        %v2648 = vld [vmem:[#allocation3 + $0x18] sm:$0x8]
        %v2649 = vld [vmem:[#allocation3 + $0x1c] sm:$0xf]
        %v2650 = vld [vmem:[#allocation3 + $0x20] sm:$0xf]
        %v2651 = vld [vmem:[#allocation3 + $0x2c] sm:$0x8]
        %v2652 = vld [vmem:[#allocation3 + $0x30] sm:$0xf]
        %v2653 = vld [vmem:[#allocation3 + $0x34] sm:$0xf]
        %v2654 = vld [vmem:[#allocation3 + $0x40] sm:$0x8]
        %v2655 = vld [vmem:[#allocation3 + $0x44] sm:$0xf]
        %v2656 = vld [vmem:[#allocation3 + $0x48] sm:$0xf]
        %v2657 = vld [vmem:[#allocation3 + $0x54] sm:$0x8]
        %v2658 = vld [vmem:[#allocation3 + $0x58] sm:$0xf]
        %v2659 = vld [vmem:[#allocation3 + $0x5c] sm:$0xf]
        %v2660 = vld [vmem:[#allocation3 + $0x68] sm:$0x8]
        %v2661 = vld [vmem:[#allocation3 + $0x6c] sm:$0xf]
        %v2662 = vld [vmem:[#allocation3 + $0x70] sm:$0xf]
        %v2663 = vld [vmem:[#allocation3 + $0x7c] sm:$0x8]
        %v2664 = vld [vmem:[#allocation3 + $0x80] sm:$0xf]
        %v2665 = vld [vmem:[#allocation3 + $0x84] sm:$0xf]
        %v2666 = vld [vmem:[#allocation3 + $0x90] sm:$0x8]
        %v2667 = vld [vmem:[#allocation3 + $0x94] sm:$0xf]
        %v2668 = vld [vmem:[#allocation3 + $0x98] sm:$0xf]
        %v2669 = vld [vmem:[#allocation3 + $0xa4] sm:$0x8]
        %v2670 = vld [vmem:[#allocation3 + $0xa8] sm:$0xf]
        %v2671 = vld [vmem:[#allocation3 + $0xac] sm:$0xf]
        %v2672 = vld [vmem:[#allocation3 + $0xb8] sm:$0x8]
        %v2673 = vld [vmem:[#allocation3 + $0xbc] sm:$0xf]
        %v2674 = vld [vmem:[#allocation3 + $0xc0] sm:$0xf]
        %v2675 = vld [vmem:[#allocation3 + $0x10] sm:$0x1]
        %v2676 = vld [vmem:[#allocation3 + $0x24] sm:$0x1]
        %v2677 = vld [vmem:[#allocation3 + $0x38] sm:$0x1]
        %v2678 = vld [vmem:[#allocation3 + $0x4c] sm:$0x1]
        %v2679 = vld [vmem:[#allocation3 + $0x60] sm:$0x1]
        %v2680 = vld [vmem:[#allocation3 + $0x74] sm:$0x1]
        %v2681 = vld [vmem:[#allocation3 + $0x88] sm:$0x1]
        %v2682 = vld [vmem:[#allocation3 + $0x9c] sm:$0x1]
        %v2683 = vld [vmem:[#allocation3 + $0xb0] sm:$0x1]
        %v2684 = vld [vmem:[#allocation3 + $0xc4] sm:$0x1]
        %v2686 = vshrl.u32 %v2645, 16
        %v2688 = vrot.slane %v2686, 7
        %v2689 = vrot.slane %v2688, 4
        %v2691 = vshrl.u32 %v2646, 16
        %v2693 = vrot.slane %v2691, 7
        %v2694 = vshll.u32 %v2646, 16
        %v2696 = vor.u32 %v2693, %v2694
        %v2697 = vsel %vm693, %v2689, %v2696
        %v2698 = vrot.slane %v2693, 4
        %v2700 = vshrl.u32 %v2647, 16
        %v2702 = vrot.slane %v2700, 7
        %v2703 = vshll.u32 %v2647, 16
        %v2705 = vor.u32 %v2702, %v2703
        %v2706 = vsel %vm693, %v2698, %v2705
        %v2708 = vshrl.u32 %v2648, 16
        %v2710 = vrot.slane %v2708, 7
        %v2711 = vrot.slane %v2710, 4
        %v2713 = vshrl.u32 %v2649, 16
        %v2715 = vrot.slane %v2713, 7
        %v2716 = vshll.u32 %v2649, 16
        %v2718 = vor.u32 %v2715, %v2716
        %v2719 = vsel %vm693, %v2711, %v2718
        %v2720 = vrot.slane %v2715, 4
        %v2722 = vshrl.u32 %v2650, 16
        %v2724 = vrot.slane %v2722, 7
        %v2725 = vshll.u32 %v2650, 16
        %v2727 = vor.u32 %v2724, %v2725
        %v2728 = vsel %vm693, %v2720, %v2727
        %v2730 = vshrl.u32 %v2651, 16
        %v2732 = vrot.slane %v2730, 7
        %v2733 = vrot.slane %v2732, 4
        %v2735 = vshrl.u32 %v2652, 16
        %v2737 = vrot.slane %v2735, 7
        %v2738 = vshll.u32 %v2652, 16
        %v2740 = vor.u32 %v2737, %v2738
        %v2741 = vsel %vm693, %v2733, %v2740
        %v2742 = vrot.slane %v2737, 4
        %v2744 = vshrl.u32 %v2653, 16
        %v2746 = vrot.slane %v2744, 7
        %v2747 = vshll.u32 %v2653, 16
        %v2749 = vor.u32 %v2746, %v2747
        %v2750 = vsel %vm693, %v2742, %v2749
        %v2752 = vshrl.u32 %v2654, 16
        %v2754 = vrot.slane %v2752, 7
        %v2755 = vrot.slane %v2754, 4
        %v2757 = vshrl.u32 %v2655, 16
        %v2759 = vrot.slane %v2757, 7
        %v2760 = vshll.u32 %v2655, 16
        %v2762 = vor.u32 %v2759, %v2760
        %v2763 = vsel %vm693, %v2755, %v2762
        %v2764 = vrot.slane %v2759, 4
        %v2766 = vshrl.u32 %v2656, 16
        %v2768 = vrot.slane %v2766, 7
        %v2769 = vshll.u32 %v2656, 16
        %v2771 = vor.u32 %v2768, %v2769
        %v2772 = vsel %vm693, %v2764, %v2771
        %v2774 = vshrl.u32 %v2657, 16
        %v2776 = vrot.slane %v2774, 7
        %v2777 = vrot.slane %v2776, 4
        %v2779 = vshrl.u32 %v2658, 16
        %v2781 = vrot.slane %v2779, 7
        %v2782 = vshll.u32 %v2658, 16
        %v2784 = vor.u32 %v2781, %v2782
        %v2785 = vsel %vm693, %v2777, %v2784
        %v2786 = vrot.slane %v2781, 4
        %v2788 = vshrl.u32 %v2659, 16
        %v2790 = vrot.slane %v2788, 7
        %v2791 = vshll.u32 %v2659, 16
        %v2793 = vor.u32 %v2790, %v2791
        %v2794 = vsel %vm693, %v2786, %v2793
        %v2796 = vshrl.u32 %v2660, 16
        %v2798 = vrot.slane %v2796, 7
        %v2799 = vrot.slane %v2798, 4
        %v2801 = vshrl.u32 %v2661, 16
        %v2803 = vrot.slane %v2801, 7
        %v2804 = vshll.u32 %v2661, 16
        %v2806 = vor.u32 %v2803, %v2804
        %v2807 = vsel %vm693, %v2799, %v2806
        %v2808 = vrot.slane %v2803, 4
        %v2810 = vshrl.u32 %v2662, 16
        %v2812 = vrot.slane %v2810, 7
        %v2813 = vshll.u32 %v2662, 16
        %v2815 = vor.u32 %v2812, %v2813
        %v2816 = vsel %vm693, %v2808, %v2815
        %v2818 = vshrl.u32 %v2663, 16
        %v2820 = vrot.slane %v2818, 7
        %v2821 = vrot.slane %v2820, 4
        %v2823 = vshrl.u32 %v2664, 16
        %v2825 = vrot.slane %v2823, 7
        %v2826 = vshll.u32 %v2664, 16
        %v2828 = vor.u32 %v2825, %v2826
        %v2829 = vsel %vm693, %v2821, %v2828
        %v2830 = vrot.slane %v2825, 4
        %v2832 = vshrl.u32 %v2665, 16
        %v2834 = vrot.slane %v2832, 7
        %v2835 = vshll.u32 %v2665, 16
        %v2837 = vor.u32 %v2834, %v2835
        %v2838 = vsel %vm693, %v2830, %v2837
        %v2840 = vshrl.u32 %v2666, 16
        %v2842 = vrot.slane %v2840, 7
        %v2843 = vrot.slane %v2842, 4
        %v2845 = vshrl.u32 %v2667, 16
        %v2847 = vrot.slane %v2845, 7
        %v2848 = vshll.u32 %v2667, 16
        %v2850 = vor.u32 %v2847, %v2848
        %v2851 = vsel %vm693, %v2843, %v2850
        %v2852 = vrot.slane %v2847, 4
        %v2854 = vshrl.u32 %v2668, 16
        %v2856 = vrot.slane %v2854, 7
        %v2857 = vshll.u32 %v2668, 16
        %v2859 = vor.u32 %v2856, %v2857
        %v2860 = vsel %vm693, %v2852, %v2859
        %v2861 = vrot.slane %v2691, 4
        %v2862 = vrot.slane %v2694, 5
        %v2863 = vor.u32 %v2861, %v2862
        %v2864 = vrot.slane %v2863, 4
        %v2865 = vrot.slane %v2703, 5
        %v2866 = vsel %vm916, %v2864, %v2865
        %v2867 = vrot.slane %v2700, 4
        %v2868 = vor.u32 %v2867, %v2865
        %v2869 = vrot.slane %v2868, 4
        %v2871 = vshll.u32 %v2675, 16
        %v2873 = vrot.slane %v2871, 5
        %v2874 = vsel %vm916, %v2869, %v2873
        %v2875 = vrot.slane %v2713, 4
        %v2876 = vrot.slane %v2716, 5
        %v2877 = vor.u32 %v2875, %v2876
        %v2878 = vrot.slane %v2877, 4
        %v2879 = vrot.slane %v2725, 5
        %v2880 = vsel %vm916, %v2878, %v2879
        %v2881 = vrot.slane %v2722, 4
        %v2882 = vor.u32 %v2881, %v2879
        %v2883 = vrot.slane %v2882, 4
        %v2885 = vshll.u32 %v2676, 16
        %v2887 = vrot.slane %v2885, 5
        %v2888 = vsel %vm916, %v2883, %v2887
        %v2889 = vrot.slane %v2735, 4
        %v2890 = vrot.slane %v2738, 5
        %v2891 = vor.u32 %v2889, %v2890
        %v2892 = vrot.slane %v2891, 4
        %v2893 = vrot.slane %v2747, 5
        %v2894 = vsel %vm916, %v2892, %v2893
        %v2895 = vrot.slane %v2744, 4
        %v2896 = vor.u32 %v2895, %v2893
        %v2897 = vrot.slane %v2896, 4
        %v2899 = vshll.u32 %v2677, 16
        %v2901 = vrot.slane %v2899, 5
        %v2902 = vsel %vm916, %v2897, %v2901
        %v2903 = vrot.slane %v2757, 4
        %v2904 = vrot.slane %v2760, 5
        %v2905 = vor.u32 %v2903, %v2904
        %v2906 = vrot.slane %v2905, 4
        %v2907 = vrot.slane %v2769, 5
        %v2908 = vsel %vm916, %v2906, %v2907
        %v2909 = vrot.slane %v2766, 4
        %v2910 = vor.u32 %v2909, %v2907
        %v2911 = vrot.slane %v2910, 4
        %v2913 = vshll.u32 %v2678, 16
        %v2915 = vrot.slane %v2913, 5
        %v2916 = vsel %vm916, %v2911, %v2915
        %v2917 = vrot.slane %v2779, 4
        %v2918 = vrot.slane %v2782, 5
        %v2919 = vor.u32 %v2917, %v2918
        %v2920 = vrot.slane %v2919, 4
        %v2921 = vrot.slane %v2791, 5
        %v2922 = vsel %vm916, %v2920, %v2921
        %v2923 = vrot.slane %v2788, 4
        %v2924 = vor.u32 %v2923, %v2921
        %v2925 = vrot.slane %v2924, 4
        %v2927 = vshll.u32 %v2679, 16
        %v2929 = vrot.slane %v2927, 5
        %v2930 = vsel %vm916, %v2925, %v2929
        %v2931 = vrot.slane %v2801, 4
        %v2932 = vrot.slane %v2804, 5
        %v2933 = vor.u32 %v2931, %v2932
        %v2934 = vrot.slane %v2933, 4
        %v2935 = vrot.slane %v2813, 5
        %v2936 = vsel %vm916, %v2934, %v2935
        %v2937 = vrot.slane %v2810, 4
        %v2938 = vor.u32 %v2937, %v2935
        %v2939 = vrot.slane %v2938, 4
        %v2941 = vshll.u32 %v2680, 16
        %v2943 = vrot.slane %v2941, 5
        %v2944 = vsel %vm916, %v2939, %v2943
        %v2945 = vrot.slane %v2823, 4
        %v2946 = vrot.slane %v2826, 5
        %v2947 = vor.u32 %v2945, %v2946
        %v2948 = vrot.slane %v2947, 4
        %v2949 = vrot.slane %v2835, 5
        %v2950 = vsel %vm916, %v2948, %v2949
        %v2951 = vrot.slane %v2832, 4
        %v2952 = vor.u32 %v2951, %v2949
        %v2953 = vrot.slane %v2952, 4
        %v2955 = vshll.u32 %v2681, 16
        %v2957 = vrot.slane %v2955, 5
        %v2958 = vsel %vm916, %v2953, %v2957
        %v2959 = vrot.slane %v2845, 4
        %v2960 = vrot.slane %v2848, 5
        %v2961 = vor.u32 %v2959, %v2960
        %v2962 = vrot.slane %v2961, 4
        %v2963 = vrot.slane %v2857, 5
        %v2964 = vsel %vm916, %v2962, %v2963
        %v2965 = vrot.slane %v2854, 4
        %v2966 = vor.u32 %v2965, %v2963
        %v2967 = vrot.slane %v2966, 4
        %v2969 = vshll.u32 %v2682, 16
        %v2971 = vrot.slane %v2969, 5
        %v2972 = vsel %vm916, %v2967, %v2971
        %v2974 = vshrl.u32 %v2669, 16
        %v2976 = vrot.slane %v2974, 7
        %v2977 = vrot.slane %v2976, 4
        %v2979 = vshrl.u32 %v2670, 16
        %v2981 = vrot.slane %v2979, 7
        %v2982 = vshll.u32 %v2670, 16
        %v2984 = vor.u32 %v2981, %v2982
        %v2985 = vsel %vm693, %v2977, %v2984
        %v2986 = vrot.slane %v2981, 4
        %v2988 = vshrl.u32 %v2671, 16
        %v2990 = vrot.slane %v2988, 7
        %v2991 = vshll.u32 %v2671, 16
        %v2993 = vor.u32 %v2990, %v2991
        %v2994 = vsel %vm693, %v2986, %v2993
        %v2995 = vrot.slane %v2979, 4
        %v2996 = vrot.slane %v2982, 5
        %v2997 = vor.u32 %v2995, %v2996
        %v2998 = vrot.slane %v2997, 4
        %v2999 = vrot.slane %v2991, 5
        %v3000 = vsel %vm916, %v2998, %v2999
        %v3001 = vrot.slane %v2988, 4
        %v3002 = vor.u32 %v3001, %v2999
        %v3003 = vrot.slane %v3002, 4
        %v3005 = vshll.u32 %v2683, 16
        %v3007 = vrot.slane %v3005, 5
        %v3008 = vsel %vm916, %v3003, %v3007
        %v3010 = vshrl.u32 %v2672, 16
        %v3012 = vrot.slane %v3010, 7
        %v3013 = vrot.slane %v3012, 4
        %v3015 = vshrl.u32 %v2673, 16
        %v3017 = vrot.slane %v3015, 7
        %v3018 = vshll.u32 %v2673, 16
        %v3020 = vor.u32 %v3017, %v3018
        %v3021 = vsel %vm693, %v3013, %v3020
        %v3022 = vrot.slane %v3017, 4
        %v3024 = vshrl.u32 %v2674, 16
        %v3026 = vrot.slane %v3024, 7
        %v3027 = vshll.u32 %v2674, 16
        %v3029 = vor.u32 %v3026, %v3027
        %v3030 = vsel %vm693, %v3022, %v3029
        %v3031 = vrot.slane %v3015, 4
        %v3032 = vrot.slane %v3018, 5
        %v3033 = vor.u32 %v3031, %v3032
        %v3034 = vrot.slane %v3033, 4
        %v3035 = vrot.slane %v3027, 5
        %v3036 = vsel %vm916, %v3034, %v3035
        %v3037 = vrot.slane %v3024, 4
        %v3038 = vor.u32 %v3037, %v3035
        %v3039 = vrot.slane %v3038, 4
        %v3041 = vshll.u32 %v2684, 16
        %v3043 = vrot.slane %v3041, 5
        %v3044 = vsel %vm916, %v3039, %v3043
        %v3045 = vunpack.c.l.b16 %v2697
        %v3046 = vunpack.c.l.b16 %v2706
        %v3047 = vunpack.c.l.b16 %v2719
        %v3048 = vunpack.c.l.b16 %v2728
        %v3049 = vunpack.c.l.b16 %v2741
        %v3050 = vunpack.c.l.b16 %v2750
        %v3051 = vunpack.c.l.b16 %v2763
        %v3052 = vunpack.c.l.b16 %v2772
        %v3053 = vunpack.c.l.b16 %v2785
        %v3054 = vunpack.c.l.b16 %v2794
        %v3055 = vunpack.c.l.b16 %v2807
        %v3056 = vunpack.c.l.b16 %v2816
        %v3057 = vunpack.c.l.b16 %v2829
        %v3058 = vunpack.c.l.b16 %v2838
        %v3059 = vunpack.c.l.b16 %v2851
        %v3060 = vunpack.c.l.b16 %v2860
        %v3061 = vpack.c.b16 %v3046, %v3045
        %v3062 = vpack.c.b16 %v3048, %v3047
        %v3063 = vpack.c.b16 %v3050, %v3049
        %v3064 = vpack.c.b16 %v3052, %v3051
        %v3065 = vpack.c.b16 %v3054, %v3053
        %v3066 = vpack.c.b16 %v3056, %v3055
        %v3067 = vpack.c.b16 %v3058, %v3057
        %v3068 = vpack.c.b16 %v3060, %v3059
        %v3093 = vunpack.c.l.b16 %v2646
        %v3094 = vunpack.c.l.b16 %v2647
        %v3095 = vunpack.c.l.b16 %v2649
        %v3096 = vunpack.c.l.b16 %v2650
        %v3097 = vunpack.c.l.b16 %v2652
        %v3098 = vunpack.c.l.b16 %v2653
        %v3099 = vunpack.c.l.b16 %v2655
        %v3100 = vunpack.c.l.b16 %v2656
        %v3101 = vunpack.c.l.b16 %v2658
        %v3102 = vunpack.c.l.b16 %v2659
        %v3103 = vunpack.c.l.b16 %v2661
        %v3104 = vunpack.c.l.b16 %v2662
        %v3105 = vunpack.c.l.b16 %v2664
        %v3106 = vunpack.c.l.b16 %v2665
        %v3107 = vunpack.c.l.b16 %v2667
        %v3108 = vunpack.c.l.b16 %v2668
        %v3109 = vpack.c.b16 %v3094, %v3093
        %v3110 = vpack.c.b16 %v3096, %v3095
        %v3111 = vpack.c.b16 %v3098, %v3097
        %v3112 = vpack.c.b16 %v3100, %v3099
        %v3113 = vpack.c.b16 %v3102, %v3101
        %v3114 = vpack.c.b16 %v3104, %v3103
        %v3115 = vpack.c.b16 %v3106, %v3105
        %v3116 = vpack.c.b16 %v3108, %v3107
        %v3125 = vunpack.c.l.b16 %v2866
        %v3126 = vunpack.c.l.b16 %v2874
        %v3127 = vunpack.c.l.b16 %v2880
        %v3128 = vunpack.c.l.b16 %v2888
        %v3129 = vunpack.c.l.b16 %v2894
        %v3130 = vunpack.c.l.b16 %v2902
        %v3131 = vunpack.c.l.b16 %v2908
        %v3132 = vunpack.c.l.b16 %v2916
        %v3133 = vunpack.c.l.b16 %v2922
        %v3134 = vunpack.c.l.b16 %v2930
        %v3135 = vunpack.c.l.b16 %v2936
        %v3136 = vunpack.c.l.b16 %v2944
        %v3137 = vunpack.c.l.b16 %v2950
        %v3138 = vunpack.c.l.b16 %v2958
        %v3139 = vunpack.c.l.b16 %v2964
        %v3140 = vunpack.c.l.b16 %v2972
        %v3141 = vpack.c.b16 %v3126, %v3125
        %v3142 = vpack.c.b16 %v3128, %v3127
        %v3143 = vpack.c.b16 %v3130, %v3129
        %v3144 = vpack.c.b16 %v3132, %v3131
        %v3145 = vpack.c.b16 %v3134, %v3133
        %v3146 = vpack.c.b16 %v3136, %v3135
        %v3147 = vpack.c.b16 %v3138, %v3137
        %v3148 = vpack.c.b16 %v3140, %v3139
        %v3157 = vunpack.c.l.b16 %v2985
        %v3158 = vunpack.c.l.b16 %v2994
        %v3159 = vpack.c.b16 %v3158, %v3157
        %v3163 = vunpack.c.l.b16 %v2670
        %v3164 = vunpack.c.l.b16 %v2671
        %v3165 = vpack.c.b16 %v3164, %v3163
        %v3167 = vunpack.c.l.b16 %v3000
        %v3168 = vunpack.c.l.b16 %v3008
        %v3169 = vpack.c.b16 %v3168, %v3167
        %v3171 = vunpack.c.l.b16 %v3021
        %v3172 = vunpack.c.l.b16 %v3030
        %v3173 = vpack.c.b16 %v3172, %v3171
        %v3177 = vunpack.c.l.b16 %v2673
        %v3178 = vunpack.c.l.b16 %v2674
        %v3179 = vpack.c.b16 %v3178, %v3177
        %v3181 = vunpack.c.l.b16 %v3036
        %v3182 = vunpack.c.l.b16 %v3044
        %v3183 = vpack.c.b16 %v3182, %v3181
        %v3185 = vld [vmem:[#allocation9] sm:$0xf]
        %v3186 = vld [vmem:[#allocation9 + $0x4] sm:$0xf]
        %v3187 = vld [vmem:[#allocation9 + $0x8] sm:$0xf]
        %v3188 = vld [vmem:[#allocation9 + $0xc] sm:$0xf]
        %v3189 = vld [vmem:[#allocation9 + $0x10] sm:$0xf]
        %v3190 = vld [vmem:[#allocation9 + $0x14] sm:$0xf]
        %v3191 = vld [vmem:[#allocation9 + $0x18] sm:$0xf]
        %v3192 = vld [vmem:[#allocation9 + $0x1c] sm:$0xf]
        %v3193 = vld [vmem:[#allocation9 + $0x20] sm:$0xf]
        %v3194 = vld [vmem:[#allocation9 + $0x24] sm:$0xf]
        %v3195 = vld [vmem:[#allocation9 + $0x28] sm:$0xf]
        %v3196 = vld [vmem:[#allocation9 + $0x2c] sm:$0xf]
        %v3197 = vld [vmem:[#allocation9 + $0x30] sm:$0xf]
        %v3198 = vld [vmem:[#allocation9 + $0x34] sm:$0xf]
        %v3199 = vld [vmem:[#allocation9 + $0x38] sm:$0xf]
        %v3200 = vld [vmem:[#allocation9 + $0x3c] sm:$0xf]
        %v3201 = vld [vmem:[#allocation9 + $0x40] sm:$0xf]
        %v3202 = vld [vmem:[#allocation9 + $0x44] sm:$0xf]
        %v3203 = vld [vmem:[#allocation9 + $0x48] sm:$0xf]
        %v3204 = vld [vmem:[#allocation9 + $0x4c] sm:$0xf]
        %v3205 = vld [vmem:[#allocation9 + $0x50] sm:$0xf]
        %v3206 = vld [vmem:[#allocation9 + $0x54] sm:$0xf]
        %v3207 = vld [vmem:[#allocation9 + $0x58] sm:$0xf]
        %v3208 = vld [vmem:[#allocation9 + $0x5c] sm:$0xf]
        %v3209 = vld [vmem:[#allocation9 + $0x60] sm:$0xf]
        %v3210 = vld [vmem:[#allocation9 + $0x64] sm:$0xf]
        %v3211 = vld [vmem:[#allocation9 + $0x68] sm:$0xf]
        %v3212 = vld [vmem:[#allocation9 + $0x6c] sm:$0xf]
        %v3213 = vld [vmem:[#allocation9 + $0x70] sm:$0xf]
        %v3214 = vld [vmem:[#allocation9 + $0x74] sm:$0xf]
        %v3215 = vld [vmem:[#allocation9 + $0x78] sm:$0xf]
        %v3216 = vld [vmem:[#allocation9 + $0x7c] sm:$0xf]
        %v3217 = vld [vmem:[#allocation9 + $0x80] sm:$0xf]
        %v3218 = vld [vmem:[#allocation9 + $0x84] sm:$0xf]
        %v3219 = vld [vmem:[#allocation9 + $0x88] sm:$0xf]
        %v3220 = vld [vmem:[#allocation9 + $0x8c] sm:$0xf]
        %v3221 = vld [vmem:[#allocation9 + $0x90] sm:$0xf]
        %v3222 = vld [vmem:[#allocation9 + $0x94] sm:$0xf]
        %v3223 = vld [vmem:[#allocation9 + $0x98] sm:$0xf]
        %v3224 = vld [vmem:[#allocation9 + $0x9c] sm:$0xf]
        %v3225 = vld [vmem:[#allocation9 + $0xa0] sm:$0xf]
        %v3226 = vld [vmem:[#allocation9 + $0xa4] sm:$0xf]
        %v3227 = vld [vmem:[#allocation9 + $0xa8] sm:$0xf]
        %v3228 = vld [vmem:[#allocation9 + $0xac] sm:$0xf]
        %v3229 = vld [vmem:[#allocation9 + $0xb0] sm:$0xf]
        %v3230 = vld [vmem:[#allocation9 + $0xb4] sm:$0xf]
        %v3231 = vld [vmem:[#allocation9 + $0xb8] sm:$0xf]
        %v3232 = vld [vmem:[#allocation9 + $0xbc] sm:$0xf]
        %v3233 = vld [vmem:[#allocation9 + $0xc0] sm:$0xf]
        %v3234 = vld [vmem:[#allocation9 + $0xc4] sm:$0xf]
        %v3235 = vld [vmem:[#allocation9 + $0xc8] sm:$0xf]
        %v3236 = vld [vmem:[#allocation9 + $0xcc] sm:$0xf]
        %v3237 = vld [vmem:[#allocation9 + $0xd0] sm:$0xf]
        %v3238 = vld [vmem:[#allocation9 + $0xd4] sm:$0xf]
        %v3239 = vld [vmem:[#allocation9 + $0xd8] sm:$0xf]
        %v3240 = vld [vmem:[#allocation9 + $0xdc] sm:$0xf]
        %v3241 = vld [vmem:[#allocation9 + $0xe0] sm:$0xf]
        %v3242 = vld [vmem:[#allocation9 + $0xe4] sm:$0xf]
        %v3243 = vld [vmem:[#allocation9 + $0xe8] sm:$0xf]
        %v3244 = vld [vmem:[#allocation9 + $0xec] sm:$0xf]
        %v3245 = vld [vmem:[#allocation9 + $0xf0] sm:$0xf]
        %v3246 = vld [vmem:[#allocation9 + $0xf4] sm:$0xf]
        %v3247 = vld [vmem:[#allocation9 + $0xf8] sm:$0xf]
        %v3248 = vld [vmem:[#allocation9 + $0xfc] sm:$0xf]
        %v3249 = vld [vmem:[#allocation9 + $0x100] sm:$0xf]
        %v3250 = vld [vmem:[#allocation9 + $0x104] sm:$0xf]
        %v3251 = vld [vmem:[#allocation9 + $0x108] sm:$0xf]
        %v3252 = vld [vmem:[#allocation9 + $0x10c] sm:$0xf]
        %v3253 = vld [vmem:[#allocation9 + $0x110] sm:$0xf]
        %v3254 = vld [vmem:[#allocation9 + $0x114] sm:$0xf]
        %v3255 = vld [vmem:[#allocation9 + $0x118] sm:$0xf]
        %v3256 = vld [vmem:[#allocation9 + $0x11c] sm:$0xf]
        %v3257 = vld [vmem:[#allocation9 + $0x120] sm:$0xf]
        %v3258 = vld [vmem:[#allocation9 + $0x124] sm:$0xf]
        %v3259 = vld [vmem:[#allocation9 + $0x128] sm:$0xf]
        %v3260 = vld [vmem:[#allocation9 + $0x12c] sm:$0xf]
        %v3261 = vld [vmem:[#allocation9 + $0x130] sm:$0xf]
        %v3262 = vld [vmem:[#allocation9 + $0x134] sm:$0xf]
        %v3263 = vld [vmem:[#allocation9 + $0x138] sm:$0xf]
        %v3264 = vld [vmem:[#allocation9 + $0x13c] sm:$0xf]
        %v3265 = vld [vmem:[#allocation9 + $0x140] sm:$0xf]
        %v3266 = vld [vmem:[#allocation9 + $0x144] sm:$0xf]
        %v3267 = vld [vmem:[#allocation9 + $0x148] sm:$0xf]
        %v3268 = vld [vmem:[#allocation9 + $0x14c] sm:$0xf]
        %v3269 = vld [vmem:[#allocation9 + $0x150] sm:$0xf]
        %v3270 = vld [vmem:[#allocation9 + $0x154] sm:$0xf]
        %v3271 = vld [vmem:[#allocation9 + $0x158] sm:$0xf]
        %v3272 = vld [vmem:[#allocation9 + $0x15c] sm:$0xf]
        %v3273 = vld [vmem:[#allocation9 + $0x160] sm:$0xf]
        %v3274 = vld [vmem:[#allocation9 + $0x164] sm:$0xf]
        %v3275 = vld [vmem:[#allocation9 + $0x168] sm:$0xf]
        %v3276 = vld [vmem:[#allocation9 + $0x16c] sm:$0xf]
        %v3277 = vld [vmem:[#allocation9 + $0x170] sm:$0xf]
        %v3278 = vld [vmem:[#allocation9 + $0x174] sm:$0xf]
        %v3279 = vld [vmem:[#allocation9 + $0x178] sm:$0xf]
        %v3280 = vld [vmem:[#allocation9 + $0x17c] sm:$0xf]
        %v3281 = vld [vmem:[#allocation9 + $0x180] sm:$0xf]
        %v3282 = vld [vmem:[#allocation9 + $0x184] sm:$0xf]
        %v3283 = vld [vmem:[#allocation9 + $0x188] sm:$0xf]
        %v3284 = vld [vmem:[#allocation9 + $0x18c] sm:$0xf]
        %v3285 = vld [vmem:[#allocation9 + $0x190] sm:$0xf]
        %v3286 = vld [vmem:[#allocation9 + $0x194] sm:$0xf]
        %v3287 = vld [vmem:[#allocation9 + $0x198] sm:$0xf]
        %v3288 = vld [vmem:[#allocation9 + $0x19c] sm:$0xf]
        %v3289 = vld [vmem:[#allocation9 + $0x1a0] sm:$0xf]
        %v3290 = vld [vmem:[#allocation9 + $0x1a4] sm:$0xf]
        %v3291 = vld [vmem:[#allocation9 + $0x1a8] sm:$0xf]
        %v3292 = vld [vmem:[#allocation9 + $0x1ac] sm:$0xf]
        %v3293 = vld [vmem:[#allocation9 + $0x1b0] sm:$0xf]
        %v3294 = vld [vmem:[#allocation9 + $0x1b4] sm:$0xf]
        %v3295 = vld [vmem:[#allocation9 + $0x1b8] sm:$0xf]
        %v3296 = vld [vmem:[#allocation9 + $0x1bc] sm:$0xf]
        %v3297 = vld [vmem:[#allocation9 + $0x1c0] sm:$0xf]
        %v3298 = vld [vmem:[#allocation9 + $0x1c4] sm:$0xf]
        %v3299 = vld [vmem:[#allocation9 + $0x1c8] sm:$0xf]
        %v3300 = vld [vmem:[#allocation9 + $0x1cc] sm:$0xf]
        %v3301 = vld [vmem:[#allocation9 + $0x1d0] sm:$0xf]
        %v3302 = vld [vmem:[#allocation9 + $0x1d4] sm:$0xf]
        %v3303 = vld [vmem:[#allocation9 + $0x1d8] sm:$0xf]
        %v3304 = vld [vmem:[#allocation9 + $0x1dc] sm:$0xf]
        %v3305 = vld [vmem:[#allocation9 + $0x1e0] sm:$0xf]
        %v3306 = vld [vmem:[#allocation9 + $0x1e4] sm:$0xf]
        %v3307 = vld [vmem:[#allocation9 + $0x1e8] sm:$0xf]
        %v3308 = vld [vmem:[#allocation9 + $0x1ec] sm:$0xf]
        %v3309 = vld [vmem:[#allocation9 + $0x1f0] sm:$0xf]
        %v3310 = vld [vmem:[#allocation9 + $0x1f4] sm:$0xf]
        %v3311 = vld [vmem:[#allocation9 + $0x1f8] sm:$0xf]
        %v3312 = vld [vmem:[#allocation9 + $0x1fc] sm:$0xf]
        %v3313 = vld [vmem:[#allocation9 + $0x200] sm:$0xf]
        %v3314 = vld [vmem:[#allocation9 + $0x204] sm:$0xf]
        %v3315 = vld [vmem:[#allocation9 + $0x208] sm:$0xf]
        %v3316 = vld [vmem:[#allocation9 + $0x20c] sm:$0xf]
        %v3317 = vld [vmem:[#allocation9 + $0x210] sm:$0xf]
        %v3318 = vld [vmem:[#allocation9 + $0x214] sm:$0xf]
        %v3319 = vld [vmem:[#allocation9 + $0x218] sm:$0xf]
        %v3320 = vld [vmem:[#allocation9 + $0x21c] sm:$0xf]
        %v3321 = vld [vmem:[#allocation9 + $0x220] sm:$0xf]
        %v3322 = vld [vmem:[#allocation9 + $0x224] sm:$0xf]
        %v3323 = vld [vmem:[#allocation9 + $0x228] sm:$0xf]
        %v3324 = vld [vmem:[#allocation9 + $0x22c] sm:$0xf]
        %v3325 = vld [vmem:[#allocation9 + $0x230] sm:$0xf]
        %v3326 = vld [vmem:[#allocation9 + $0x234] sm:$0xf]
        %v3327 = vld [vmem:[#allocation9 + $0x238] sm:$0xf]
        %v3328 = vld [vmem:[#allocation9 + $0x23c] sm:$0xf]
        %v3329 = vld [vmem:[%s4] sm:$0x1]
        %v3331 = vlaneseq
        %v3332 = vshrl.u32 %v3331, 7
        %v3333 = vsub.s32 0, %v3332
        %v3334 = vrot.slane %v3329, %v3333
        %v3480 = vunpack.c.l.b16 %v3185
        %v3481 = vunpack.c.l.b16 %v3186
        %v3482 = vunpack.c.l.b16 %v3187
        %v3483 = vunpack.c.l.b16 %v3188
        %v3484 = vunpack.c.l.b16 %v3189
        %v3485 = vunpack.c.l.b16 %v3190
        %v3486 = vunpack.c.l.b16 %v3191
        %v3487 = vunpack.c.l.b16 %v3192
        %v3488 = vunpack.c.l.b16 %v3193
        %v3489 = vunpack.c.l.b16 %v3194
        %v3490 = vunpack.c.l.b16 %v3195
        %v3491 = vunpack.c.l.b16 %v3196
        %v3492 = vunpack.c.l.b16 %v3197
        %v3493 = vunpack.c.l.b16 %v3198
        %v3494 = vunpack.c.l.b16 %v3199
        %v3495 = vunpack.c.l.b16 %v3200
        %v3496 = vunpack.c.l.b16 %v3201
        %v3497 = vunpack.c.l.b16 %v3202
        %v3498 = vunpack.c.l.b16 %v3203
        %v3499 = vunpack.c.l.b16 %v3204
        %v3500 = vunpack.c.l.b16 %v3205
        %v3501 = vunpack.c.l.b16 %v3206
        %v3502 = vunpack.c.l.b16 %v3207
        %v3503 = vunpack.c.l.b16 %v3208
        %v3504 = vunpack.c.l.b16 %v3209
        %v3505 = vunpack.c.l.b16 %v3210
        %v3506 = vunpack.c.l.b16 %v3211
        %v3507 = vunpack.c.l.b16 %v3212
        %v3508 = vunpack.c.l.b16 %v3213
        %v3509 = vunpack.c.l.b16 %v3214
        %v3510 = vunpack.c.l.b16 %v3215
        %v3511 = vunpack.c.l.b16 %v3216
        %v3512 = vunpack.c.l.b16 %v3217
        %v3513 = vunpack.c.l.b16 %v3218
        %v3514 = vunpack.c.l.b16 %v3219
        %v3515 = vunpack.c.l.b16 %v3220
        %v3516 = vunpack.c.l.b16 %v3221
        %v3517 = vunpack.c.l.b16 %v3222
        %v3518 = vunpack.c.l.b16 %v3223
        %v3519 = vunpack.c.l.b16 %v3224
        %v3520 = vunpack.c.l.b16 %v3225
        %v3521 = vunpack.c.l.b16 %v3226
        %v3522 = vunpack.c.l.b16 %v3227
        %v3523 = vunpack.c.l.b16 %v3228
        %v3524 = vunpack.c.l.b16 %v3229
        %v3525 = vunpack.c.l.b16 %v3230
        %v3526 = vunpack.c.l.b16 %v3231
        %v3527 = vunpack.c.l.b16 %v3232
        %v3528 = vunpack.c.l.b16 %v3233
        %v3529 = vunpack.c.l.b16 %v3234
        %v3530 = vunpack.c.l.b16 %v3235
        %v3531 = vunpack.c.l.b16 %v3236
        %v3532 = vunpack.c.l.b16 %v3237
        %v3533 = vunpack.c.l.b16 %v3238
        %v3534 = vunpack.c.l.b16 %v3239
        %v3535 = vunpack.c.l.b16 %v3240
        %v3536 = vunpack.c.l.b16 %v3241
        %v3537 = vunpack.c.l.b16 %v3242
        %v3538 = vunpack.c.l.b16 %v3243
        %v3539 = vunpack.c.l.b16 %v3244
        %v3540 = vunpack.c.l.b16 %v3245
        %v3541 = vunpack.c.l.b16 %v3246
        %v3542 = vunpack.c.l.b16 %v3247
        %v3543 = vunpack.c.l.b16 %v3248
        %v3544 = vunpack.c.l.b16 %v3249
        %v3545 = vunpack.c.l.b16 %v3250
        %v3546 = vunpack.c.l.b16 %v3251
        %v3547 = vunpack.c.l.b16 %v3252
        %v3548 = vunpack.c.l.b16 %v3253
        %v3549 = vunpack.c.l.b16 %v3254
        %v3550 = vunpack.c.l.b16 %v3255
        %v3551 = vunpack.c.l.b16 %v3256
        %v3552 = vunpack.c.l.b16 %v3257
        %v3553 = vunpack.c.l.b16 %v3258
        %v3554 = vunpack.c.l.b16 %v3259
        %v3555 = vunpack.c.l.b16 %v3260
        %v3556 = vunpack.c.l.b16 %v3261
        %v3557 = vunpack.c.l.b16 %v3262
        %v3558 = vunpack.c.l.b16 %v3263
        %v3559 = vunpack.c.l.b16 %v3264
        %v3560 = vunpack.c.l.b16 %v3265
        %v3561 = vunpack.c.l.b16 %v3266
        %v3562 = vunpack.c.l.b16 %v3267
        %v3563 = vunpack.c.l.b16 %v3268
        %v3564 = vunpack.c.l.b16 %v3269
        %v3565 = vunpack.c.l.b16 %v3270
        %v3566 = vunpack.c.l.b16 %v3271
        %v3567 = vunpack.c.l.b16 %v3272
        %v3568 = vunpack.c.l.b16 %v3273
        %v3569 = vunpack.c.l.b16 %v3274
        %v3570 = vunpack.c.l.b16 %v3275
        %v3571 = vunpack.c.l.b16 %v3276
        %v3572 = vunpack.c.l.b16 %v3277
        %v3573 = vunpack.c.l.b16 %v3278
        %v3574 = vunpack.c.l.b16 %v3279
        %v3575 = vunpack.c.l.b16 %v3280
        %v3576 = vunpack.c.l.b16 %v3281
        %v3577 = vunpack.c.l.b16 %v3282
        %v3578 = vunpack.c.l.b16 %v3283
        %v3579 = vunpack.c.l.b16 %v3284
        %v3580 = vunpack.c.l.b16 %v3285
        %v3581 = vunpack.c.l.b16 %v3286
        %v3582 = vunpack.c.l.b16 %v3287
        %v3583 = vunpack.c.l.b16 %v3288
        %v3584 = vunpack.c.l.b16 %v3289
        %v3585 = vunpack.c.l.b16 %v3290
        %v3586 = vunpack.c.l.b16 %v3291
        %v3587 = vunpack.c.l.b16 %v3292
        %v3588 = vunpack.c.l.b16 %v3293
        %v3589 = vunpack.c.l.b16 %v3294
        %v3590 = vunpack.c.l.b16 %v3295
        %v3591 = vunpack.c.l.b16 %v3296
        %v3592 = vunpack.c.l.b16 %v3297
        %v3593 = vunpack.c.l.b16 %v3298
        %v3594 = vunpack.c.l.b16 %v3299
        %v3595 = vunpack.c.l.b16 %v3300
        %v3596 = vunpack.c.l.b16 %v3301
        %v3597 = vunpack.c.l.b16 %v3302
        %v3598 = vunpack.c.l.b16 %v3303
        %v3599 = vunpack.c.l.b16 %v3304
        %v3600 = vunpack.c.l.b16 %v3305
        %v3601 = vunpack.c.l.b16 %v3306
        %v3602 = vunpack.c.l.b16 %v3307
        %v3603 = vunpack.c.l.b16 %v3308
        %v3604 = vunpack.c.l.b16 %v3309
        %v3605 = vunpack.c.l.b16 %v3310
        %v3606 = vunpack.c.l.b16 %v3311
        %v3607 = vunpack.c.l.b16 %v3312
        %v3608 = vunpack.c.l.b16 %v3313
        %v3609 = vunpack.c.l.b16 %v3314
        %v3610 = vunpack.c.l.b16 %v3315
        %v3611 = vunpack.c.l.b16 %v3316
        %v3612 = vunpack.c.l.b16 %v3317
        %v3613 = vunpack.c.l.b16 %v3318
        %v3614 = vunpack.c.l.b16 %v3319
        %v3615 = vunpack.c.l.b16 %v3320
        %v3616 = vunpack.c.l.b16 %v3321
        %v3617 = vunpack.c.l.b16 %v3322
        %v3618 = vunpack.c.l.b16 %v3323
        %v3619 = vunpack.c.l.b16 %v3324
        %v3620 = vunpack.c.l.b16 %v3325
        %v3621 = vunpack.c.l.b16 %v3326
        %v3622 = vunpack.c.l.b16 %v3327
        %v3623 = vunpack.c.l.b16 %v3328
        %v3624 = vpack.c.b16 %v3481, %v3480
        %v3625 = vpack.c.b16 %v3483, %v3482
        %v3626 = vpack.c.b16 %v3485, %v3484
        %v3627 = vpack.c.b16 %v3487, %v3486
        %v3628 = vpack.c.b16 %v3489, %v3488
        %v3629 = vpack.c.b16 %v3491, %v3490
        %v3630 = vpack.c.b16 %v3493, %v3492
        %v3631 = vpack.c.b16 %v3495, %v3494
        %v3632 = vpack.c.b16 %v3497, %v3496
        %v3633 = vpack.c.b16 %v3499, %v3498
        %v3634 = vpack.c.b16 %v3501, %v3500
        %v3635 = vpack.c.b16 %v3503, %v3502
        %v3636 = vpack.c.b16 %v3505, %v3504
        %v3637 = vpack.c.b16 %v3507, %v3506
        %v3638 = vpack.c.b16 %v3509, %v3508
        %v3639 = vpack.c.b16 %v3511, %v3510
        %v3640 = vpack.c.b16 %v3513, %v3512
        %v3641 = vpack.c.b16 %v3515, %v3514
        %v3642 = vpack.c.b16 %v3517, %v3516
        %v3643 = vpack.c.b16 %v3519, %v3518
        %v3644 = vpack.c.b16 %v3521, %v3520
        %v3645 = vpack.c.b16 %v3523, %v3522
        %v3646 = vpack.c.b16 %v3525, %v3524
        %v3647 = vpack.c.b16 %v3527, %v3526
        %v3648 = vpack.c.b16 %v3529, %v3528
        %v3649 = vpack.c.b16 %v3531, %v3530
        %v3650 = vpack.c.b16 %v3533, %v3532
        %v3651 = vpack.c.b16 %v3535, %v3534
        %v3652 = vpack.c.b16 %v3537, %v3536
        %v3653 = vpack.c.b16 %v3539, %v3538
        %v3654 = vpack.c.b16 %v3541, %v3540
        %v3655 = vpack.c.b16 %v3543, %v3542
        %v3656 = vpack.c.b16 %v3545, %v3544
        %v3657 = vpack.c.b16 %v3547, %v3546
        %v3658 = vpack.c.b16 %v3549, %v3548
        %v3659 = vpack.c.b16 %v3551, %v3550
        %v3660 = vpack.c.b16 %v3553, %v3552
        %v3661 = vpack.c.b16 %v3555, %v3554
        %v3662 = vpack.c.b16 %v3557, %v3556
        %v3663 = vpack.c.b16 %v3559, %v3558
        %v3664 = vpack.c.b16 %v3561, %v3560
        %v3665 = vpack.c.b16 %v3563, %v3562
        %v3666 = vpack.c.b16 %v3565, %v3564
        %v3667 = vpack.c.b16 %v3567, %v3566
        %v3668 = vpack.c.b16 %v3569, %v3568
        %v3669 = vpack.c.b16 %v3571, %v3570
        %v3670 = vpack.c.b16 %v3573, %v3572
        %v3671 = vpack.c.b16 %v3575, %v3574
        %v3672 = vpack.c.b16 %v3577, %v3576
        %v3673 = vpack.c.b16 %v3579, %v3578
        %v3674 = vpack.c.b16 %v3581, %v3580
        %v3675 = vpack.c.b16 %v3583, %v3582
        %v3676 = vpack.c.b16 %v3585, %v3584
        %v3677 = vpack.c.b16 %v3587, %v3586
        %v3678 = vpack.c.b16 %v3589, %v3588
        %v3679 = vpack.c.b16 %v3591, %v3590
        %v3680 = vpack.c.b16 %v3593, %v3592
        %v3681 = vpack.c.b16 %v3595, %v3594
        %v3682 = vpack.c.b16 %v3597, %v3596
        %v3683 = vpack.c.b16 %v3599, %v3598
        %v3684 = vpack.c.b16 %v3601, %v3600
        %v3685 = vpack.c.b16 %v3603, %v3602
        %v3686 = vpack.c.b16 %v3605, %v3604
        %v3687 = vpack.c.b16 %v3607, %v3606
        %v3688 = vpack.c.b16 %v3609, %v3608
        %v3689 = vpack.c.b16 %v3611, %v3610
        %v3690 = vpack.c.b16 %v3613, %v3612
        %v3691 = vpack.c.b16 %v3615, %v3614
        %v3692 = vpack.c.b16 %v3617, %v3616
        %v3693 = vpack.c.b16 %v3619, %v3618
        %v3694 = vpack.c.b16 %v3621, %v3620
        %v3695 = vpack.c.b16 %v3623, %v3622
        %3768 = vmatprep.subr.bf16.mxu0 0
        %3769 = vmatpush1.bf16.msra.mxu0 %v3624
        %3770 = vmatprep.subr.bf16.mxu0 0
        %3771 = vmatpush1.bf16.msra.mxu0 %v3625
        %3772 = vmatprep.subr.bf16.mxu0 0
        %3773 = vmatpush1.bf16.msra.mxu0 %v3626
        %3774 = vmatprep.subr.bf16.mxu0 0
        %3775 = vmatpush1.bf16.msra.mxu0 %v3627
        %3776 = vmatprep.subr.bf16.mxu0 0
        %3777 = vmatpush1.bf16.msra.mxu0 %v3628
        %3778 = vmatprep.subr.bf16.mxu0 0
        %3779 = vmatpush1.bf16.msra.mxu0 %v3629
        %3780 = vmatprep.subr.bf16.mxu0 0
        %3781 = vmatpush1.bf16.msra.mxu0 %v3630
        %3782 = vmatprep.subr.bf16.mxu0 0
        %3783 = vmatpush1.bf16.msra.mxu0 %v3631
        %3784 = vmatprep.subr.bf16.mxu0 0
        %3785 = vmatpush1.bf16.msra.mxu0 %v3632
        %3786 = vmatprep.subr.bf16.mxu0 0
        %3787 = vmatpush1.bf16.msra.mxu0 %v3633
        %3788 = vmatprep.subr.bf16.mxu0 0
        %3789 = vmatpush1.bf16.msra.mxu0 %v3634
        %3790 = vmatprep.subr.bf16.mxu0 0
        %3791 = vmatpush1.bf16.msra.mxu0 %v3635
        %3792 = vmatprep.subr.bf16.mxu0 0
        %3793 = vmatpush1.bf16.msra.mxu0 %v3636
        %3794 = vmatprep.subr.bf16.mxu0 0
        %3795 = vmatpush1.bf16.msra.mxu0 %v3637
        %3796 = vmatprep.subr.bf16.mxu0 0
        %3797 = vmatpush1.bf16.msra.mxu0 %v3638
        %3798 = vmatprep.subr.bf16.mxu0 0
        %3799 = vmatpush1.bf16.msra.mxu0 %v3639
        %3800 = vmatprep.mubr.bf16.mxu0 %v3109
        %3801 = vmatmul.mubr.bf16.gmra.mrb[0].mxu0 %v3061
        %v3802 = vpop.f32.mrb[0].mxu0
        %v3803 = vadd.f32 %v3334, %v3802
        %v3804 = vpop.f32.mrb[0].mxu0
        %v3805 = vpop.f32.mrb[0].mxu0
        %v3806 = vadd.f32 %v3334, %v3805
        %v3807 = vpop.f32.mrb[0].mxu0
        %3808 = vmatprep.mubr.bf16.mxu0 %v3110
        %3809 = vmatmul.mubr.bf16.gmra.mrb[0].mxu0 %v3062
        %v3810 = vpop.f32.mrb[0].mxu0
        %v3811 = vadd.f32 %v3334, %v3810
        %v3812 = vpop.f32.mrb[0].mxu0
        %v3813 = vpop.f32.mrb[0].mxu0
        %v3814 = vadd.f32 %v3334, %v3813
        %v3815 = vpop.f32.mrb[0].mxu0
        %3816 = vmatprep.mubr.bf16.mxu0 %v3111
        %3817 = vmatmul.mubr.bf16.gmra.mrb[0].mxu0 %v3063
        %v3818 = vpop.f32.mrb[0].mxu0
        %v3819 = vadd.f32 %v3334, %v3818
        %v3820 = vpop.f32.mrb[0].mxu0
        %v3821 = vpop.f32.mrb[0].mxu0
        %v3822 = vadd.f32 %v3334, %v3821
        %v3823 = vpop.f32.mrb[0].mxu0
        %3824 = vmatprep.mubr.bf16.mxu0 %v3112
        %3825 = vmatmul.mubr.bf16.gmra.mrb[0].mxu0 %v3064
        %v3826 = vpop.f32.mrb[0].mxu0
        %v3827 = vadd.f32 %v3334, %v3826
        %v3828 = vpop.f32.mrb[0].mxu0
        %v3829 = vpop.f32.mrb[0].mxu0
        %v3830 = vadd.f32 %v3334, %v3829
        %v3831 = vpop.f32.mrb[0].mxu0
        %3832 = vmatprep.mubr.bf16.mxu0 %v3113
        %3833 = vmatmul.mubr.bf16.gmra.mrb[0].mxu0 %v3065
        %v3834 = vpop.f32.mrb[0].mxu0
        %v3835 = vadd.f32 %v3334, %v3834
        %v3836 = vpop.f32.mrb[0].mxu0
        %v3837 = vpop.f32.mrb[0].mxu0
        %v3838 = vadd.f32 %v3334, %v3837
        %v3839 = vpop.f32.mrb[0].mxu0
        %3840 = vmatprep.mubr.bf16.mxu0 %v3114
        %3841 = vmatmul.mubr.bf16.gmra.mrb[0].mxu0 %v3066
        %v3842 = vpop.f32.mrb[0].mxu0
        %v3843 = vadd.f32 %v3334, %v3842
        %v3844 = vpop.f32.mrb[0].mxu0
        %v3845 = vpop.f32.mrb[0].mxu0
        %v3846 = vadd.f32 %v3334, %v3845
        %v3847 = vpop.f32.mrb[0].mxu0
        %3848 = vmatprep.mubr.bf16.mxu0 %v3115
        %3849 = vmatmul.mubr.bf16.gmra.mrb[0].mxu0 %v3067
        %v3850 = vpop.f32.mrb[0].mxu0
        %v3851 = vadd.f32 %v3334, %v3850
        %v3852 = vpop.f32.mrb[0].mxu0
        %v3853 = vpop.f32.mrb[0].mxu0
        %v3854 = vadd.f32 %v3334, %v3853
        %v3855 = vpop.f32.mrb[0].mxu0
        %3856 = vmatprep.mubr.bf16.mxu0 %v3116
        %3857 = vmatmul.mubr.bf16.gmra.mrb[0].mxu0 %v3068
        %v3858 = vpop.f32.mrb[0].mxu0
        %v3859 = vadd.f32 %v3334, %v3858
        %v3860 = vpop.f32.mrb[0].mxu0
        %v3861 = vpop.f32.mrb[0].mxu0
        %v3862 = vadd.f32 %v3334, %v3861
        %v3863 = vpop.f32.mrb[0].mxu0
        %3864 = vdwg.mxu0
        %3865 = vmatprep.subr.bf16.mxu0 0
        %3866 = vmatpush1.bf16.msra.mxu0 %v3640
        %3867 = vmatprep.subr.bf16.mxu0 0
        %3868 = vmatpush1.bf16.msra.mxu0 %v3641
        %3869 = vmatprep.subr.bf16.mxu0 0
        %3870 = vmatpush1.bf16.msra.mxu0 %v3642
        %3871 = vmatprep.subr.bf16.mxu0 0
        %3872 = vmatpush1.bf16.msra.mxu0 %v3643
        %3873 = vmatprep.subr.bf16.mxu0 0
        %3874 = vmatpush1.bf16.msra.mxu0 %v3644
        %3875 = vmatprep.subr.bf16.mxu0 0
        %3876 = vmatpush1.bf16.msra.mxu0 %v3645
        %3877 = vmatprep.subr.bf16.mxu0 0
        %3878 = vmatpush1.bf16.msra.mxu0 %v3646
        %3879 = vmatprep.subr.bf16.mxu0 0
        %3880 = vmatpush1.bf16.msra.mxu0 %v3647
        %3881 = vmatprep.subr.bf16.mxu0 0
        %3882 = vmatpush1.bf16.msra.mxu0 %v3648
        %3883 = vmatprep.subr.bf16.mxu0 0
        %3884 = vmatpush1.bf16.msra.mxu0 %v3649
        %3885 = vmatprep.subr.bf16.mxu0 0
        %3886 = vmatpush1.bf16.msra.mxu0 %v3650
        %3887 = vmatprep.subr.bf16.mxu0 0
        %3888 = vmatpush1.bf16.msra.mxu0 %v3651
        %3889 = vmatprep.subr.bf16.mxu0 0
        %3890 = vmatpush1.bf16.msra.mxu0 %v3652
        %3891 = vmatprep.subr.bf16.mxu0 0
        %3892 = vmatpush1.bf16.msra.mxu0 %v3653
        %3893 = vmatprep.subr.bf16.mxu0 0
        %3894 = vmatpush1.bf16.msra.mxu0 %v3654
        %3895 = vmatprep.subr.bf16.mxu0 0
        %3896 = vmatpush1.bf16.msra.mxu0 %v3655
        %3897 = vmatprep.mubr.bf16.mxu0 %v3062
        %3898 = vmatmul.mubr.bf16.gmra.mrb[0].mxu0 %v3141
        %v3899 = vpop.f32.mrb[0].mxu0
        %v3900 = vadd.f32 %v3803, %v3899
        %v3901 = vpop.f32.mrb[0].mxu0
        %v3902 = vpop.f32.mrb[0].mxu0
        %v3903 = vadd.f32 %v3806, %v3902
        %v3904 = vpop.f32.mrb[0].mxu0
        %3905 = vmatprep.mubr.bf16.mxu0 %v3063
        %3906 = vmatmul.mubr.bf16.gmra.mrb[0].mxu0 %v3142
        %v3907 = vpop.f32.mrb[0].mxu0
        %v3908 = vadd.f32 %v3811, %v3907
        %v3909 = vpop.f32.mrb[0].mxu0
        %v3910 = vpop.f32.mrb[0].mxu0
        %v3911 = vadd.f32 %v3814, %v3910
        %v3912 = vpop.f32.mrb[0].mxu0
        %3913 = vmatprep.mubr.bf16.mxu0 %v3064
        %3914 = vmatmul.mubr.bf16.gmra.mrb[0].mxu0 %v3143
        %v3915 = vpop.f32.mrb[0].mxu0
        %v3916 = vadd.f32 %v3819, %v3915
        %v3917 = vpop.f32.mrb[0].mxu0
        %v3918 = vpop.f32.mrb[0].mxu0
        %v3919 = vadd.f32 %v3822, %v3918
        %v3920 = vpop.f32.mrb[0].mxu0
        %3921 = vmatprep.mubr.bf16.mxu0 %v3065
        %3922 = vmatmul.mubr.bf16.gmra.mrb[0].mxu0 %v3144
        %v3923 = vpop.f32.mrb[0].mxu0
        %v3924 = vadd.f32 %v3827, %v3923
        %v3925 = vpop.f32.mrb[0].mxu0
        %v3926 = vpop.f32.mrb[0].mxu0
        %v3927 = vadd.f32 %v3830, %v3926
        %v3928 = vpop.f32.mrb[0].mxu0
        %3929 = vmatprep.mubr.bf16.mxu0 %v3066
        %3930 = vmatmul.mubr.bf16.gmra.mrb[0].mxu0 %v3145
        %v3931 = vpop.f32.mrb[0].mxu0
        %v3932 = vadd.f32 %v3835, %v3931
        %v3933 = vpop.f32.mrb[0].mxu0
        %v3934 = vpop.f32.mrb[0].mxu0
        %v3935 = vadd.f32 %v3838, %v3934
        %v3936 = vpop.f32.mrb[0].mxu0
        %3937 = vmatprep.mubr.bf16.mxu0 %v3067
        %3938 = vmatmul.mubr.bf16.gmra.mrb[0].mxu0 %v3146
        %v3939 = vpop.f32.mrb[0].mxu0
        %v3940 = vadd.f32 %v3843, %v3939
        %v3941 = vpop.f32.mrb[0].mxu0
        %v3942 = vpop.f32.mrb[0].mxu0
        %v3943 = vadd.f32 %v3846, %v3942
        %v3944 = vpop.f32.mrb[0].mxu0
        %3945 = vmatprep.mubr.bf16.mxu0 %v3068
        %3946 = vmatmul.mubr.bf16.gmra.mrb[0].mxu0 %v3147
        %v3947 = vpop.f32.mrb[0].mxu0
        %v3948 = vadd.f32 %v3851, %v3947
        %v3949 = vpop.f32.mrb[0].mxu0
        %v3950 = vpop.f32.mrb[0].mxu0
        %v3951 = vadd.f32 %v3854, %v3950
        %v3952 = vpop.f32.mrb[0].mxu0
        %3953 = vmatprep.mubr.bf16.mxu0 %v3159
        %3954 = vmatmul.mubr.bf16.gmra.mrb[0].mxu0 %v3148
        %v3955 = vpop.f32.mrb[0].mxu0
        %v3956 = vadd.f32 %v3859, %v3955
        %v3957 = vpop.f32.mrb[0].mxu0
        %v3958 = vpop.f32.mrb[0].mxu0
        %v3959 = vadd.f32 %v3862, %v3958
        %v3960 = vpop.f32.mrb[0].mxu0
        %3961 = vdwg.mxu0
        %3962 = vmatprep.subr.bf16.mxu0 0
        %3963 = vmatpush1.bf16.msra.mxu0 %v3656
        %3964 = vmatprep.subr.bf16.mxu0 0
        %3965 = vmatpush1.bf16.msra.mxu0 %v3657
        %3966 = vmatprep.subr.bf16.mxu0 0
        %3967 = vmatpush1.bf16.msra.mxu0 %v3658
        %3968 = vmatprep.subr.bf16.mxu0 0
        %3969 = vmatpush1.bf16.msra.mxu0 %v3659
        %3970 = vmatprep.subr.bf16.mxu0 0
        %3971 = vmatpush1.bf16.msra.mxu0 %v3660
        %3972 = vmatprep.subr.bf16.mxu0 0
        %3973 = vmatpush1.bf16.msra.mxu0 %v3661
        %3974 = vmatprep.subr.bf16.mxu0 0
        %3975 = vmatpush1.bf16.msra.mxu0 %v3662
        %3976 = vmatprep.subr.bf16.mxu0 0
        %3977 = vmatpush1.bf16.msra.mxu0 %v3663
        %3978 = vmatprep.subr.bf16.mxu0 0
        %3979 = vmatpush1.bf16.msra.mxu0 %v3664
        %3980 = vmatprep.subr.bf16.mxu0 0
        %3981 = vmatpush1.bf16.msra.mxu0 %v3665
        %3982 = vmatprep.subr.bf16.mxu0 0
        %3983 = vmatpush1.bf16.msra.mxu0 %v3666
        %3984 = vmatprep.subr.bf16.mxu0 0
        %3985 = vmatpush1.bf16.msra.mxu0 %v3667
        %3986 = vmatprep.subr.bf16.mxu0 0
        %3987 = vmatpush1.bf16.msra.mxu0 %v3668
        %3988 = vmatprep.subr.bf16.mxu0 0
        %3989 = vmatpush1.bf16.msra.mxu0 %v3669
        %3990 = vmatprep.subr.bf16.mxu0 0
        %3991 = vmatpush1.bf16.msra.mxu0 %v3670
        %3992 = vmatprep.subr.bf16.mxu0 0
        %3993 = vmatpush1.bf16.msra.mxu0 %v3671
        %3994 = vmatprep.mubr.bf16.mxu0 %v3142
        %3995 = vmatmul.mubr.bf16.gmra.mrb[0].mxu0 %v3110
        %v3996 = vpop.f32.mrb[0].mxu0
        %v3997 = vadd.f32 %v3900, %v3996
        %v3998 = vpop.f32.mrb[0].mxu0
        %v3999 = vpop.f32.mrb[0].mxu0
        %v4000 = vadd.f32 %v3903, %v3999
        %v4001 = vpop.f32.mrb[0].mxu0
        %4002 = vmatprep.mubr.bf16.mxu0 %v3143
        %4003 = vmatmul.mubr.bf16.gmra.mrb[0].mxu0 %v3111
        %v4004 = vpop.f32.mrb[0].mxu0
        %v4005 = vadd.f32 %v3908, %v4004
        %v4006 = vpop.f32.mrb[0].mxu0
        %v4007 = vpop.f32.mrb[0].mxu0
        %v4008 = vadd.f32 %v3911, %v4007
        %v4009 = vpop.f32.mrb[0].mxu0
        %4010 = vmatprep.mubr.bf16.mxu0 %v3144
        %4011 = vmatmul.mubr.bf16.gmra.mrb[0].mxu0 %v3112
        %v4012 = vpop.f32.mrb[0].mxu0
        %v4013 = vadd.f32 %v3916, %v4012
        %v4014 = vpop.f32.mrb[0].mxu0
        %v4015 = vpop.f32.mrb[0].mxu0
        %v4016 = vadd.f32 %v3919, %v4015
        %v4017 = vpop.f32.mrb[0].mxu0
        %4018 = vmatprep.mubr.bf16.mxu0 %v3145
        %4019 = vmatmul.mubr.bf16.gmra.mrb[0].mxu0 %v3113
        %v4020 = vpop.f32.mrb[0].mxu0
        %v4021 = vadd.f32 %v3924, %v4020
        %v4022 = vpop.f32.mrb[0].mxu0
        %v4023 = vpop.f32.mrb[0].mxu0
        %v4024 = vadd.f32 %v3927, %v4023
        %v4025 = vpop.f32.mrb[0].mxu0
        %4026 = vmatprep.mubr.bf16.mxu0 %v3146
        %4027 = vmatmul.mubr.bf16.gmra.mrb[0].mxu0 %v3114
        %v4028 = vpop.f32.mrb[0].mxu0
        %v4029 = vadd.f32 %v3932, %v4028
        %v4030 = vpop.f32.mrb[0].mxu0
        %v4031 = vpop.f32.mrb[0].mxu0
        %v4032 = vadd.f32 %v3935, %v4031
        %v4033 = vpop.f32.mrb[0].mxu0
        %4034 = vmatprep.mubr.bf16.mxu0 %v3147
        %4035 = vmatmul.mubr.bf16.gmra.mrb[0].mxu0 %v3115
        %v4036 = vpop.f32.mrb[0].mxu0
        %v4037 = vadd.f32 %v3940, %v4036
        %v4038 = vpop.f32.mrb[0].mxu0
        %v4039 = vpop.f32.mrb[0].mxu0
        %v4040 = vadd.f32 %v3943, %v4039
        %v4041 = vpop.f32.mrb[0].mxu0
        %4042 = vmatprep.mubr.bf16.mxu0 %v3148
        %4043 = vmatmul.mubr.bf16.gmra.mrb[0].mxu0 %v3116
        %v4044 = vpop.f32.mrb[0].mxu0
        %v4045 = vadd.f32 %v3948, %v4044
        %v4046 = vpop.f32.mrb[0].mxu0
        %v4047 = vpop.f32.mrb[0].mxu0
        %v4048 = vadd.f32 %v3951, %v4047
        %v4049 = vpop.f32.mrb[0].mxu0
        %4050 = vmatprep.mubr.bf16.mxu0 %v3169
        %4051 = vmatmul.mubr.bf16.gmra.mrb[0].mxu0 %v3165
        %v4052 = vpop.f32.mrb[0].mxu0
        %v4053 = vadd.f32 %v3956, %v4052
        %v4054 = vpop.f32.mrb[0].mxu0
        %v4055 = vpop.f32.mrb[0].mxu0
        %v4056 = vadd.f32 %v3959, %v4055
        %v4057 = vpop.f32.mrb[0].mxu0
        %4058 = vdwg.mxu0
        %4059 = vmatprep.subr.bf16.mxu0 0
        %4060 = vmatpush1.bf16.msra.mxu0 %v3672
        %4061 = vmatprep.subr.bf16.mxu0 0
        %4062 = vmatpush1.bf16.msra.mxu0 %v3673
        %4063 = vmatprep.subr.bf16.mxu0 0
        %4064 = vmatpush1.bf16.msra.mxu0 %v3674
        %4065 = vmatprep.subr.bf16.mxu0 0
        %4066 = vmatpush1.bf16.msra.mxu0 %v3675
        %4067 = vmatprep.subr.bf16.mxu0 0
        %4068 = vmatpush1.bf16.msra.mxu0 %v3676
        %4069 = vmatprep.subr.bf16.mxu0 0
        %4070 = vmatpush1.bf16.msra.mxu0 %v3677
        %4071 = vmatprep.subr.bf16.mxu0 0
        %4072 = vmatpush1.bf16.msra.mxu0 %v3678
        %4073 = vmatprep.subr.bf16.mxu0 0
        %4074 = vmatpush1.bf16.msra.mxu0 %v3679
        %4075 = vmatprep.subr.bf16.mxu0 0
        %4076 = vmatpush1.bf16.msra.mxu0 %v3680
        %4077 = vmatprep.subr.bf16.mxu0 0
        %4078 = vmatpush1.bf16.msra.mxu0 %v3681
        %4079 = vmatprep.subr.bf16.mxu0 0
        %4080 = vmatpush1.bf16.msra.mxu0 %v3682
        %4081 = vmatprep.subr.bf16.mxu0 0
        %4082 = vmatpush1.bf16.msra.mxu0 %v3683
        %4083 = vmatprep.subr.bf16.mxu0 0
        %4084 = vmatpush1.bf16.msra.mxu0 %v3684
        %4085 = vmatprep.subr.bf16.mxu0 0
        %4086 = vmatpush1.bf16.msra.mxu0 %v3685
        %4087 = vmatprep.subr.bf16.mxu0 0
        %4088 = vmatpush1.bf16.msra.mxu0 %v3686
        %4089 = vmatprep.subr.bf16.mxu0 0
        %4090 = vmatpush1.bf16.msra.mxu0 %v3687
        %4091 = vmatprep.mubr.bf16.mxu0 %v3111
        %4092 = vmatmul.mubr.bf16.gmra.mrb[0].mxu0 %v3063
        %v4093 = vpop.f32.mrb[0].mxu0
        %v4094 = vadd.f32 %v3997, %v4093
        %v4095 = vpop.f32.mrb[0].mxu0
        %v4096 = vpop.f32.mrb[0].mxu0
        %v4097 = vadd.f32 %v4000, %v4096
        %v4098 = vpop.f32.mrb[0].mxu0
        %4099 = vmatprep.mubr.bf16.mxu0 %v3112
        %4100 = vmatmul.mubr.bf16.gmra.mrb[0].mxu0 %v3064
        %v4101 = vpop.f32.mrb[0].mxu0
        %v4102 = vadd.f32 %v4005, %v4101
        %v4103 = vpop.f32.mrb[0].mxu0
        %v4104 = vpop.f32.mrb[0].mxu0
        %v4105 = vadd.f32 %v4008, %v4104
        %v4106 = vpop.f32.mrb[0].mxu0
        %4107 = vmatprep.mubr.bf16.mxu0 %v3113
        %4108 = vmatmul.mubr.bf16.gmra.mrb[0].mxu0 %v3065
        %v4109 = vpop.f32.mrb[0].mxu0
        %v4110 = vadd.f32 %v4013, %v4109
        %v4111 = vpop.f32.mrb[0].mxu0
        %v4112 = vpop.f32.mrb[0].mxu0
        %v4113 = vadd.f32 %v4016, %v4112
        %v4114 = vpop.f32.mrb[0].mxu0
        %4115 = vmatprep.mubr.bf16.mxu0 %v3114
        %4116 = vmatmul.mubr.bf16.gmra.mrb[0].mxu0 %v3066
        %v4117 = vpop.f32.mrb[0].mxu0
        %v4118 = vadd.f32 %v4021, %v4117
        %v4119 = vpop.f32.mrb[0].mxu0
        %v4120 = vpop.f32.mrb[0].mxu0
        %v4121 = vadd.f32 %v4024, %v4120
        %v4122 = vpop.f32.mrb[0].mxu0
        %4123 = vmatprep.mubr.bf16.mxu0 %v3115
        %4124 = vmatmul.mubr.bf16.gmra.mrb[0].mxu0 %v3067
        %v4125 = vpop.f32.mrb[0].mxu0
        %v4126 = vadd.f32 %v4029, %v4125
        %v4127 = vpop.f32.mrb[0].mxu0
        %v4128 = vpop.f32.mrb[0].mxu0
        %v4129 = vadd.f32 %v4032, %v4128
        %v4130 = vpop.f32.mrb[0].mxu0
        %4131 = vmatprep.mubr.bf16.mxu0 %v3116
        %4132 = vmatmul.mubr.bf16.gmra.mrb[0].mxu0 %v3068
        %v4133 = vpop.f32.mrb[0].mxu0
        %v4134 = vadd.f32 %v4037, %v4133
        %v4135 = vpop.f32.mrb[0].mxu0
        %v4136 = vpop.f32.mrb[0].mxu0
        %v4137 = vadd.f32 %v4040, %v4136
        %v4138 = vpop.f32.mrb[0].mxu0
        %4139 = vmatprep.mubr.bf16.mxu0 %v3165
        %4140 = vmatmul.mubr.bf16.gmra.mrb[0].mxu0 %v3159
        %v4141 = vpop.f32.mrb[0].mxu0
        %v4142 = vadd.f32 %v4045, %v4141
        %v4143 = vpop.f32.mrb[0].mxu0
        %v4144 = vpop.f32.mrb[0].mxu0
        %v4145 = vadd.f32 %v4048, %v4144
        %v4146 = vpop.f32.mrb[0].mxu0
        %4147 = vmatprep.mubr.bf16.mxu0 %v3179
        %4148 = vmatmul.mubr.bf16.gmra.mrb[0].mxu0 %v3173
        %v4149 = vpop.f32.mrb[0].mxu0
        %v4150 = vadd.f32 %v4053, %v4149
        %v4151 = vpop.f32.mrb[0].mxu0
        %v4152 = vpop.f32.mrb[0].mxu0
        %v4153 = vadd.f32 %v4056, %v4152
        %v4154 = vpop.f32.mrb[0].mxu0
        %4155 = vdwg.mxu0
        %4156 = vmatprep.subr.bf16.mxu0 0
        %4157 = vmatpush1.bf16.msra.mxu0 %v3688
        %4158 = vmatprep.subr.bf16.mxu0 0
        %4159 = vmatpush1.bf16.msra.mxu0 %v3689
        %4160 = vmatprep.subr.bf16.mxu0 0
        %4161 = vmatpush1.bf16.msra.mxu0 %v3690
        %4162 = vmatprep.subr.bf16.mxu0 0
        %4163 = vmatpush1.bf16.msra.mxu0 %v3691
        %4164 = vmatprep.subr.bf16.mxu0 0
        %4165 = vmatpush1.bf16.msra.mxu0 %v3692
        %4166 = vmatprep.subr.bf16.mxu0 0
        %4167 = vmatpush1.bf16.msra.mxu0 %v3693
        %4168 = vmatprep.subr.bf16.mxu0 0
        %4169 = vmatpush1.bf16.msra.mxu0 %v3694
        %4170 = vmatprep.subr.bf16.mxu0 0
        %4171 = vmatpush1.bf16.msra.mxu0 %v3695
        %4172 = vmatprep.subr.bf16.mxu0 0
        %4173 = vmatpush1.bf16.msra.mxu0 0
        %4174 = vmatprep.subr.bf16.mxu0 0
        %4175 = vmatpush1.bf16.msra.mxu0 0
        %4176 = vmatprep.subr.bf16.mxu0 0
        %4177 = vmatpush1.bf16.msra.mxu0 0
        %4178 = vmatprep.subr.bf16.mxu0 0
        %4179 = vmatpush1.bf16.msra.mxu0 0
        %4180 = vmatprep.subr.bf16.mxu0 0
        %4181 = vmatpush1.bf16.msra.mxu0 0
        %4182 = vmatprep.subr.bf16.mxu0 0
        %4183 = vmatpush1.bf16.msra.mxu0 0
        %4184 = vmatprep.subr.bf16.mxu0 0
        %4185 = vmatpush1.bf16.msra.mxu0 0
        %4186 = vmatprep.subr.bf16.mxu0 0
        %4187 = vmatpush1.bf16.msra.mxu0 0
        %4188 = vmatprep.mubr.bf16.mxu0 0
        %4189 = vmatmul.mubr.bf16.gmra.mrb[0].mxu0 %v3143
        %v4190 = vpop.f32.mrb[0].mxu0
        %v4191 = vadd.f32 %v4094, %v4190
        %v4192 = vpop.f32.mrb[0].mxu0
        %v4193 = vpop.f32.mrb[0].mxu0
        %v4194 = vadd.f32 %v4097, %v4193
        %v4195 = vpop.f32.mrb[0].mxu0
        %4196 = vmatprep.mubr.bf16.mxu0 0
        %4197 = vmatmul.mubr.bf16.gmra.mrb[0].mxu0 %v3144
        %v4198 = vpop.f32.mrb[0].mxu0
        %v4199 = vadd.f32 %v4102, %v4198
        %v4200 = vpop.f32.mrb[0].mxu0
        %v4201 = vpop.f32.mrb[0].mxu0
        %v4202 = vadd.f32 %v4105, %v4201
        %v4203 = vpop.f32.mrb[0].mxu0
        %4204 = vmatprep.mubr.bf16.mxu0 0
        %4205 = vmatmul.mubr.bf16.gmra.mrb[0].mxu0 %v3145
        %v4206 = vpop.f32.mrb[0].mxu0
        %v4207 = vadd.f32 %v4110, %v4206
        %v4208 = vpop.f32.mrb[0].mxu0
        %v4209 = vpop.f32.mrb[0].mxu0
        %v4210 = vadd.f32 %v4113, %v4209
        %v4211 = vpop.f32.mrb[0].mxu0
        %4212 = vmatprep.mubr.bf16.mxu0 0
        %4213 = vmatmul.mubr.bf16.gmra.mrb[0].mxu0 %v3146
        %v4214 = vpop.f32.mrb[0].mxu0
        %v4215 = vadd.f32 %v4118, %v4214
        %v4216 = vpop.f32.mrb[0].mxu0
        %v4217 = vpop.f32.mrb[0].mxu0
        %v4218 = vadd.f32 %v4121, %v4217
        %v4219 = vpop.f32.mrb[0].mxu0
        %4220 = vmatprep.mubr.bf16.mxu0 0
        %4221 = vmatmul.mubr.bf16.gmra.mrb[0].mxu0 %v3147
        %v4222 = vpop.f32.mrb[0].mxu0
        %v4223 = vadd.f32 %v4126, %v4222
        %v4224 = vpop.f32.mrb[0].mxu0
        %v4225 = vpop.f32.mrb[0].mxu0
        %v4226 = vadd.f32 %v4129, %v4225
        %v4227 = vpop.f32.mrb[0].mxu0
        %4228 = vmatprep.mubr.bf16.mxu0 0
        %4229 = vmatmul.mubr.bf16.gmra.mrb[0].mxu0 %v3148
        %v4230 = vpop.f32.mrb[0].mxu0
        %v4231 = vadd.f32 %v4134, %v4230
        %v4232 = vpop.f32.mrb[0].mxu0
        %v4233 = vpop.f32.mrb[0].mxu0
        %v4234 = vadd.f32 %v4137, %v4233
        %v4235 = vpop.f32.mrb[0].mxu0
        %4236 = vmatprep.mubr.bf16.mxu0 0
        %4237 = vmatmul.mubr.bf16.gmra.mrb[0].mxu0 %v3169
        %v4238 = vpop.f32.mrb[0].mxu0
        %v4239 = vadd.f32 %v4142, %v4238
        %v4240 = vpop.f32.mrb[0].mxu0
        %v4241 = vpop.f32.mrb[0].mxu0
        %v4242 = vadd.f32 %v4145, %v4241
        %v4243 = vpop.f32.mrb[0].mxu0
        %4244 = vmatprep.mubr.bf16.mxu0 0
        %4245 = vmatmul.mubr.bf16.gmra.mrb[0].mxu0 %v3183
        %v4246 = vpop.f32.mrb[0].mxu0
        %v4247 = vadd.f32 %v4150, %v4246
        %v4248 = vpop.f32.mrb[0].mxu0
        %v4249 = vpop.f32.mrb[0].mxu0
        %v4250 = vadd.f32 %v4153, %v4249
        %v4251 = vpop.f32.mrb[0].mxu0
        %4252 = vdwg.mxu0
        %v4253 = vmax.f32 %v4191, 0.0
        %v4254 = vmax.f32 %v4194, 0.0
        %v4255 = vmax.f32 %v4199, 0.0
        %v4256 = vmax.f32 %v4202, 0.0
        %v4257 = vmax.f32 %v4207, 0.0
        %v4258 = vmax.f32 %v4210, 0.0
        %v4259 = vmax.f32 %v4215, 0.0
        %v4260 = vmax.f32 %v4218, 0.0
        %v4261 = vmax.f32 %v4223, 0.0
        %v4262 = vmax.f32 %v4226, 0.0
        %v4263 = vmax.f32 %v4231, 0.0
        %v4264 = vmax.f32 %v4234, 0.0
        %v4265 = vmax.f32 %v4239, 0.0
        %v4266 = vmax.f32 %v4242, 0.0
        %v4267 = vmax.f32 %v4247, 0.0
        %v4268 = vmax.f32 %v4250, 0.0
        %v4269 = vpack.c.bf16 %v4254, %v4253
        %v4270 = vpack.c.bf16 %v4256, %v4255
        %v4271 = vpack.c.bf16 %v4258, %v4257
        %v4272 = vpack.c.bf16 %v4260, %v4259
        %v4273 = vpack.c.bf16 %v4262, %v4261
        %v4274 = vpack.c.bf16 %v4264, %v4263
        %v4275 = vpack.c.bf16 %v4266, %v4265
        %v4276 = vpack.c.bf16 %v4268, %v4267
        %v4277 = vld [vmem:[#allocation10] sm:$0xf]
        %v4278 = vld [vmem:[#allocation10 + $0x4] sm:$0xf]
        %v4279 = vld [vmem:[#allocation10 + $0x8] sm:$0xf]
        %v4280 = vld [vmem:[#allocation10 + $0xc] sm:$0xf]
        %v4281 = vld [vmem:[#allocation10 + $0x10] sm:$0xf]
        %v4282 = vld [vmem:[#allocation10 + $0x14] sm:$0xf]
        %v4283 = vld [vmem:[#allocation10 + $0x18] sm:$0xf]
        %v4284 = vld [vmem:[#allocation10 + $0x1c] sm:$0xf]
        %v4285 = vld [vmem:[#allocation10 + $0x20] sm:$0xf]
        %v4286 = vld [vmem:[#allocation10 + $0x24] sm:$0xf]
        %v4287 = vld [vmem:[#allocation10 + $0x28] sm:$0xf]
        %v4288 = vld [vmem:[#allocation10 + $0x2c] sm:$0xf]
        %v4289 = vld [vmem:[#allocation10 + $0x30] sm:$0xf]
        %v4290 = vld [vmem:[#allocation10 + $0x34] sm:$0xf]
        %v4291 = vld [vmem:[#allocation10 + $0x38] sm:$0xf]
        %v4292 = vld [vmem:[#allocation10 + $0x3c] sm:$0xf]
        %v4293 = vld [vmem:[%s6] sm:$0x1]
        %v4295 = vlaneseq
        %v4296 = vshrl.u32 %v4295, 7
        %v4297 = vsub.s32 0, %v4296
        %v4298 = vrot.slane %v4293, %v4297
        %v4316 = vunpack.c.l.b16 %v4277
        %v4317 = vunpack.c.l.b16 %v4278
        %v4318 = vunpack.c.l.b16 %v4279
        %v4319 = vunpack.c.l.b16 %v4280
        %v4320 = vunpack.c.l.b16 %v4281
        %v4321 = vunpack.c.l.b16 %v4282
        %v4322 = vunpack.c.l.b16 %v4283
        %v4323 = vunpack.c.l.b16 %v4284
        %v4324 = vunpack.c.l.b16 %v4285
        %v4325 = vunpack.c.l.b16 %v4286
        %v4326 = vunpack.c.l.b16 %v4287
        %v4327 = vunpack.c.l.b16 %v4288
        %v4328 = vunpack.c.l.b16 %v4289
        %v4329 = vunpack.c.l.b16 %v4290
        %v4330 = vunpack.c.l.b16 %v4291
        %v4331 = vunpack.c.l.b16 %v4292
        %v4332 = vpack.c.b16 %v4317, %v4316
        %v4333 = vpack.c.b16 %v4319, %v4318
        %v4334 = vpack.c.b16 %v4321, %v4320
        %v4335 = vpack.c.b16 %v4323, %v4322
        %v4336 = vpack.c.b16 %v4325, %v4324
        %v4337 = vpack.c.b16 %v4327, %v4326
        %v4338 = vpack.c.b16 %v4329, %v4328
        %v4339 = vpack.c.b16 %v4331, %v4330
        %4348 = vmatprep.subr.bf16.mxu0 0
        %4349 = vmatpush1.bf16.msra.mxu0 %v4332
        %4350 = vmatprep.subr.bf16.mxu0 0
        %4351 = vmatpush1.bf16.msra.mxu0 %v4333
        %4352 = vmatprep.subr.bf16.mxu0 0
        %4353 = vmatpush1.bf16.msra.mxu0 %v4334
        %4354 = vmatprep.subr.bf16.mxu0 0
        %4355 = vmatpush1.bf16.msra.mxu0 %v4335
        %4356 = vmatprep.subr.bf16.mxu0 0
        %4357 = vmatpush1.bf16.msra.mxu0 %v4336
        %4358 = vmatprep.subr.bf16.mxu0 0
        %4359 = vmatpush1.bf16.msra.mxu0 %v4337
        %4360 = vmatprep.subr.bf16.mxu0 0
        %4361 = vmatpush1.bf16.msra.mxu0 %v4338
        %4362 = vmatprep.subr.bf16.mxu0 0
        %4363 = vmatpush1.bf16.msra.mxu0 %v4339
        %4364 = vmatprep.subr.bf16.mxu0 0
        %4365 = vmatpush1.bf16.msra.mxu0 0
        %4366 = vmatprep.subr.bf16.mxu0 0
        %4367 = vmatpush1.bf16.msra.mxu0 0
        %4368 = vmatprep.subr.bf16.mxu0 0
        %4369 = vmatpush1.bf16.msra.mxu0 0
        %4370 = vmatprep.subr.bf16.mxu0 0
        %4371 = vmatpush1.bf16.msra.mxu0 0
        %4372 = vmatprep.subr.bf16.mxu0 0
        %4373 = vmatpush1.bf16.msra.mxu0 0
        %4374 = vmatprep.subr.bf16.mxu0 0
        %4375 = vmatpush1.bf16.msra.mxu0 0
        %4376 = vmatprep.subr.bf16.mxu0 0
        %4377 = vmatpush1.bf16.msra.mxu0 0
        %4378 = vmatprep.subr.bf16.mxu0 0
        %4379 = vmatpush1.bf16.msra.mxu0 0
        %4380 = vmatprep.mubr.bf16.mxu0 0
        %4381 = vmatmul.mubr.bf16.gmra.mrb[0].mxu0 %v4269
        %v4382 = vpop.f32.mrb[0].mxu0
        %v4383 = vadd.f32 %v4298, %v4382
        %v4384 = vpop.f32.mrb[0].mxu0
        %v4385 = vpop.f32.mrb[0].mxu0
        %v4386 = vadd.f32 %v4298, %v4385
        %v4387 = vpop.f32.mrb[0].mxu0
        %4388 = vmatprep.mubr.bf16.mxu0 0
        %4389 = vmatmul.mubr.bf16.gmra.mrb[0].mxu0 %v4270
        %v4390 = vpop.f32.mrb[0].mxu0
        %v4391 = vadd.f32 %v4298, %v4390
        %v4392 = vpop.f32.mrb[0].mxu0
        %v4393 = vpop.f32.mrb[0].mxu0
        %v4394 = vadd.f32 %v4298, %v4393
        %v4395 = vpop.f32.mrb[0].mxu0
        %4396 = vmatprep.mubr.bf16.mxu0 0
        %4397 = vmatmul.mubr.bf16.gmra.mrb[0].mxu0 %v4271
        %v4398 = vpop.f32.mrb[0].mxu0
        %v4399 = vadd.f32 %v4298, %v4398
        %v4400 = vpop.f32.mrb[0].mxu0
        %v4401 = vpop.f32.mrb[0].mxu0
        %v4402 = vadd.f32 %v4298, %v4401
        %v4403 = vpop.f32.mrb[0].mxu0
        %4404 = vmatprep.mubr.bf16.mxu0 0
        %4405 = vmatmul.mubr.bf16.gmra.mrb[0].mxu0 %v4272
        %v4406 = vpop.f32.mrb[0].mxu0
        %v4407 = vadd.f32 %v4298, %v4406
        %v4408 = vpop.f32.mrb[0].mxu0
        %v4409 = vpop.f32.mrb[0].mxu0
        %v4410 = vadd.f32 %v4298, %v4409
        %v4411 = vpop.f32.mrb[0].mxu0
        %4412 = vmatprep.mubr.bf16.mxu0 0
        %4413 = vmatmul.mubr.bf16.gmra.mrb[0].mxu0 %v4273
        %v4414 = vpop.f32.mrb[0].mxu0
        %v4415 = vadd.f32 %v4298, %v4414
        %v4416 = vpop.f32.mrb[0].mxu0
        %v4417 = vpop.f32.mrb[0].mxu0
        %v4418 = vadd.f32 %v4298, %v4417
        %v4419 = vpop.f32.mrb[0].mxu0
        %4420 = vmatprep.mubr.bf16.mxu0 0
        %4421 = vmatmul.mubr.bf16.gmra.mrb[0].mxu0 %v4274
        %v4422 = vpop.f32.mrb[0].mxu0
        %v4423 = vadd.f32 %v4298, %v4422
        %v4424 = vpop.f32.mrb[0].mxu0
        %v4425 = vpop.f32.mrb[0].mxu0
        %v4426 = vadd.f32 %v4298, %v4425
        %v4427 = vpop.f32.mrb[0].mxu0
        %4428 = vmatprep.mubr.bf16.mxu0 0
        %4429 = vmatmul.mubr.bf16.gmra.mrb[0].mxu0 %v4275
        %v4430 = vpop.f32.mrb[0].mxu0
        %v4431 = vadd.f32 %v4298, %v4430
        %v4432 = vpop.f32.mrb[0].mxu0
        %v4433 = vpop.f32.mrb[0].mxu0
        %v4434 = vadd.f32 %v4298, %v4433
        %v4435 = vpop.f32.mrb[0].mxu0
        %4436 = vmatprep.mubr.bf16.mxu0 0
        %4437 = vmatmul.mubr.bf16.gmra.mrb[0].mxu0 %v4276
        %v4438 = vpop.f32.mrb[0].mxu0
        %v4439 = vadd.f32 %v4298, %v4438
        %v4440 = vpop.f32.mrb[0].mxu0
        %v4441 = vpop.f32.mrb[0].mxu0
        %v4442 = vadd.f32 %v4298, %v4441
        %v4443 = vpop.f32.mrb[0].mxu0
        %4444 = vdwg.mxu0
        %s4445 = sadd.s32 %s639, 2
        %s4446 = smul.u32 %s4445, 5
        %s4447 = smul.addr %s4446, 4
        %s4448 = scalar_lea.vmem [#allocation2], %s4447
        %v4449 = vld [vmem:[%s4448 + $0x8] sm:$0xf]
        %v4450 = vld [vmem:[%s4448 + $0xc] sm:$0xf]
        %v4451 = vld [vmem:[%s4448 + $0x1c] sm:$0xf]
        %v4452 = vld [vmem:[%s4448 + $0x20] sm:$0xf]
        %v4453 = vld [vmem:[%s4448 + $0x30] sm:$0xf]
        %v4454 = vld [vmem:[%s4448 + $0x34] sm:$0xf]
        %v4455 = vld [vmem:[%s4448 + $0x44] sm:$0xf]
        %v4456 = vld [vmem:[%s4448 + $0x48] sm:$0xf]
        %v4457 = vld [vmem:[%s4448 + $0x58] sm:$0xf]
        %v4458 = vld [vmem:[%s4448 + $0x5c] sm:$0xf]
        %v4459 = vld [vmem:[%s4448 + $0x6c] sm:$0xf]
        %v4460 = vld [vmem:[%s4448 + $0x70] sm:$0xf]
        %v4461 = vld [vmem:[%s4448 + $0x80] sm:$0xf]
        %v4462 = vld [vmem:[%s4448 + $0x84] sm:$0xf]
        %v4463 = vld [vmem:[%s4448 + $0x94] sm:$0xf]
        %v4464 = vld [vmem:[%s4448 + $0x98] sm:$0xf]
        %v4465 = vunpack.c.l.bf16 %v4449
        %v4466 = vunpack.c.l.bf16 %v4450
        %v4467 = vunpack.c.l.bf16 %v4451
        %v4468 = vunpack.c.l.bf16 %v4452
        %v4469 = vunpack.c.l.bf16 %v4453
        %v4470 = vunpack.c.l.bf16 %v4454
        %v4471 = vunpack.c.l.bf16 %v4455
        %v4472 = vunpack.c.l.bf16 %v4456
        %v4473 = vunpack.c.l.bf16 %v4457
        %v4474 = vunpack.c.l.bf16 %v4458
        %v4475 = vunpack.c.l.bf16 %v4459
        %v4476 = vunpack.c.l.bf16 %v4460
        %v4477 = vunpack.c.l.bf16 %v4461
        %v4478 = vunpack.c.l.bf16 %v4462
        %v4479 = vunpack.c.l.bf16 %v4463
        %v4480 = vunpack.c.l.bf16 %v4464
        %v4481 = vadd.f32 %v4383, %v4465
        %v4482 = vadd.f32 %v4386, %v4466
        %v4483 = vadd.f32 %v4391, %v4467
        %v4484 = vadd.f32 %v4394, %v4468
        %v4485 = vadd.f32 %v4399, %v4469
        %v4486 = vadd.f32 %v4402, %v4470
        %v4487 = vadd.f32 %v4407, %v4471
        %v4488 = vadd.f32 %v4410, %v4472
        %v4489 = vadd.f32 %v4415, %v4473
        %v4490 = vadd.f32 %v4418, %v4474
        %v4491 = vadd.f32 %v4423, %v4475
        %v4492 = vadd.f32 %v4426, %v4476
        %v4493 = vadd.f32 %v4431, %v4477
        %v4494 = vadd.f32 %v4434, %v4478
        %v4495 = vadd.f32 %v4439, %v4479
        %v4496 = vadd.f32 %v4442, %v4480
        %4497 = vst [vmem:[%s354] sm:$0xff] %v4481
        %4498 = vst [vmem:[%s354 + $0x8] sm:$0xff] %v4482
        %4499 = vst [vmem:[%s354 + $0x10] sm:$0xff] %v4483
        %4500 = vst [vmem:[%s354 + $0x18] sm:$0xff] %v4484
        %4501 = vst [vmem:[%s354 + $0x20] sm:$0xff] %v4485
        %4502 = vst [vmem:[%s354 + $0x28] sm:$0xff] %v4486
        %4503 = vst [vmem:[%s354 + $0x30] sm:$0xff] %v4487
        %4504 = vst [vmem:[%s354 + $0x38] sm:$0xff] %v4488
        %4505 = vst [vmem:[%s354 + $0x40] sm:$0xff] %v4489
        %4506 = vst [vmem:[%s354 + $0x48] sm:$0xff] %v4490
        %4507 = vst [vmem:[%s354 + $0x50] sm:$0xff] %v4491
        %4508 = vst [vmem:[%s354 + $0x58] sm:$0xff] %v4492
        %4509 = vst [vmem:[%s354 + $0x60] sm:$0xff] %v4493
        %4510 = vst [vmem:[%s354 + $0x68] sm:$0xff] %v4494
        %4511 = vst [vmem:[%s354 + $0x70] sm:$0xff] %v4495
        %4512 = vst [vmem:[%s354 + $0x78] sm:$0xff] %v4496
        %s4513 = sand.u32 %s200, 1
        %s4514 = scalar_lea.sflag [#allocation6], %s4513
        %s4515 = sand.u32 %s200, 1
        %s4516 = smul.addr %s4515, 128
        %s4517 = scalar_lea.vmem [#allocation12], %s4516
        // Predicated region
        $region69: #{tpu_custom_call.1} parent=47 // pred_check
          %p4518 = pneg %p210
        $region70: #{tpu_custom_call.1} parent=47 // pred_check_branch
          %4520 = sbr.rel (%p4518) target = $region72
        $region71: #{tpu_custom_call.1} parent=47 // pred_region
          %s4521 = smul.u32 8, %s31
          %s4523 = ssub.s32 2048, 2048
          %4524 = vsyncadd %s4514, %s4523
          %s4525 = smul.addr %s4521, 2
          %s4526 = smul.addr %s30, 32
          %s4527 = sadd.s32 %s4525, %s4526
          %s4528 = smul.addr %s4527, 128
          %s4529 = scalar_lea.hbm %s7, %s4528
          %s4530 = sshll.u32 %s4517, 4
          %s4531 = int_to_ptr.vmem [resolvable:$true] %s4530
          %4536 = dma.vmem_to_hbm [thread:$0]  %s4531, 2048, %s4529, %s4514, 128, 128, 8
        $region72: #{tpu_custom_call.1} parent=47 // pred_fallthru
          _
      $region48: #{tpu_custom_call.1} parent=5 // pred_fallthru
        _
      %p4537 = scmp.le.s32.totalorder 2, %s21
      // Predicated region
      $region73: #{tpu_custom_call.1} parent=5 // pred_check
        %p4538 = pneg %p4537
      $region74: #{tpu_custom_call.1} parent=5 // pred_check_branch
        %4540 = sbr.rel (%p4538) target = $region76
      $region75: #{tpu_custom_call.1} parent=5 // pred_region
        %s4541 = ssub.s32 %s21, 2
        // Predicated region
        $region77: #{tpu_custom_call.1} parent=75 // pred_check
          %p4542 = pneg %p216
        $region78: #{tpu_custom_call.1} parent=75 // pred_check_branch
          %4544 = sbr.rel (%p4542) target = $region80
        $region79: #{tpu_custom_call.1} parent=75 // pred_region
          %s4545 = sand.u32 %s201, 1
          %s4546 = scalar_lea.sflag [#allocation6], %s4545
          %s4547 = sand.u32 %s201, 1
          %s4548 = smul.addr %s4547, 128
          %s4549 = scalar_lea.vmem [#allocation12], %s4548
          %4550 = dma.done %s4546, 2048
        $region80: #{tpu_custom_call.1} parent=75 // pred_fallthru
          _
      $region76: #{tpu_custom_call.1} parent=5 // pred_fallthru
        _
    $region6: #{tpu_custom_call.1} parent=1 // loop_footer
      %s25 = sadd.s32 1, %s21
    $region7: #{tpu_custom_call.1} parent=1 // loop_footer_branch
      %20 = sbr.rel target = $region3
    $region8: #{tpu_custom_call.1} parent=1 // loop_exit
      _
    %4551 = vsyncpa [#allocation5], 1
    %s4552 = scalar_lea.sflag [#allocation5], 1
    %4553 = vsyncpa %s4552, 1
    %4554 = vsyncpa [#allocation8], 1
    %4555 = vsyncpa [#allocation11], 1
    %4556 = vsyncpa [#allocation6], 1
    %s4557 = scalar_lea.sflag [#allocation6], 1
    %4558 = vsyncpa %s4557, 1

</llo_original>
